<compile_context>
chip_gen: v7x
topology: tpu7x:2x2x1
jax: 0.10.0
libtpu: 0.0.40
codegen_flags: <defaults>
</compile_context>

<pallas_src>
import math
import jax
import jax.numpy as jnp
from jax import lax
from jax.experimental import pallas as pl
from jax.experimental.pallas import tpu as pltpu

# ---- model dims (small, consistent with a text-encoder forward) ------------
B, S, H = 2, 8, 32          # batch, seq len, hidden
BS = B * S
NH = 4                      # attention heads
HD = H // NH                # head dim
MLP = 128                   # MLP hidden
VOCAB = 100
NLAYERS = 2
EPS = 1e-5
NEG_INF = -1e30
MM_DTYPE = jnp.bfloat16     # MXU input dtype (f32 accumulation)

# "NT" contraction: rhs stored feature-major / transposed (flash-attn pattern).
NT_DIMS = (((1,), (1,)), ((), ()))


# ---- in-kernel helpers ------------------------------------------------------
def _layernorm(x, g, b):
    mu = jnp.mean(x, axis=-1, keepdims=True)
    var = jnp.mean((x - mu) ** 2, axis=-1, keepdims=True)
    return (x - mu) * lax.rsqrt(var + EPS) * g + b


# ---- single fused kernel: embed + 2 encoder layers + final LN ---------------
def fused_text_encoder_kernel(ids_ref, bias_ref, tok_emb_ref, pos_ref,
                              ln1g_ref, ln1b_ref, wq_ref, bq_ref,
                              wkvT_ref, bkvT_ref, wo_ref, bo_ref,
                              ln2g_ref, ln2b_ref, w1_ref, b1_ref,
                              w2_ref, b2_ref, lnfg_ref, lnfb_ref,
                              out_ref):
    """Whole forward in one invocation; all operands resident in VMEM."""
    # --- fused embedding gather (exact one-hot matmul) + positional add -----
    ids = ids_ref[...]                                              # (BS,1) i32
    onehot = (ids == lax.broadcasted_iota(jnp.int32, (BS, VOCAB), 1)
              ).astype(jnp.float32)                                 # (BS,VOCAB)
    x2d = jnp.dot(onehot, tok_emb_ref[...],
                  preferred_element_type=jnp.float32)               # (BS,H) f32
    x2d = x2d + jnp.concatenate([pos_ref[...]] * B, axis=0)         # tile pos

    attn_bias = bias_ref[...]            # (BS,BS) f32, 0 / -1e30 cross-batch

    for li in range(NLAYERS):            # static unroll (2 layers)
        # --- self-attention block (pre-LN) ---
        h = _layernorm(x2d, ln1g_ref[li], ln1b_ref[li])             # f32
        h_mm = h.astype(MM_DTYPE)
        # Q token-major; softmax scale is pre-folded into wq/bq at init.
        q = jnp.dot(h_mm, wq_ref[li],
                    preferred_element_type=jnp.float32) + bq_ref[li]   # (BS,H)
        # K,V feature-major via one NT dot: per-head split is a SUBLANE slice.
        kvT = lax.dot_general(wkvT_ref[li], h_mm, NT_DIMS,
                              preferred_element_type=jnp.float32)      # (2H,BS)
        kvT = kvT + bkvT_ref[li]

        o_heads = []
        for hi in range(NH):             # static unroll (4 heads)
            q_h = q[:, hi * HD:(hi + 1) * HD].astype(MM_DTYPE)         # (BS,HD)
            kT_h = kvT[hi * HD:(hi + 1) * HD].astype(MM_DTYPE)         # (HD,BS)
            vT_h = kvT[H + hi * HD:H + (hi + 1) * HD].astype(MM_DTYPE)  # (HD,BS)
            # batch merged into rows; cross-batch entries masked additively
            s = jnp.dot(q_h, kT_h, preferred_element_type=jnp.float32)  # (BS,BS)
            s = s + attn_bias
            s = s - jnp.max(s, axis=-1, keepdims=True)
            p = jnp.exp(s)
            denom = jnp.sum(p, axis=-1, keepdims=True)
            p = p * pl.reciprocal(denom, approx=True)                   # EUP slot
            o_h = lax.dot_general(p.astype(MM_DTYPE), vT_h, NT_DIMS,
                                  preferred_element_type=jnp.float32)   # (BS,HD)
            o_heads.append(o_h)

        attn = jnp.concatenate(o_heads, axis=-1)                        # (BS,H)
        proj = jnp.dot(attn.astype(MM_DTYPE), wo_ref[li],
                       preferred_element_type=jnp.float32)
        x2d = x2d + proj + bo_ref[li]

        # --- MLP block (pre-LN) ---
        h2 = _layernorm(x2d, ln2g_ref[li], ln2b_ref[li])
        m = jnp.dot(h2.astype(MM_DTYPE), w1_ref[li],
                    preferred_element_type=jnp.float32) + b1_ref[li]
        # TODO(synk): some HF text encoders use exact (erf) GELU or quick_gelu.
        m = jax.nn.gelu(m, approximate=True)
        m = jnp.dot(m.astype(MM_DTYPE), w2_ref[li],
                    preferred_element_type=jnp.float32) + b2_ref[li]
        x2d = x2d + m

    # TODO(synk): a lane-dense (4,128) output view was skipped — the in-kernel
    # reshape would itself introduce an XLU relayout at this tiny size.
    out_ref[...] = _layernorm(x2d, lnfg_ref[...],
                              lnfb_ref[...]).astype(out_ref.dtype)


# ---- wrappers ---------------------------------------------------------------
_PARAM_ORDER = ["attn_bias", "tok_emb", "pos_emb",
                "ln1_g", "ln1_b", "wq", "bq", "wkvT", "bkvT", "wo", "bo",
                "ln2_g", "ln2_b", "w1", "b1", "w2", "b2",
                "lnf_g", "lnf_b"]


def text_encoder_apply(ids2d, params):
    """One fused, grid-less pallas_call; everything pinned in VMEM."""
    weights = [params[k] for k in _PARAM_ORDER]
    vmem = pl.BlockSpec(memory_space=pltpu.MemorySpace.VMEM)
    y2d = pl.pallas_call(
        fused_text_encoder_kernel,
        out_shape=jax.ShapeDtypeStruct((BS, H), jnp.float32),
        in_specs=[vmem] * (1 + len(weights)),
        out_specs=vmem,
    )(ids2d, *weights)
    return y2d.reshape(B, S, H)


def neuron_text_encoder_forward(token_ids, params, attention_mask=None):
    """Mirror of NeuronTextEncoder.forward: returns [last_hidden_state]."""
    # attention_mask is accepted but unused — matches the reference wrapper,
    # which calls self.neuron_text_encoder(emb) without forwarding the mask.
    ids2d = token_ids.reshape(BS, 1).astype(jnp.int32)
    last_hidden_state = text_encoder_apply(ids2d, params)
    return [last_hidden_state]


# ---- deterministic parameter init ------------------------------------------
def init_params(key):
    def normal(k, shape, scale=0.02):
        return scale * jax.random.normal(k, shape, dtype=jnp.float32)

    keys = iter(jax.random.split(key, 32))
    qk_scale = 1.0 / math.sqrt(HD)

    wq, wkvT, wo, w1, w2 = [], [], [], [], []
    for _ in range(NLAYERS):
        wq.append(normal(next(keys), (H, H)) * qk_scale)   # softmax scale folded
        wk = normal(next(keys), (H, H))
        wv = normal(next(keys), (H, H))
        wkvT.append(jnp.concatenate([wk.T, wv.T], axis=0))  # (2H,H) feature-major
        wo.append(normal(next(keys), (H, H)))
        w1.append(normal(next(keys), (H, MLP)))
        w2.append(normal(next(keys), (MLP, H)))

    # cross-batch additive attention mask (0 within a batch item, -1e30 across)
    bid = jnp.arange(BS, dtype=jnp.int32) // S
    attn_bias = jnp.where(bid[:, None] == bid[None, :], 0.0, NEG_INF
                          ).astype(jnp.float32)

    params = {
        "attn_bias": attn_bias,                                # (BS,BS) f32
        "tok_emb": normal(next(keys), (VOCAB, H)),
        "pos_emb": normal(next(keys), (S, H)),
        "ln1_g": jnp.ones((NLAYERS, 1, H), jnp.float32),
        "ln1_b": jnp.zeros((NLAYERS, 1, H), jnp.float32),
        "wq": jnp.stack(wq).astype(MM_DTYPE),
        # NOTE: a non-zero Q bias must carry the same folded 1/sqrt(HD) scale.
        "bq": jnp.zeros((NLAYERS, 1, H), jnp.float32),
        "wkvT": jnp.stack(wkvT).astype(MM_DTYPE),              # (L,2H,H)
        "bkvT": jnp.zeros((NLAYERS, 2 * H, 1), jnp.float32),   # feature-major bias
        "wo": jnp.stack(wo).astype(MM_DTYPE),
        "bo": jnp.zeros((NLAYERS, 1, H), jnp.float32),
        "ln2_g": jnp.ones((NLAYERS, 1, H), jnp.float32),
        "ln2_b": jnp.zeros((NLAYERS, 1, H), jnp.float32),
        "w1": jnp.stack(w1).astype(MM_DTYPE),
        "b1": jnp.zeros((NLAYERS, 1, MLP), jnp.float32),
        "w2": jnp.stack(w2).astype(MM_DTYPE),
        "b2": jnp.zeros((NLAYERS, 1, H), jnp.float32),
        "lnf_g": jnp.ones((1, H), jnp.float32),
        "lnf_b": jnp.zeros((1, H), jnp.float32),
    }
    return params


if __name__ == "__main__":
    key = jax.random.PRNGKey(0)
    k_ids, k_params = jax.random.split(key)
    params = init_params(k_params)
    token_ids = jax.random.randint(k_ids, (B, S), 0, VOCAB, dtype=jnp.int32)

    fwd = jax.jit(neuron_text_encoder_forward)
    outs = fwd(token_ids, params)
    last_hidden_state = jax.block_until_ready(outs[0])
    assert last_hidden_state.shape == (B, S, H)
    assert last_hidden_state.dtype == jnp.float32
    print("KERNEL_OK")
</pallas_src>

<mosaic_0001>
module attributes {stable_mosaic.version = 11 : i64} {
  func.func @fused_text_encoder_kernel(%arg0: memref<16x1xi32, #tpu.memory_space<vmem>>, %arg1: memref<16x16xf32, #tpu.memory_space<vmem>>, %arg2: memref<100x32xf32, #tpu.memory_space<vmem>>, %arg3: memref<8x32xf32, #tpu.memory_space<vmem>>, %arg4: memref<2x1x32xf32, #tpu.memory_space<vmem>>, %arg5: memref<2x1x32xf32, #tpu.memory_space<vmem>>, %arg6: memref<2x32x32xbf16, #tpu.memory_space<vmem>>, %arg7: memref<2x1x32xf32, #tpu.memory_space<vmem>>, %arg8: memref<2x64x32xbf16, #tpu.memory_space<vmem>>, %arg9: memref<2x64x1xf32, #tpu.memory_space<vmem>>, %arg10: memref<2x32x32xbf16, #tpu.memory_space<vmem>>, %arg11: memref<2x1x32xf32, #tpu.memory_space<vmem>>, %arg12: memref<2x1x32xf32, #tpu.memory_space<vmem>>, %arg13: memref<2x1x32xf32, #tpu.memory_space<vmem>>, %arg14: memref<2x32x128xbf16, #tpu.memory_space<vmem>>, %arg15: memref<2x1x128xf32, #tpu.memory_space<vmem>>, %arg16: memref<2x128x32xbf16, #tpu.memory_space<vmem>>, %arg17: memref<2x1x32xf32, #tpu.memory_space<vmem>>, %arg18: memref<1x32xf32, #tpu.memory_space<vmem>>, %arg19: memref<1x32xf32, #tpu.memory_space<vmem>>, %arg20: memref<16x32xf32, #tpu.memory_space<vmem>>) attributes {dimension_semantics = [], scalar_prefetch = 0 : i64, scratch_operands = 0 : i64, tpu.core_type = #tpu.core_type<tc>} {
    %c0 = arith.constant 0 : index
    %c0_0 = arith.constant 0 : index
    %0 = vector.load %arg0[%c0, %c0_0] : memref<16x1xi32, #tpu.memory_space<vmem>>, vector<16x1xi32>
    %1 = tpu.iota {dimensions = array<i32: 1>} : vector<16x100xi32>
    %2 = vector.broadcast %0 : vector<16x1xi32> to vector<16x100xi32>
    %3 = arith.cmpi eq, %2, %1 : vector<16x100xi32>
    %4 = arith.extui %3 : vector<16x100xi1> to vector<16x100xi32>
    %5 = arith.sitofp %4 : vector<16x100xi32> to vector<16x100xf32>
    %c0_1 = arith.constant 0 : index
    %c0_2 = arith.constant 0 : index
    %6 = vector.load %arg2[%c0_1, %c0_2] : memref<100x32xf32, #tpu.memory_space<vmem>>, vector<100x32xf32>
    %cst = arith.constant dense<0.000000e+00> : vector<16x32xf32>
    %7 = tpu.matmul %5, %6, %cst {dimension_numbers = #tpu.dot_dimension_numbers<[1], [0], [0], [1], [0, 0, 1, 1], [], []>} : vector<16x100xf32>, vector<100x32xf32>, vector<16x32xf32> -> vector<16x32xf32>
    %c0_3 = arith.constant 0 : index
    %c0_4 = arith.constant 0 : index
    %8 = vector.load %arg3[%c0_3, %c0_4] : memref<8x32xf32, #tpu.memory_space<vmem>>, vector<8x32xf32>
    %9 = tpu.concatenate %8, %8 in 0 : vector<8x32xf32>, vector<8x32xf32> -> vector<16x32xf32>
    %10 = arith.addf %7, %9 : vector<16x32xf32>
    %c0_5 = arith.constant 0 : index
    %c0_6 = arith.constant 0 : index
    %11 = vector.load %arg1[%c0_5, %c0_6] : memref<16x16xf32, #tpu.memory_space<vmem>>, vector<16x16xf32>
    %c0_7 = arith.constant 0 : index
    %c0_8 = arith.constant 0 : index
    %c0_9 = arith.constant 0 : index
    %12 = vector.load %arg4[%c0_7, %c0_8, %c0_9] : memref<2x1x32xf32, #tpu.memory_space<vmem>>, vector<1x1x32xf32>
    %13 = vector.shape_cast %12 : vector<1x1x32xf32> to vector<1x32xf32>
    %c0_10 = arith.constant 0 : index
    %c0_11 = arith.constant 0 : index
    %c0_12 = arith.constant 0 : index
    %14 = vector.load %arg5[%c0_10, %c0_11, %c0_12] : memref<2x1x32xf32, #tpu.memory_space<vmem>>, vector<1x1x32xf32>
    %15 = vector.shape_cast %14 : vector<1x1x32xf32> to vector<1x32xf32>
    %cst_13 = arith.constant dense<0.000000e+00> : vector<16xf32>
    %16 = vector.multi_reduction <add>, %10, %cst_13 [1] : vector<16x32xf32> to vector<16xf32>
    %17 = vector.shape_cast %16 : vector<16xf32> to vector<16x1xf32>
    %cst_14 = arith.constant 3.200000e+01 : f32
    %18 = vector.broadcast %cst_14 : f32 to vector<16x1xf32>
    %19 = arith.divf %17, %18 : vector<16x1xf32>
    %20 = vector.broadcast %19 : vector<16x1xf32> to vector<16x32xf32>
    %21 = arith.subf %10, %20 : vector<16x32xf32>
    %22 = arith.mulf %21, %21 : vector<16x32xf32>
    %cst_15 = arith.constant dense<0.000000e+00> : vector<16xf32>
    %23 = vector.multi_reduction <add>, %22, %cst_15 [1] : vector<16x32xf32> to vector<16xf32>
    %24 = vector.shape_cast %23 : vector<16xf32> to vector<16x1xf32>
    %cst_16 = arith.constant 3.200000e+01 : f32
    %25 = vector.broadcast %cst_16 : f32 to vector<16x1xf32>
    %26 = arith.divf %24, %25 : vector<16x1xf32>
    %27 = vector.broadcast %19 : vector<16x1xf32> to vector<16x32xf32>
    %28 = arith.subf %10, %27 : vector<16x32xf32>
    %cst_17 = arith.constant 9.99999974E-6 : f32
    %29 = vector.broadcast %cst_17 : f32 to vector<16x1xf32>
    %30 = arith.addf %26, %29 : vector<16x1xf32>
    %31 = math.rsqrt %30 : vector<16x1xf32>
    %32 = vector.broadcast %31 : vector<16x1xf32> to vector<16x32xf32>
    %33 = arith.mulf %28, %32 : vector<16x32xf32>
    %34 = vector.broadcast %13 : vector<1x32xf32> to vector<16x32xf32>
    %35 = arith.mulf %33, %34 : vector<16x32xf32>
    %36 = vector.broadcast %15 : vector<1x32xf32> to vector<16x32xf32>
    %37 = arith.addf %35, %36 : vector<16x32xf32>
    %38 = arith.truncf %37 : vector<16x32xf32> to vector<16x32xbf16>
    %c0_18 = arith.constant 0 : index
    %c0_19 = arith.constant 0 : index
    %c0_20 = arith.constant 0 : index
    %39 = vector.load %arg6[%c0_18, %c0_19, %c0_20] : memref<2x32x32xbf16, #tpu.memory_space<vmem>>, vector<1x32x32xbf16>
    %40 = vector.shape_cast %39 : vector<1x32x32xbf16> to vector<32x32xbf16>
    %cst_21 = arith.constant dense<0.000000e+00> : vector<16x32xf32>
    %41 = tpu.matmul %38, %40, %cst_21 {dimension_numbers = #tpu.dot_dimension_numbers<[1], [0], [0], [1], [0, 0, 1, 1], [], []>} : vector<16x32xbf16>, vector<32x32xbf16>, vector<16x32xf32> -> vector<16x32xf32>
    %c0_22 = arith.constant 0 : index
    %c0_23 = arith.constant 0 : index
    %c0_24 = arith.constant 0 : index
    %42 = vector.load %arg7[%c0_22, %c0_23, %c0_24] : memref<2x1x32xf32, #tpu.memory_space<vmem>>, vector<1x1x32xf32>
    %43 = vector.shape_cast %42 : vector<1x1x32xf32> to vector<1x32xf32>
    %44 = vector.broadcast %43 : vector<1x32xf32> to vector<16x32xf32>
    %45 = arith.addf %41, %44 : vector<16x32xf32>
    %c0_25 = arith.constant 0 : index
    %c0_26 = arith.constant 0 : index
    %c0_27 = arith.constant 0 : index
    %46 = vector.load %arg8[%c0_25, %c0_26, %c0_27] : memref<2x64x32xbf16, #tpu.memory_space<vmem>>, vector<1x64x32xbf16>
    %47 = vector.shape_cast %46 : vector<1x64x32xbf16> to vector<64x32xbf16>
    %cst_28 = arith.constant dense<0.000000e+00> : vector<64x16xf32>
    %48 = tpu.matmul %47, %38, %cst_28 {dimension_numbers = #tpu.dot_dimension_numbers<[1], [1], [0], [0], [0, 0, 1, 0], [], []>} : vector<64x32xbf16>, vector<16x32xbf16>, vector<64x16xf32> -> vector<64x16xf32>
    %c0_29 = arith.constant 0 : index
    %c0_30 = arith.constant 0 : index
    %c0_31 = arith.constant 0 : index
    %49 = vector.load %arg9[%c0_29, %c0_30, %c0_31] : memref<2x64x1xf32, #tpu.memory_space<vmem>>, vector<1x64x1xf32>
    %50 = vector.shape_cast %49 : vector<1x64x1xf32> to vector<64x1xf32>
    %51 = vector.broadcast %50 : vector<64x1xf32> to vector<64x16xf32>
    %52 = arith.addf %48, %51 : vector<64x16xf32>
    %53 = vector.extract_strided_slice %45 {offsets = [0, 0], sizes = [16, 8], strides = [1, 1]} : vector<16x32xf32> to vector<16x8xf32>
    %54 = arith.truncf %53 : vector<16x8xf32> to vector<16x8xbf16>
    %55 = vector.extract_strided_slice %52 {offsets = [0, 0], sizes = [8, 16], strides = [1, 1]} : vector<64x16xf32> to vector<8x16xf32>
    %56 = arith.truncf %55 : vector<8x16xf32> to vector<8x16xbf16>
    %57 = vector.extract_strided_slice %52 {offsets = [32, 0], sizes = [8, 16], strides = [1, 1]} : vector<64x16xf32> to vector<8x16xf32>
    %58 = arith.truncf %57 : vector<8x16xf32> to vector<8x16xbf16>
    %cst_32 = arith.constant dense<0.000000e+00> : vector<16x16xf32>
    %59 = tpu.matmul %54, %56, %cst_32 {dimension_numbers = #tpu.dot_dimension_numbers<[1], [0], [0], [1], [0, 0, 1, 1], [], []>} : vector<16x8xbf16>, vector<8x16xbf16>, vector<16x16xf32> -> vector<16x16xf32>
    %60 = arith.addf %59, %11 : vector<16x16xf32>
    %cst_33 = arith.constant dense<0xFF800000> : vector<16xf32>
    %61 = vector.multi_reduction <maximumf>, %60, %cst_33 [1] : vector<16x16xf32> to vector<16xf32>
    %62 = vector.shape_cast %61 : vector<16xf32> to vector<16x1xf32>
    %63 = vector.broadcast %62 : vector<16x1xf32> to vector<16x16xf32>
    %64 = arith.subf %60, %63 : vector<16x16xf32>
    %65 = math.exp %64 : vector<16x16xf32>
    %cst_34 = arith.constant dense<0.000000e+00> : vector<16xf32>
    %66 = vector.multi_reduction <add>, %65, %cst_34 [1] : vector<16x16xf32> to vector<16xf32>
    %67 = vector.shape_cast %66 : vector<16xf32> to vector<16x1xf32>
    %68 = tpu.reciprocal %67 {approx = true} : vector<16x1xf32> -> vector<16x1xf32>
    %69 = vector.broadcast %68 : vector<16x1xf32> to vector<16x16xf32>
    %70 = arith.mulf %65, %69 : vector<16x16xf32>
    %71 = arith.truncf %70 : vector<16x16xf32> to vector<16x16xbf16>
    %cst_35 = arith.constant dense<0.000000e+00> : vector<16x8xf32>
    %72 = tpu.matmul %71, %58, %cst_35 {dimension_numbers = #tpu.dot_dimension_numbers<[1], [1], [0], [0], [0, 0, 1, 0], [], []>} : vector<16x16xbf16>, vector<8x16xbf16>, vector<16x8xf32> -> vector<16x8xf32>
    %73 = vector.extract_strided_slice %45 {offsets = [0, 8], sizes = [16, 8], strides = [1, 1]} : vector<16x32xf32> to vector<16x8xf32>
    %74 = arith.truncf %73 : vector<16x8xf32> to vector<16x8xbf16>
    %75 = vector.extract_strided_slice %52 {offsets = [8, 0], sizes = [8, 16], strides = [1, 1]} : vector<64x16xf32> to vector<8x16xf32>
    %76 = arith.truncf %75 : vector<8x16xf32> to vector<8x16xbf16>
    %77 = vector.extract_strided_slice %52 {offsets = [40, 0], sizes = [8, 16], strides = [1, 1]} : vector<64x16xf32> to vector<8x16xf32>
    %78 = arith.truncf %77 : vector<8x16xf32> to vector<8x16xbf16>
    %cst_36 = arith.constant dense<0.000000e+00> : vector<16x16xf32>
    %79 = tpu.matmul %74, %76, %cst_36 {dimension_numbers = #tpu.dot_dimension_numbers<[1], [0], [0], [1], [0, 0, 1, 1], [], []>} : vector<16x8xbf16>, vector<8x16xbf16>, vector<16x16xf32> -> vector<16x16xf32>
    %80 = arith.addf %79, %11 : vector<16x16xf32>
    %cst_37 = arith.constant dense<0xFF800000> : vector<16xf32>
    %81 = vector.multi_reduction <maximumf>, %80, %cst_37 [1] : vector<16x16xf32> to vector<16xf32>
    %82 = vector.shape_cast %81 : vector<16xf32> to vector<16x1xf32>
    %83 = vector.broadcast %82 : vector<16x1xf32> to vector<16x16xf32>
    %84 = arith.subf %80, %83 : vector<16x16xf32>
    %85 = math.exp %84 : vector<16x16xf32>
    %cst_38 = arith.constant dense<0.000000e+00> : vector<16xf32>
    %86 = vector.multi_reduction <add>, %85, %cst_38 [1] : vector<16x16xf32> to vector<16xf32>
    %87 = vector.shape_cast %86 : vector<16xf32> to vector<16x1xf32>
    %88 = tpu.reciprocal %87 {approx = true} : vector<16x1xf32> -> vector<16x1xf32>
    %89 = vector.broadcast %88 : vector<16x1xf32> to vector<16x16xf32>
    %90 = arith.mulf %85, %89 : vector<16x16xf32>
    %91 = arith.truncf %90 : vector<16x16xf32> to vector<16x16xbf16>
    %cst_39 = arith.constant dense<0.000000e+00> : vector<16x8xf32>
    %92 = tpu.matmul %91, %78, %cst_39 {dimension_numbers = #tpu.dot_dimension_numbers<[1], [1], [0], [0], [0, 0, 1, 0], [], []>} : vector<16x16xbf16>, vector<8x16xbf16>, vector<16x8xf32> -> vector<16x8xf32>
    %93 = vector.extract_strided_slice %45 {offsets = [0, 16], sizes = [16, 8], strides = [1, 1]} : vector<16x32xf32> to vector<16x8xf32>
    %94 = arith.truncf %93 : vector<16x8xf32> to vector<16x8xbf16>
    %95 = vector.extract_strided_slice %52 {offsets = [16, 0], sizes = [8, 16], strides = [1, 1]} : vector<64x16xf32> to vector<8x16xf32>
    %96 = arith.truncf %95 : vector<8x16xf32> to vector<8x16xbf16>
    %97 = vector.extract_strided_slice %52 {offsets = [48, 0], sizes = [8, 16], strides = [1, 1]} : vector<64x16xf32> to vector<8x16xf32>
    %98 = arith.truncf %97 : vector<8x16xf32> to vector<8x16xbf16>
    %cst_40 = arith.constant dense<0.000000e+00> : vector<16x16xf32>
    %99 = tpu.matmul %94, %96, %cst_40 {dimension_numbers = #tpu.dot_dimension_numbers<[1], [0], [0], [1], [0, 0, 1, 1], [], []>} : vector<16x8xbf16>, vector<8x16xbf16>, vector<16x16xf32> -> vector<16x16xf32>
    %100 = arith.addf %99, %11 : vector<16x16xf32>
    %cst_41 = arith.constant dense<0xFF800000> : vector<16xf32>
    %101 = vector.multi_reduction <maximumf>, %100, %cst_41 [1] : vector<16x16xf32> to vector<16xf32>
    %102 = vector.shape_cast %101 : vector<16xf32> to vector<16x1xf32>
    %103 = vector.broadcast %102 : vector<16x1xf32> to vector<16x16xf32>
    %104 = arith.subf %100, %103 : vector<16x16xf32>
    %105 = math.exp %104 : vector<16x16xf32>
    %cst_42 = arith.constant dense<0.000000e+00> : vector<16xf32>
    %106 = vector.multi_reduction <add>, %105, %cst_42 [1] : vector<16x16xf32> to vector<16xf32>
    %107 = vector.shape_cast %106 : vector<16xf32> to vector<16x1xf32>
    %108 = tpu.reciprocal %107 {approx = true} : vector<16x1xf32> -> vector<16x1xf32>
    %109 = vector.broadcast %108 : vector<16x1xf32> to vector<16x16xf32>
    %110 = arith.mulf %105, %109 : vector<16x16xf32>
    %111 = arith.truncf %110 : vector<16x16xf32> to vector<16x16xbf16>
    %cst_43 = arith.constant dense<0.000000e+00> : vector<16x8xf32>
    %112 = tpu.matmul %111, %98, %cst_43 {dimension_numbers = #tpu.dot_dimension_numbers<[1], [1], [0], [0], [0, 0, 1, 0], [], []>} : vector<16x16xbf16>, vector<8x16xbf16>, vector<16x8xf32> -> vector<16x8xf32>
    %113 = vector.extract_strided_slice %45 {offsets = [0, 24], sizes = [16, 8], strides = [1, 1]} : vector<16x32xf32> to vector<16x8xf32>
    %114 = arith.truncf %113 : vector<16x8xf32> to vector<16x8xbf16>
    %115 = vector.extract_strided_slice %52 {offsets = [24, 0], sizes = [8, 16], strides = [1, 1]} : vector<64x16xf32> to vector<8x16xf32>
    %116 = arith.truncf %115 : vector<8x16xf32> to vector<8x16xbf16>
    %117 = vector.extract_strided_slice %52 {offsets = [56, 0], sizes = [8, 16], strides = [1, 1]} : vector<64x16xf32> to vector<8x16xf32>
    %118 = arith.truncf %117 : vector<8x16xf32> to vector<8x16xbf16>
    %cst_44 = arith.constant dense<0.000000e+00> : vector<16x16xf32>
    %119 = tpu.matmul %114, %116, %cst_44 {dimension_numbers = #tpu.dot_dimension_numbers<[1], [0], [0], [1], [0, 0, 1, 1], [], []>} : vector<16x8xbf16>, vector<8x16xbf16>, vector<16x16xf32> -> vector<16x16xf32>
    %120 = arith.addf %119, %11 : vector<16x16xf32>
    %cst_45 = arith.constant dense<0xFF800000> : vector<16xf32>
    %121 = vector.multi_reduction <maximumf>, %120, %cst_45 [1] : vector<16x16xf32> to vector<16xf32>
    %122 = vector.shape_cast %121 : vector<16xf32> to vector<16x1xf32>
    %123 = vector.broadcast %122 : vector<16x1xf32> to vector<16x16xf32>
    %124 = arith.subf %120, %123 : vector<16x16xf32>
    %125 = math.exp %124 : vector<16x16xf32>
    %cst_46 = arith.constant dense<0.000000e+00> : vector<16xf32>
    %126 = vector.multi_reduction <add>, %125, %cst_46 [1] : vector<16x16xf32> to vector<16xf32>
    %127 = vector.shape_cast %126 : vector<16xf32> to vector<16x1xf32>
    %128 = tpu.reciprocal %127 {approx = true} : vector<16x1xf32> -> vector<16x1xf32>
    %129 = vector.broadcast %128 : vector<16x1xf32> to vector<16x16xf32>
    %130 = arith.mulf %125, %129 : vector<16x16xf32>
    %131 = arith.truncf %130 : vector<16x16xf32> to vector<16x16xbf16>
    %cst_47 = arith.constant dense<0.000000e+00> : vector<16x8xf32>
    %132 = tpu.matmul %131, %118, %cst_47 {dimension_numbers = #tpu.dot_dimension_numbers<[1], [1], [0], [0], [0, 0, 1, 0], [], []>} : vector<16x16xbf16>, vector<8x16xbf16>, vector<16x8xf32> -> vector<16x8xf32>
    %133 = tpu.concatenate %72, %92, %112, %132 in 1 : vector<16x8xf32>, vector<16x8xf32>, vector<16x8xf32>, vector<16x8xf32> -> vector<16x32xf32>
    %134 = arith.truncf %133 : vector<16x32xf32> to vector<16x32xbf16>
    %c0_48 = arith.constant 0 : index
    %c0_49 = arith.constant 0 : index
    %c0_50 = arith.constant 0 : index
    %135 = vector.load %arg10[%c0_48, %c0_49, %c0_50] : memref<2x32x32xbf16, #tpu.memory_space<vmem>>, vector<1x32x32xbf16>
    %136 = vector.shape_cast %135 : vector<1x32x32xbf16> to vector<32x32xbf16>
    %cst_51 = arith.constant dense<0.000000e+00> : vector<16x32xf32>
    %137 = tpu.matmul %134, %136, %cst_51 {dimension_numbers = #tpu.dot_dimension_numbers<[1], [0], [0], [1], [0, 0, 1, 1], [], []>} : vector<16x32xbf16>, vector<32x32xbf16>, vector<16x32xf32> -> vector<16x32xf32>
    %138 = arith.addf %10, %137 : vector<16x32xf32>
    %c0_52 = arith.constant 0 : index
    %c0_53 = arith.constant 0 : index
    %c0_54 = arith.constant 0 : index
    %139 = vector.load %arg11[%c0_52, %c0_53, %c0_54] : memref<2x1x32xf32, #tpu.memory_space<vmem>>, vector<1x1x32xf32>
    %140 = vector.shape_cast %139 : vector<1x1x32xf32> to vector<1x32xf32>
    %141 = vector.broadcast %140 : vector<1x32xf32> to vector<16x32xf32>
    %142 = arith.addf %138, %141 : vector<16x32xf32>
    %c0_55 = arith.constant 0 : index
    %c0_56 = arith.constant 0 : index
    %c0_57 = arith.constant 0 : index
    %143 = vector.load %arg12[%c0_55, %c0_56, %c0_57] : memref<2x1x32xf32, #tpu.memory_space<vmem>>, vector<1x1x32xf32>
    %144 = vector.shape_cast %143 : vector<1x1x32xf32> to vector<1x32xf32>
    %c0_58 = arith.constant 0 : index
    %c0_59 = arith.constant 0 : index
    %c0_60 = arith.constant 0 : index
    %145 = vector.load %arg13[%c0_58, %c0_59, %c0_60] : memref<2x1x32xf32, #tpu.memory_space<vmem>>, vector<1x1x32xf32>
    %146 = vector.shape_cast %145 : vector<1x1x32xf32> to vector<1x32xf32>
    %cst_61 = arith.constant dense<0.000000e+00> : vector<16xf32>
    %147 = vector.multi_reduction <add>, %142, %cst_61 [1] : vector<16x32xf32> to vector<16xf32>
    %148 = vector.shape_cast %147 : vector<16xf32> to vector<16x1xf32>
    %cst_62 = arith.constant 3.200000e+01 : f32
    %149 = vector.broadcast %cst_62 : f32 to vector<16x1xf32>
    %150 = arith.divf %148, %149 : vector<16x1xf32>
    %151 = vector.broadcast %150 : vector<16x1xf32> to vector<16x32xf32>
    %152 = arith.subf %142, %151 : vector<16x32xf32>
    %153 = arith.mulf %152, %152 : vector<16x32xf32>
    %cst_63 = arith.constant dense<0.000000e+00> : vector<16xf32>
    %154 = vector.multi_reduction <add>, %153, %cst_63 [1] : vector<16x32xf32> to vector<16xf32>
    %155 = vector.shape_cast %154 : vector<16xf32> to vector<16x1xf32>
    %cst_64 = arith.constant 3.200000e+01 : f32
    %156 = vector.broadcast %cst_64 : f32 to vector<16x1xf32>
    %157 = arith.divf %155, %156 : vector<16x1xf32>
    %158 = vector.broadcast %150 : vector<16x1xf32> to vector<16x32xf32>
    %159 = arith.subf %142, %158 : vector<16x32xf32>
    %cst_65 = arith.constant 9.99999974E-6 : f32
    %160 = vector.broadcast %cst_65 : f32 to vector<16x1xf32>
    %161 = arith.addf %157, %160 : vector<16x1xf32>
    %162 = math.rsqrt %161 : vector<16x1xf32>
    %163 = vector.broadcast %162 : vector<16x1xf32> to vector<16x32xf32>
    %164 = arith.mulf %159, %163 : vector<16x32xf32>
    %165 = vector.broadcast %144 : vector<1x32xf32> to vector<16x32xf32>
    %166 = arith.mulf %164, %165 : vector<16x32xf32>
    %167 = vector.broadcast %146 : vector<1x32xf32> to vector<16x32xf32>
    %168 = arith.addf %166, %167 : vector<16x32xf32>
    %169 = arith.truncf %168 : vector<16x32xf32> to vector<16x32xbf16>
    %c0_66 = arith.constant 0 : index
    %c0_67 = arith.constant 0 : index
    %c0_68 = arith.constant 0 : index
    %170 = vector.load %arg14[%c0_66, %c0_67, %c0_68] : memref<2x32x128xbf16, #tpu.memory_space<vmem>>, vector<1x32x128xbf16>
    %171 = vector.shape_cast %170 : vector<1x32x128xbf16> to vector<32x128xbf16>
    %cst_69 = arith.constant dense<0.000000e+00> : vector<16x128xf32>
    %172 = tpu.matmul %169, %171, %cst_69 {dimension_numbers = #tpu.dot_dimension_numbers<[1], [0], [0], [1], [0, 0, 1, 1], [], []>} : vector<16x32xbf16>, vector<32x128xbf16>, vector<16x128xf32> -> vector<16x128xf32>
    %c0_70 = arith.constant 0 : index
    %c0_71 = arith.constant 0 : index
    %c0_72 = arith.constant 0 : index
    %173 = vector.load %arg15[%c0_70, %c0_71, %c0_72] : memref<2x1x128xf32, #tpu.memory_space<vmem>>, vector<1x1x128xf32>
    %174 = vector.shape_cast %173 : vector<1x1x128xf32> to vector<1x128xf32>
    %175 = vector.broadcast %174 : vector<1x128xf32> to vector<16x128xf32>
    %176 = arith.addf %172, %175 : vector<16x128xf32>
    %177 = arith.mulf %176, %176 : vector<16x128xf32>
    %178 = arith.mulf %176, %177 : vector<16x128xf32>
    %cst_73 = arith.constant 4.471500e-02 : f32
    %179 = vector.broadcast %cst_73 : f32 to vector<16x128xf32>
    %180 = arith.mulf %179, %178 : vector<16x128xf32>
    %181 = arith.addf %176, %180 : vector<16x128xf32>
    %cst_74 = arith.constant 0.797884583 : f32
    %182 = vector.broadcast %cst_74 : f32 to vector<16x128xf32>
    %183 = arith.mulf %182, %181 : vector<16x128xf32>
    %184 = math.tanh %183 : vector<16x128xf32>
    %cst_75 = arith.constant 1.000000e+00 : f32
    %185 = vector.broadcast %cst_75 : f32 to vector<16x128xf32>
    %186 = arith.addf %185, %184 : vector<16x128xf32>
    %cst_76 = arith.constant 5.000000e-01 : f32
    %187 = vector.broadcast %cst_76 : f32 to vector<16x128xf32>
    %188 = arith.mulf %187, %186 : vector<16x128xf32>
    %189 = arith.mulf %176, %188 : vector<16x128xf32>
    %190 = arith.truncf %189 : vector<16x128xf32> to vector<16x128xbf16>
    %c0_77 = arith.constant 0 : index
    %c0_78 = arith.constant 0 : index
    %c0_79 = arith.constant 0 : index
    %191 = vector.load %arg16[%c0_77, %c0_78, %c0_79] : memref<2x128x32xbf16, #tpu.memory_space<vmem>>, vector<1x128x32xbf16>
    %192 = vector.shape_cast %191 : vector<1x128x32xbf16> to vector<128x32xbf16>
    %cst_80 = arith.constant dense<0.000000e+00> : vector<16x32xf32>
    %193 = tpu.matmul %190, %192, %cst_80 {dimension_numbers = #tpu.dot_dimension_numbers<[1], [0], [0], [1], [0, 0, 1, 1], [], []>} : vector<16x128xbf16>, vector<128x32xbf16>, vector<16x32xf32> -> vector<16x32xf32>
    %c0_81 = arith.constant 0 : index
    %c0_82 = arith.constant 0 : index
    %c0_83 = arith.constant 0 : index
    %194 = vector.load %arg17[%c0_81, %c0_82, %c0_83] : memref<2x1x32xf32, #tpu.memory_space<vmem>>, vector<1x1x32xf32>
    %195 = vector.shape_cast %194 : vector<1x1x32xf32> to vector<1x32xf32>
    %196 = vector.broadcast %195 : vector<1x32xf32> to vector<16x32xf32>
    %197 = arith.addf %193, %196 : vector<16x32xf32>
    %198 = arith.addf %142, %197 : vector<16x32xf32>
    %c1 = arith.constant 1 : index
    %c0_84 = arith.constant 0 : index
    %c0_85 = arith.constant 0 : index
    %199 = vector.load %arg4[%c1, %c0_84, %c0_85] : memref<2x1x32xf32, #tpu.memory_space<vmem>>, vector<1x1x32xf32>
    %200 = vector.shape_cast %199 : vector<1x1x32xf32> to vector<1x32xf32>
    %c1_86 = arith.constant 1 : index
    %c0_87 = arith.constant 0 : index
    %c0_88 = arith.constant 0 : index
    %201 = vector.load %arg5[%c1_86, %c0_87, %c0_88] : memref<2x1x32xf32, #tpu.memory_space<vmem>>, vector<1x1x32xf32>
    %202 = vector.shape_cast %201 : vector<1x1x32xf32> to vector<1x32xf32>
    %cst_89 = arith.constant dense<0.000000e+00> : vector<16xf32>
    %203 = vector.multi_reduction <add>, %198, %cst_89 [1] : vector<16x32xf32> to vector<16xf32>
    %204 = vector.shape_cast %203 : vector<16xf32> to vector<16x1xf32>
    %cst_90 = arith.constant 3.200000e+01 : f32
    %205 = vector.broadcast %cst_90 : f32 to vector<16x1xf32>
    %206 = arith.divf %204, %205 : vector<16x1xf32>
    %207 = vector.broadcast %206 : vector<16x1xf32> to vector<16x32xf32>
    %208 = arith.subf %198, %207 : vector<16x32xf32>
    %209 = arith.mulf %208, %208 : vector<16x32xf32>
    %cst_91 = arith.constant dense<0.000000e+00> : vector<16xf32>
    %210 = vector.multi_reduction <add>, %209, %cst_91 [1] : vector<16x32xf32> to vector<16xf32>
    %211 = vector.shape_cast %210 : vector<16xf32> to vector<16x1xf32>
    %cst_92 = arith.constant 3.200000e+01 : f32
    %212 = vector.broadcast %cst_92 : f32 to vector<16x1xf32>
    %213 = arith.divf %211, %212 : vector<16x1xf32>
    %214 = vector.broadcast %206 : vector<16x1xf32> to vector<16x32xf32>
    %215 = arith.subf %198, %214 : vector<16x32xf32>
    %cst_93 = arith.constant 9.99999974E-6 : f32
    %216 = vector.broadcast %cst_93 : f32 to vector<16x1xf32>
    %217 = arith.addf %213, %216 : vector<16x1xf32>
    %218 = math.rsqrt %217 : vector<16x1xf32>
    %219 = vector.broadcast %218 : vector<16x1xf32> to vector<16x32xf32>
    %220 = arith.mulf %215, %219 : vector<16x32xf32>
    %221 = vector.broadcast %200 : vector<1x32xf32> to vector<16x32xf32>
    %222 = arith.mulf %220, %221 : vector<16x32xf32>
    %223 = vector.broadcast %202 : vector<1x32xf32> to vector<16x32xf32>
    %224 = arith.addf %222, %223 : vector<16x32xf32>
    %225 = arith.truncf %224 : vector<16x32xf32> to vector<16x32xbf16>
    %c1_94 = arith.constant 1 : index
    %c0_95 = arith.constant 0 : index
    %c0_96 = arith.constant 0 : index
    %226 = vector.load %arg6[%c1_94, %c0_95, %c0_96] : memref<2x32x32xbf16, #tpu.memory_space<vmem>>, vector<1x32x32xbf16>
    %227 = vector.shape_cast %226 : vector<1x32x32xbf16> to vector<32x32xbf16>
    %cst_97 = arith.constant dense<0.000000e+00> : vector<16x32xf32>
    %228 = tpu.matmul %225, %227, %cst_97 {dimension_numbers = #tpu.dot_dimension_numbers<[1], [0], [0], [1], [0, 0, 1, 1], [], []>} : vector<16x32xbf16>, vector<32x32xbf16>, vector<16x32xf32> -> vector<16x32xf32>
    %c1_98 = arith.constant 1 : index
    %c0_99 = arith.constant 0 : index
    %c0_100 = arith.constant 0 : index
    %229 = vector.load %arg7[%c1_98, %c0_99, %c0_100] : memref<2x1x32xf32, #tpu.memory_space<vmem>>, vector<1x1x32xf32>
    %230 = vector.shape_cast %229 : vector<1x1x32xf32> to vector<1x32xf32>
    %231 = vector.broadcast %230 : vector<1x32xf32> to vector<16x32xf32>
    %232 = arith.addf %228, %231 : vector<16x32xf32>
    %c1_101 = arith.constant 1 : index
    %c0_102 = arith.constant 0 : index
    %c0_103 = arith.constant 0 : index
    %233 = vector.load %arg8[%c1_101, %c0_102, %c0_103] : memref<2x64x32xbf16, #tpu.memory_space<vmem>>, vector<1x64x32xbf16>
    %234 = vector.shape_cast %233 : vector<1x64x32xbf16> to vector<64x32xbf16>
    %cst_104 = arith.constant dense<0.000000e+00> : vector<64x16xf32>
    %235 = tpu.matmul %234, %225, %cst_104 {dimension_numbers = #tpu.dot_dimension_numbers<[1], [1], [0], [0], [0, 0, 1, 0], [], []>} : vector<64x32xbf16>, vector<16x32xbf16>, vector<64x16xf32> -> vector<64x16xf32>
    %c1_105 = arith.constant 1 : index
    %c0_106 = arith.constant 0 : index
    %c0_107 = arith.constant 0 : index
    %236 = vector.load %arg9[%c1_105, %c0_106, %c0_107] : memref<2x64x1xf32, #tpu.memory_space<vmem>>, vector<1x64x1xf32>
    %237 = vector.shape_cast %236 : vector<1x64x1xf32> to vector<64x1xf32>
    %238 = vector.broadcast %237 : vector<64x1xf32> to vector<64x16xf32>
    %239 = arith.addf %235, %238 : vector<64x16xf32>
    %240 = vector.extract_strided_slice %232 {offsets = [0, 0], sizes = [16, 8], strides = [1, 1]} : vector<16x32xf32> to vector<16x8xf32>
    %241 = arith.truncf %240 : vector<16x8xf32> to vector<16x8xbf16>
    %242 = vector.extract_strided_slice %239 {offsets = [0, 0], sizes = [8, 16], strides = [1, 1]} : vector<64x16xf32> to vector<8x16xf32>
    %243 = arith.truncf %242 : vector<8x16xf32> to vector<8x16xbf16>
    %244 = vector.extract_strided_slice %239 {offsets = [32, 0], sizes = [8, 16], strides = [1, 1]} : vector<64x16xf32> to vector<8x16xf32>
    %245 = arith.truncf %244 : vector<8x16xf32> to vector<8x16xbf16>
    %cst_108 = arith.constant dense<0.000000e+00> : vector<16x16xf32>
    %246 = tpu.matmul %241, %243, %cst_108 {dimension_numbers = #tpu.dot_dimension_numbers<[1], [0], [0], [1], [0, 0, 1, 1], [], []>} : vector<16x8xbf16>, vector<8x16xbf16>, vector<16x16xf32> -> vector<16x16xf32>
    %247 = arith.addf %246, %11 : vector<16x16xf32>
    %cst_109 = arith.constant dense<0xFF800000> : vector<16xf32>
    %248 = vector.multi_reduction <maximumf>, %247, %cst_109 [1] : vector<16x16xf32> to vector<16xf32>
    %249 = vector.shape_cast %248 : vector<16xf32> to vector<16x1xf32>
    %250 = vector.broadcast %249 : vector<16x1xf32> to vector<16x16xf32>
    %251 = arith.subf %247, %250 : vector<16x16xf32>
    %252 = math.exp %251 : vector<16x16xf32>
    %cst_110 = arith.constant dense<0.000000e+00> : vector<16xf32>
    %253 = vector.multi_reduction <add>, %252, %cst_110 [1] : vector<16x16xf32> to vector<16xf32>
    %254 = vector.shape_cast %253 : vector<16xf32> to vector<16x1xf32>
    %255 = tpu.reciprocal %254 {approx = true} : vector<16x1xf32> -> vector<16x1xf32>
    %256 = vector.broadcast %255 : vector<16x1xf32> to vector<16x16xf32>
    %257 = arith.mulf %252, %256 : vector<16x16xf32>
    %258 = arith.truncf %257 : vector<16x16xf32> to vector<16x16xbf16>
    %cst_111 = arith.constant dense<0.000000e+00> : vector<16x8xf32>
    %259 = tpu.matmul %258, %245, %cst_111 {dimension_numbers = #tpu.dot_dimension_numbers<[1], [1], [0], [0], [0, 0, 1, 0], [], []>} : vector<16x16xbf16>, vector<8x16xbf16>, vector<16x8xf32> -> vector<16x8xf32>
    %260 = vector.extract_strided_slice %232 {offsets = [0, 8], sizes = [16, 8], strides = [1, 1]} : vector<16x32xf32> to vector<16x8xf32>
    %261 = arith.truncf %260 : vector<16x8xf32> to vector<16x8xbf16>
    %262 = vector.extract_strided_slice %239 {offsets = [8, 0], sizes = [8, 16], strides = [1, 1]} : vector<64x16xf32> to vector<8x16xf32>
    %263 = arith.truncf %262 : vector<8x16xf32> to vector<8x16xbf16>
    %264 = vector.extract_strided_slice %239 {offsets = [40, 0], sizes = [8, 16], strides = [1, 1]} : vector<64x16xf32> to vector<8x16xf32>
    %265 = arith.truncf %264 : vector<8x16xf32> to vector<8x16xbf16>
    %cst_112 = arith.constant dense<0.000000e+00> : vector<16x16xf32>
    %266 = tpu.matmul %261, %263, %cst_112 {dimension_numbers = #tpu.dot_dimension_numbers<[1], [0], [0], [1], [0, 0, 1, 1], [], []>} : vector<16x8xbf16>, vector<8x16xbf16>, vector<16x16xf32> -> vector<16x16xf32>
    %267 = arith.addf %266, %11 : vector<16x16xf32>
    %cst_113 = arith.constant dense<0xFF800000> : vector<16xf32>
    %268 = vector.multi_reduction <maximumf>, %267, %cst_113 [1] : vector<16x16xf32> to vector<16xf32>
    %269 = vector.shape_cast %268 : vector<16xf32> to vector<16x1xf32>
    %270 = vector.broadcast %269 : vector<16x1xf32> to vector<16x16xf32>
    %271 = arith.subf %267, %270 : vector<16x16xf32>
    %272 = math.exp %271 : vector<16x16xf32>
    %cst_114 = arith.constant dense<0.000000e+00> : vector<16xf32>
    %273 = vector.multi_reduction <add>, %272, %cst_114 [1] : vector<16x16xf32> to vector<16xf32>
    %274 = vector.shape_cast %273 : vector<16xf32> to vector<16x1xf32>
    %275 = tpu.reciprocal %274 {approx = true} : vector<16x1xf32> -> vector<16x1xf32>
    %276 = vector.broadcast %275 : vector<16x1xf32> to vector<16x16xf32>
    %277 = arith.mulf %272, %276 : vector<16x16xf32>
    %278 = arith.truncf %277 : vector<16x16xf32> to vector<16x16xbf16>
    %cst_115 = arith.constant dense<0.000000e+00> : vector<16x8xf32>
    %279 = tpu.matmul %278, %265, %cst_115 {dimension_numbers = #tpu.dot_dimension_numbers<[1], [1], [0], [0], [0, 0, 1, 0], [], []>} : vector<16x16xbf16>, vector<8x16xbf16>, vector<16x8xf32> -> vector<16x8xf32>
    %280 = vector.extract_strided_slice %232 {offsets = [0, 16], sizes = [16, 8], strides = [1, 1]} : vector<16x32xf32> to vector<16x8xf32>
    %281 = arith.truncf %280 : vector<16x8xf32> to vector<16x8xbf16>
    %282 = vector.extract_strided_slice %239 {offsets = [16, 0], sizes = [8, 16], strides = [1, 1]} : vector<64x16xf32> to vector<8x16xf32>
    %283 = arith.truncf %282 : vector<8x16xf32> to vector<8x16xbf16>
    %284 = vector.extract_strided_slice %239 {offsets = [48, 0], sizes = [8, 16], strides = [1, 1]} : vector<64x16xf32> to vector<8x16xf32>
    %285 = arith.truncf %284 : vector<8x16xf32> to vector<8x16xbf16>
    %cst_116 = arith.constant dense<0.000000e+00> : vector<16x16xf32>
    %286 = tpu.matmul %281, %283, %cst_116 {dimension_numbers = #tpu.dot_dimension_numbers<[1], [0], [0], [1], [0, 0, 1, 1], [], []>} : vector<16x8xbf16>, vector<8x16xbf16>, vector<16x16xf32> -> vector<16x16xf32>
    %287 = arith.addf %286, %11 : vector<16x16xf32>
    %cst_117 = arith.constant dense<0xFF800000> : vector<16xf32>
    %288 = vector.multi_reduction <maximumf>, %287, %cst_117 [1] : vector<16x16xf32> to vector<16xf32>
    %289 = vector.shape_cast %288 : vector<16xf32> to vector<16x1xf32>
    %290 = vector.broadcast %289 : vector<16x1xf32> to vector<16x16xf32>
    %291 = arith.subf %287, %290 : vector<16x16xf32>
    %292 = math.exp %291 : vector<16x16xf32>
    %cst_118 = arith.constant dense<0.000000e+00> : vector<16xf32>
    %293 = vector.multi_reduction <add>, %292, %cst_118 [1] : vector<16x16xf32> to vector<16xf32>
    %294 = vector.shape_cast %293 : vector<16xf32> to vector<16x1xf32>
    %295 = tpu.reciprocal %294 {approx = true} : vector<16x1xf32> -> vector<16x1xf32>
    %296 = vector.broadcast %295 : vector<16x1xf32> to vector<16x16xf32>
    %297 = arith.mulf %292, %296 : vector<16x16xf32>
    %298 = arith.truncf %297 : vector<16x16xf32> to vector<16x16xbf16>
    %cst_119 = arith.constant dense<0.000000e+00> : vector<16x8xf32>
    %299 = tpu.matmul %298, %285, %cst_119 {dimension_numbers = #tpu.dot_dimension_numbers<[1], [1], [0], [0], [0, 0, 1, 0], [], []>} : vector<16x16xbf16>, vector<8x16xbf16>, vector<16x8xf32> -> vector<16x8xf32>
    %300 = vector.extract_strided_slice %232 {offsets = [0, 24], sizes = [16, 8], strides = [1, 1]} : vector<16x32xf32> to vector<16x8xf32>
    %301 = arith.truncf %300 : vector<16x8xf32> to vector<16x8xbf16>
    %302 = vector.extract_strided_slice %239 {offsets = [24, 0], sizes = [8, 16], strides = [1, 1]} : vector<64x16xf32> to vector<8x16xf32>
    %303 = arith.truncf %302 : vector<8x16xf32> to vector<8x16xbf16>
    %304 = vector.extract_strided_slice %239 {offsets = [56, 0], sizes = [8, 16], strides = [1, 1]} : vector<64x16xf32> to vector<8x16xf32>
    %305 = arith.truncf %304 : vector<8x16xf32> to vector<8x16xbf16>
    %cst_120 = arith.constant dense<0.000000e+00> : vector<16x16xf32>
    %306 = tpu.matmul %301, %303, %cst_120 {dimension_numbers = #tpu.dot_dimension_numbers<[1], [0], [0], [1], [0, 0, 1, 1], [], []>} : vector<16x8xbf16>, vector<8x16xbf16>, vector<16x16xf32> -> vector<16x16xf32>
    %307 = arith.addf %306, %11 : vector<16x16xf32>
    %cst_121 = arith.constant dense<0xFF800000> : vector<16xf32>
    %308 = vector.multi_reduction <maximumf>, %307, %cst_121 [1] : vector<16x16xf32> to vector<16xf32>
    %309 = vector.shape_cast %308 : vector<16xf32> to vector<16x1xf32>
    %310 = vector.broadcast %309 : vector<16x1xf32> to vector<16x16xf32>
    %311 = arith.subf %307, %310 : vector<16x16xf32>
    %312 = math.exp %311 : vector<16x16xf32>
    %cst_122 = arith.constant dense<0.000000e+00> : vector<16xf32>
    %313 = vector.multi_reduction <add>, %312, %cst_122 [1] : vector<16x16xf32> to vector<16xf32>
    %314 = vector.shape_cast %313 : vector<16xf32> to vector<16x1xf32>
    %315 = tpu.reciprocal %314 {approx = true} : vector<16x1xf32> -> vector<16x1xf32>
    %316 = vector.broadcast %315 : vector<16x1xf32> to vector<16x16xf32>
    %317 = arith.mulf %312, %316 : vector<16x16xf32>
    %318 = arith.truncf %317 : vector<16x16xf32> to vector<16x16xbf16>
    %cst_123 = arith.constant dense<0.000000e+00> : vector<16x8xf32>
    %319 = tpu.matmul %318, %305, %cst_123 {dimension_numbers = #tpu.dot_dimension_numbers<[1], [1], [0], [0], [0, 0, 1, 0], [], []>} : vector<16x16xbf16>, vector<8x16xbf16>, vector<16x8xf32> -> vector<16x8xf32>
    %320 = tpu.concatenate %259, %279, %299, %319 in 1 : vector<16x8xf32>, vector<16x8xf32>, vector<16x8xf32>, vector<16x8xf32> -> vector<16x32xf32>
    %321 = arith.truncf %320 : vector<16x32xf32> to vector<16x32xbf16>
    %c1_124 = arith.constant 1 : index
    %c0_125 = arith.constant 0 : index
    %c0_126 = arith.constant 0 : index
    %322 = vector.load %arg10[%c1_124, %c0_125, %c0_126] : memref<2x32x32xbf16, #tpu.memory_space<vmem>>, vector<1x32x32xbf16>
    %323 = vector.shape_cast %322 : vector<1x32x32xbf16> to vector<32x32xbf16>
    %cst_127 = arith.constant dense<0.000000e+00> : vector<16x32xf32>
    %324 = tpu.matmul %321, %323, %cst_127 {dimension_numbers = #tpu.dot_dimension_numbers<[1], [0], [0], [1], [0, 0, 1, 1], [], []>} : vector<16x32xbf16>, vector<32x32xbf16>, vector<16x32xf32> -> vector<16x32xf32>
    %325 = arith.addf %198, %324 : vector<16x32xf32>
    %c1_128 = arith.constant 1 : index
    %c0_129 = arith.constant 0 : index
    %c0_130 = arith.constant 0 : index
    %326 = vector.load %arg11[%c1_128, %c0_129, %c0_130] : memref<2x1x32xf32, #tpu.memory_space<vmem>>, vector<1x1x32xf32>
    %327 = vector.shape_cast %326 : vector<1x1x32xf32> to vector<1x32xf32>
    %328 = vector.broadcast %327 : vector<1x32xf32> to vector<16x32xf32>
    %329 = arith.addf %325, %328 : vector<16x32xf32>
    %c1_131 = arith.constant 1 : index
    %c0_132 = arith.constant 0 : index
    %c0_133 = arith.constant 0 : index
    %330 = vector.load %arg12[%c1_131, %c0_132, %c0_133] : memref<2x1x32xf32, #tpu.memory_space<vmem>>, vector<1x1x32xf32>
    %331 = vector.shape_cast %330 : vector<1x1x32xf32> to vector<1x32xf32>
    %c1_134 = arith.constant 1 : index
    %c0_135 = arith.constant 0 : index
    %c0_136 = arith.constant 0 : index
    %332 = vector.load %arg13[%c1_134, %c0_135, %c0_136] : memref<2x1x32xf32, #tpu.memory_space<vmem>>, vector<1x1x32xf32>
    %333 = vector.shape_cast %332 : vector<1x1x32xf32> to vector<1x32xf32>
    %cst_137 = arith.constant dense<0.000000e+00> : vector<16xf32>
    %334 = vector.multi_reduction <add>, %329, %cst_137 [1] : vector<16x32xf32> to vector<16xf32>
    %335 = vector.shape_cast %334 : vector<16xf32> to vector<16x1xf32>
    %cst_138 = arith.constant 3.200000e+01 : f32
    %336 = vector.broadcast %cst_138 : f32 to vector<16x1xf32>
    %337 = arith.divf %335, %336 : vector<16x1xf32>
    %338 = vector.broadcast %337 : vector<16x1xf32> to vector<16x32xf32>
    %339 = arith.subf %329, %338 : vector<16x32xf32>
    %340 = arith.mulf %339, %339 : vector<16x32xf32>
    %cst_139 = arith.constant dense<0.000000e+00> : vector<16xf32>
    %341 = vector.multi_reduction <add>, %340, %cst_139 [1] : vector<16x32xf32> to vector<16xf32>
    %342 = vector.shape_cast %341 : vector<16xf32> to vector<16x1xf32>
    %cst_140 = arith.constant 3.200000e+01 : f32
    %343 = vector.broadcast %cst_140 : f32 to vector<16x1xf32>
    %344 = arith.divf %342, %343 : vector<16x1xf32>
    %345 = vector.broadcast %337 : vector<16x1xf32> to vector<16x32xf32>
    %346 = arith.subf %329, %345 : vector<16x32xf32>
    %cst_141 = arith.constant 9.99999974E-6 : f32
    %347 = vector.broadcast %cst_141 : f32 to vector<16x1xf32>
    %348 = arith.addf %344, %347 : vector<16x1xf32>
    %349 = math.rsqrt %348 : vector<16x1xf32>
    %350 = vector.broadcast %349 : vector<16x1xf32> to vector<16x32xf32>
    %351 = arith.mulf %346, %350 : vector<16x32xf32>
    %352 = vector.broadcast %331 : vector<1x32xf32> to vector<16x32xf32>
    %353 = arith.mulf %351, %352 : vector<16x32xf32>
    %354 = vector.broadcast %333 : vector<1x32xf32> to vector<16x32xf32>
    %355 = arith.addf %353, %354 : vector<16x32xf32>
    %356 = arith.truncf %355 : vector<16x32xf32> to vector<16x32xbf16>
    %c1_142 = arith.constant 1 : index
    %c0_143 = arith.constant 0 : index
    %c0_144 = arith.constant 0 : index
    %357 = vector.load %arg14[%c1_142, %c0_143, %c0_144] : memref<2x32x128xbf16, #tpu.memory_space<vmem>>, vector<1x32x128xbf16>
    %358 = vector.shape_cast %357 : vector<1x32x128xbf16> to vector<32x128xbf16>
    %cst_145 = arith.constant dense<0.000000e+00> : vector<16x128xf32>
    %359 = tpu.matmul %356, %358, %cst_145 {dimension_numbers = #tpu.dot_dimension_numbers<[1], [0], [0], [1], [0, 0, 1, 1], [], []>} : vector<16x32xbf16>, vector<32x128xbf16>, vector<16x128xf32> -> vector<16x128xf32>
    %c1_146 = arith.constant 1 : index
    %c0_147 = arith.constant 0 : index
    %c0_148 = arith.constant 0 : index
    %360 = vector.load %arg15[%c1_146, %c0_147, %c0_148] : memref<2x1x128xf32, #tpu.memory_space<vmem>>, vector<1x1x128xf32>
    %361 = vector.shape_cast %360 : vector<1x1x128xf32> to vector<1x128xf32>
    %362 = vector.broadcast %361 : vector<1x128xf32> to vector<16x128xf32>
    %363 = arith.addf %359, %362 : vector<16x128xf32>
    %364 = arith.mulf %363, %363 : vector<16x128xf32>
    %365 = arith.mulf %363, %364 : vector<16x128xf32>
    %cst_149 = arith.constant 4.471500e-02 : f32
    %366 = vector.broadcast %cst_149 : f32 to vector<16x128xf32>
    %367 = arith.mulf %366, %365 : vector<16x128xf32>
    %368 = arith.addf %363, %367 : vector<16x128xf32>
    %cst_150 = arith.constant 0.797884583 : f32
    %369 = vector.broadcast %cst_150 : f32 to vector<16x128xf32>
    %370 = arith.mulf %369, %368 : vector<16x128xf32>
    %371 = math.tanh %370 : vector<16x128xf32>
    %cst_151 = arith.constant 1.000000e+00 : f32
    %372 = vector.broadcast %cst_151 : f32 to vector<16x128xf32>
    %373 = arith.addf %372, %371 : vector<16x128xf32>
    %cst_152 = arith.constant 5.000000e-01 : f32
    %374 = vector.broadcast %cst_152 : f32 to vector<16x128xf32>
    %375 = arith.mulf %374, %373 : vector<16x128xf32>
    %376 = arith.mulf %363, %375 : vector<16x128xf32>
    %377 = arith.truncf %376 : vector<16x128xf32> to vector<16x128xbf16>
    %c1_153 = arith.constant 1 : index
    %c0_154 = arith.constant 0 : index
    %c0_155 = arith.constant 0 : index
    %378 = vector.load %arg16[%c1_153, %c0_154, %c0_155] : memref<2x128x32xbf16, #tpu.memory_space<vmem>>, vector<1x128x32xbf16>
    %379 = vector.shape_cast %378 : vector<1x128x32xbf16> to vector<128x32xbf16>
    %cst_156 = arith.constant dense<0.000000e+00> : vector<16x32xf32>
    %380 = tpu.matmul %377, %379, %cst_156 {dimension_numbers = #tpu.dot_dimension_numbers<[1], [0], [0], [1], [0, 0, 1, 1], [], []>} : vector<16x128xbf16>, vector<128x32xbf16>, vector<16x32xf32> -> vector<16x32xf32>
    %c1_157 = arith.constant 1 : index
    %c0_158 = arith.constant 0 : index
    %c0_159 = arith.constant 0 : index
    %381 = vector.load %arg17[%c1_157, %c0_158, %c0_159] : memref<2x1x32xf32, #tpu.memory_space<vmem>>, vector<1x1x32xf32>
    %382 = vector.shape_cast %381 : vector<1x1x32xf32> to vector<1x32xf32>
    %383 = vector.broadcast %382 : vector<1x32xf32> to vector<16x32xf32>
    %384 = arith.addf %380, %383 : vector<16x32xf32>
    %385 = arith.addf %329, %384 : vector<16x32xf32>
    %c0_160 = arith.constant 0 : index
    %c0_161 = arith.constant 0 : index
    %386 = vector.load %arg18[%c0_160, %c0_161] : memref<1x32xf32, #tpu.memory_space<vmem>>, vector<1x32xf32>
    %c0_162 = arith.constant 0 : index
    %c0_163 = arith.constant 0 : index
    %387 = vector.load %arg19[%c0_162, %c0_163] : memref<1x32xf32, #tpu.memory_space<vmem>>, vector<1x32xf32>
    %cst_164 = arith.constant dense<0.000000e+00> : vector<16xf32>
    %388 = vector.multi_reduction <add>, %385, %cst_164 [1] : vector<16x32xf32> to vector<16xf32>
    %389 = vector.shape_cast %388 : vector<16xf32> to vector<16x1xf32>
    %cst_165 = arith.constant 3.200000e+01 : f32
    %390 = vector.broadcast %cst_165 : f32 to vector<16x1xf32>
    %391 = arith.divf %389, %390 : vector<16x1xf32>
    %392 = vector.broadcast %391 : vector<16x1xf32> to vector<16x32xf32>
    %393 = arith.subf %385, %392 : vector<16x32xf32>
    %394 = arith.mulf %393, %393 : vector<16x32xf32>
    %cst_166 = arith.constant dense<0.000000e+00> : vector<16xf32>
    %395 = vector.multi_reduction <add>, %394, %cst_166 [1] : vector<16x32xf32> to vector<16xf32>
    %396 = vector.shape_cast %395 : vector<16xf32> to vector<16x1xf32>
    %cst_167 = arith.constant 3.200000e+01 : f32
    %397 = vector.broadcast %cst_167 : f32 to vector<16x1xf32>
    %398 = arith.divf %396, %397 : vector<16x1xf32>
    %399 = vector.broadcast %391 : vector<16x1xf32> to vector<16x32xf32>
    %400 = arith.subf %385, %399 : vector<16x32xf32>
    %cst_168 = arith.constant 9.99999974E-6 : f32
    %401 = vector.broadcast %cst_168 : f32 to vector<16x1xf32>
    %402 = arith.addf %398, %401 : vector<16x1xf32>
    %403 = math.rsqrt %402 : vector<16x1xf32>
    %404 = vector.broadcast %403 : vector<16x1xf32> to vector<16x32xf32>
    %405 = arith.mulf %400, %404 : vector<16x32xf32>
    %406 = vector.broadcast %386 : vector<1x32xf32> to vector<16x32xf32>
    %407 = arith.mulf %405, %406 : vector<16x32xf32>
    %408 = vector.broadcast %387 : vector<1x32xf32> to vector<16x32xf32>
    %409 = arith.addf %407, %408 : vector<16x32xf32>
    %c0_169 = arith.constant 0 : index
    %c0_170 = arith.constant 0 : index
    %410 = vector.load %arg20[%c0_169, %c0_170] : memref<16x32xf32, #tpu.memory_space<vmem>>, vector<16x32xf32>
    tpu.vector_store %arg20[%c0_169, %c0_170], %409 {strides = array<i32>} : memref<16x32xf32, #tpu.memory_space<vmem>>, vector<16x32xf32>,
    return
  }
}

</mosaic_0001>

<llo_original>
// kernel: neuron_text_encoder_forward.1
$region0: #{neuron_text_encoder_forward.1}
  #allocation0 [shape = 'u32[]', space=smem, size = 0x4, offset = 0x4, fixed_abs, tag = 'smem constant byte address 0x4 - core index']
  #allocation1 [shape = 'u32[144,128]{1,0:T(1,128)}', space=vmem, size = 0x12000, scoped, tag = 'internal scratch']
  %s0 = inlined_call_operand.vmem [shape: s32[16,1], index: 0, kind: input, shape index: {}]
  %s1 = inlined_call_operand.vmem [shape: f32[16,16], index: 1, kind: input, shape index: {}]
  %s2 = inlined_call_operand.vmem [shape: f32[100,32], index: 2, kind: input, shape index: {}]
  %s3 = inlined_call_operand.vmem [shape: f32[8,32], index: 3, kind: input, shape index: {}]
  %s4 = inlined_call_operand.vmem [shape: f32[2,1,32], index: 4, kind: input, shape index: {}]
  %s5 = inlined_call_operand.vmem [shape: f32[2,1,32], index: 5, kind: input, shape index: {}]
  %s6 = inlined_call_operand.vmem [shape: bf16[2,32,32], index: 6, kind: input, shape index: {}]
  %s7 = inlined_call_operand.vmem [shape: f32[2,1,32], index: 7, kind: input, shape index: {}]
  %s8 = inlined_call_operand.vmem [shape: bf16[2,64,32], index: 8, kind: input, shape index: {}]
  %s9 = inlined_call_operand.vmem [shape: f32[2,64,1], index: 9, kind: input, shape index: {}]
  %s10 = inlined_call_operand.vmem [shape: bf16[2,32,32], index: 10, kind: input, shape index: {}]
  %s11 = inlined_call_operand.vmem [shape: f32[2,1,32], index: 11, kind: input, shape index: {}]
  %s12 = inlined_call_operand.vmem [shape: f32[2,1,32], index: 12, kind: input, shape index: {}]
  %s13 = inlined_call_operand.vmem [shape: f32[2,1,32], index: 13, kind: input, shape index: {}]
  %s14 = inlined_call_operand.vmem [shape: bf16[2,32,128], index: 14, kind: input, shape index: {}]
  %s15 = inlined_call_operand.vmem [shape: f32[2,1,128], index: 15, kind: input, shape index: {}]
  %s16 = inlined_call_operand.vmem [shape: bf16[2,128,32], index: 16, kind: input, shape index: {}]
  %s17 = inlined_call_operand.vmem [shape: f32[2,1,32], index: 17, kind: input, shape index: {}]
  %s18 = inlined_call_operand.vmem [shape: f32[1,32], index: 18, kind: input, shape index: {}]
  %s19 = inlined_call_operand.vmem [shape: f32[1,32], index: 19, kind: input, shape index: {}]
  %s20 = inlined_call_operand.hbm [shape: f32[16,32], index: 20, kind: output, shape index: {}]
  %s21 = sld [smem:[#allocation0]]
  $region90: #{neuron_text_encoder_forward.1} parent=0
    _
  %s23 = ssub.s32 1, %s21
  %s24 = scalar_select 0, %s23, %s21
  $region1: #{neuron_text_encoder_forward.1} parent=0
    #allocation2 [shape = 'u8[8192]{0}', space=vmem, size = 0x2000, scoped, tag = 'output window, operand 0, single buffered']
    #allocation3 [shape = 's32[1]{0}', space=sflag, size = 0x4, scoped, tag = 'scoped memory for neuron_text_encoder_forward.1']
    %25 = vsyncpa [#allocation3], 0
    // Predicated region
    $region2: #{neuron_text_encoder_forward.1} parent=1 // pred_check
      _
    $region3: #{neuron_text_encoder_forward.1} parent=1 // pred_check_branch
      %27 = sbr.rel (0) target = $region5
    $region4: #{neuron_text_encoder_forward.1} parent=1 // pred_region
      _
    $region5: #{neuron_text_encoder_forward.1} parent=1 // pred_fallthru
      _
    // Predicated region
    $region6: #{neuron_text_encoder_forward.1} parent=1 // pred_check
      _
    $region7: #{neuron_text_encoder_forward.1} parent=1 // pred_check_branch
      %29 = sbr.rel (0) target = $region9
    $region8: #{neuron_text_encoder_forward.1} parent=1 // pred_region
      _
    $region9: #{neuron_text_encoder_forward.1} parent=1 // pred_fallthru
      _
    // Predicated region
    $region10: #{neuron_text_encoder_forward.1} parent=1 // pred_check
      _
    $region11: #{neuron_text_encoder_forward.1} parent=1 // pred_check_branch
      %31 = sbr.rel (0) target = $region13
    $region12: #{neuron_text_encoder_forward.1} parent=1 // pred_region
      _
    $region13: #{neuron_text_encoder_forward.1} parent=1 // pred_fallthru
      _
    // Predicated region
    $region14: #{neuron_text_encoder_forward.1} parent=1 // pred_check
      _
    $region15: #{neuron_text_encoder_forward.1} parent=1 // pred_check_branch
      %33 = sbr.rel (0) target = $region17
    $region16: #{neuron_text_encoder_forward.1} parent=1 // pred_region
      _
    $region17: #{neuron_text_encoder_forward.1} parent=1 // pred_fallthru
      _
    // Predicated region
    $region18: #{neuron_text_encoder_forward.1} parent=1 // pred_check
      _
    $region19: #{neuron_text_encoder_forward.1} parent=1 // pred_check_branch
      %35 = sbr.rel (0) target = $region21
    $region20: #{neuron_text_encoder_forward.1} parent=1 // pred_region
      _
    $region21: #{neuron_text_encoder_forward.1} parent=1 // pred_fallthru
      _
    // Predicated region
    $region22: #{neuron_text_encoder_forward.1} parent=1 // pred_check
      _
    $region23: #{neuron_text_encoder_forward.1} parent=1 // pred_check_branch
      %37 = sbr.rel (0) target = $region25
    $region24: #{neuron_text_encoder_forward.1} parent=1 // pred_region
      _
    $region25: #{neuron_text_encoder_forward.1} parent=1 // pred_fallthru
      _
    // Predicated region
    $region26: #{neuron_text_encoder_forward.1} parent=1 // pred_check
      _
    $region27: #{neuron_text_encoder_forward.1} parent=1 // pred_check_branch
      %39 = sbr.rel (0) target = $region29
    $region28: #{neuron_text_encoder_forward.1} parent=1 // pred_region
      _
    $region29: #{neuron_text_encoder_forward.1} parent=1 // pred_fallthru
      _
    // Predicated region
    $region30: #{neuron_text_encoder_forward.1} parent=1 // pred_check
      _
    $region31: #{neuron_text_encoder_forward.1} parent=1 // pred_check_branch
      %41 = sbr.rel (0) target = $region33
    $region32: #{neuron_text_encoder_forward.1} parent=1 // pred_region
      _
    $region33: #{neuron_text_encoder_forward.1} parent=1 // pred_fallthru
      _
    // Predicated region
    $region34: #{neuron_text_encoder_forward.1} parent=1 // pred_check
      _
    $region35: #{neuron_text_encoder_forward.1} parent=1 // pred_check_branch
      %43 = sbr.rel (0) target = $region37
    $region36: #{neuron_text_encoder_forward.1} parent=1 // pred_region
      _
    $region37: #{neuron_text_encoder_forward.1} parent=1 // pred_fallthru
      _
    // Predicated region
    $region38: #{neuron_text_encoder_forward.1} parent=1 // pred_check
      _
    $region39: #{neuron_text_encoder_forward.1} parent=1 // pred_check_branch
      %45 = sbr.rel (0) target = $region41
    $region40: #{neuron_text_encoder_forward.1} parent=1 // pred_region
      _
    $region41: #{neuron_text_encoder_forward.1} parent=1 // pred_fallthru
      _
    // Predicated region
    $region42: #{neuron_text_encoder_forward.1} parent=1 // pred_check
      _
    $region43: #{neuron_text_encoder_forward.1} parent=1 // pred_check_branch
      %47 = sbr.rel (0) target = $region45
    $region44: #{neuron_text_encoder_forward.1} parent=1 // pred_region
      _
    $region45: #{neuron_text_encoder_forward.1} parent=1 // pred_fallthru
      _
    // Predicated region
    $region46: #{neuron_text_encoder_forward.1} parent=1 // pred_check
      _
    $region47: #{neuron_text_encoder_forward.1} parent=1 // pred_check_branch
      %49 = sbr.rel (0) target = $region49
    $region48: #{neuron_text_encoder_forward.1} parent=1 // pred_region
      _
    $region49: #{neuron_text_encoder_forward.1} parent=1 // pred_fallthru
      _
    // Predicated region
    $region50: #{neuron_text_encoder_forward.1} parent=1 // pred_check
      _
    $region51: #{neuron_text_encoder_forward.1} parent=1 // pred_check_branch
      %51 = sbr.rel (0) target = $region53
    $region52: #{neuron_text_encoder_forward.1} parent=1 // pred_region
      _
    $region53: #{neuron_text_encoder_forward.1} parent=1 // pred_fallthru
      _
    // Predicated region
    $region54: #{neuron_text_encoder_forward.1} parent=1 // pred_check
      _
    $region55: #{neuron_text_encoder_forward.1} parent=1 // pred_check_branch
      %53 = sbr.rel (0) target = $region57
    $region56: #{neuron_text_encoder_forward.1} parent=1 // pred_region
      _
    $region57: #{neuron_text_encoder_forward.1} parent=1 // pred_fallthru
      _
    // Predicated region
    $region58: #{neuron_text_encoder_forward.1} parent=1 // pred_check
      _
    $region59: #{neuron_text_encoder_forward.1} parent=1 // pred_check_branch
      %55 = sbr.rel (0) target = $region61
    $region60: #{neuron_text_encoder_forward.1} parent=1 // pred_region
      _
    $region61: #{neuron_text_encoder_forward.1} parent=1 // pred_fallthru
      _
    // Predicated region
    $region62: #{neuron_text_encoder_forward.1} parent=1 // pred_check
      _
    $region63: #{neuron_text_encoder_forward.1} parent=1 // pred_check_branch
      %57 = sbr.rel (0) target = $region65
    $region64: #{neuron_text_encoder_forward.1} parent=1 // pred_region
      _
    $region65: #{neuron_text_encoder_forward.1} parent=1 // pred_fallthru
      _
    // Predicated region
    $region66: #{neuron_text_encoder_forward.1} parent=1 // pred_check
      _
    $region67: #{neuron_text_encoder_forward.1} parent=1 // pred_check_branch
      %59 = sbr.rel (0) target = $region69
    $region68: #{neuron_text_encoder_forward.1} parent=1 // pred_region
      _
    $region69: #{neuron_text_encoder_forward.1} parent=1 // pred_fallthru
      _
    // Predicated region
    $region70: #{neuron_text_encoder_forward.1} parent=1 // pred_check
      _
    $region71: #{neuron_text_encoder_forward.1} parent=1 // pred_check_branch
      %61 = sbr.rel (0) target = $region73
    $region72: #{neuron_text_encoder_forward.1} parent=1 // pred_region
      _
    $region73: #{neuron_text_encoder_forward.1} parent=1 // pred_fallthru
      _
    // Predicated region
    $region74: #{neuron_text_encoder_forward.1} parent=1 // pred_check
      _
    $region75: #{neuron_text_encoder_forward.1} parent=1 // pred_check_branch
      %63 = sbr.rel (0) target = $region77
    $region76: #{neuron_text_encoder_forward.1} parent=1 // pred_region
      _
    $region77: #{neuron_text_encoder_forward.1} parent=1 // pred_fallthru
      _
    // Predicated region
    $region78: #{neuron_text_encoder_forward.1} parent=1 // pred_check
      _
    $region79: #{neuron_text_encoder_forward.1} parent=1 // pred_check_branch
      %65 = sbr.rel (0) target = $region81
    $region80: #{neuron_text_encoder_forward.1} parent=1 // pred_region
      _
    $region81: #{neuron_text_encoder_forward.1} parent=1 // pred_fallthru
      _
    %v67 = vld [vmem:[%s0] sm:$0xff]
    %v68 = vld [vmem:[%s0 + $0x8] sm:$0xff]
    %v69 = vlaneseq
    %v70 = vand.u32 %v69, 127
    %71 = vset.pattern.permute.xlu0 0
    %72 = vperm.xlu0 %71, %v67
    %v73 = vpop.permute.xlu0 %72
    %74 = vset.pattern.permute.xlu0 0
    %75 = vperm.xlu0 %74, %v68
    %v76 = vpop.permute.xlu0 %75
    %vm77 = vcmp.eq.s32.totalorder %v73, %v70
    %vm78 = vcmp.eq.s32.totalorder %v76, %v70
    %v79 = vsel %vm77, 1, 0
    %v80 = vsel %vm78, 1, 0
    %v81 = vcvt.s32.f32 %v79
    %v82 = vcvt.s32.f32 %v80
    %v83 = vld [vmem:[%s2] sm:$0xff]
    %v84 = vld [vmem:[%s2 + $0x8] sm:$0xff]
    %v85 = vld [vmem:[%s2 + $0x10] sm:$0xff]
    %v86 = vld [vmem:[%s2 + $0x18] sm:$0xff]
    %v87 = vld [vmem:[%s2 + $0x20] sm:$0xff]
    %v88 = vld [vmem:[%s2 + $0x28] sm:$0xff]
    %v89 = vld [vmem:[%s2 + $0x30] sm:$0xff]
    %v90 = vld [vmem:[%s2 + $0x38] sm:$0xff]
    %v91 = vld [vmem:[%s2 + $0x40] sm:$0xff]
    %v92 = vld [vmem:[%s2 + $0x48] sm:$0xff]
    %v93 = vld [vmem:[%s2 + $0x50] sm:$0xff]
    %v94 = vld [vmem:[%s2 + $0x58] sm:$0xff]
    %v95 = vld [vmem:[%s2 + $0x60] sm:$0xf]
    %v96 = vld [vmem:[%s3] sm:$0xff]
    %vm97 = vcmask 818176
    %v99 = vsel %vm97, %v81, 0
    %v102 = vsel %vm97, %v82, 0
    %vm104 = vcmask 1043456
    %v106 = vsel %vm104, %v95, 0
    %108 = vmatprep.subr.mxu0 0.0
    %109 = vmatpush1.msra.mxu0 %v83
    %110 = vmatprep.subr.mxu0 0.0
    %111 = vmatpush1.msra.mxu0 %v84
    %112 = vmatprep.subr.mxu0 0.0
    %113 = vmatpush1.msra.mxu0 %v85
    %114 = vmatprep.subr.mxu0 0.0
    %115 = vmatpush1.msra.mxu0 %v86
    %116 = vmatprep.subr.mxu0 0.0
    %117 = vmatpush1.msra.mxu0 %v87
    %118 = vmatprep.subr.mxu0 0.0
    %119 = vmatpush1.msra.mxu0 %v88
    %120 = vmatprep.subr.mxu0 0.0
    %121 = vmatpush1.msra.mxu0 %v89
    %122 = vmatprep.subr.mxu0 0.0
    %123 = vmatpush1.msra.mxu0 %v90
    %124 = vmatprep.subr.mxu0 0.0
    %125 = vmatpush1.msra.mxu0 %v91
    %126 = vmatprep.subr.mxu0 0.0
    %127 = vmatpush1.msra.mxu0 %v92
    %128 = vmatprep.subr.mxu0 0.0
    %129 = vmatpush1.msra.mxu0 %v93
    %130 = vmatprep.subr.mxu0 0.0
    %131 = vmatpush1.msra.mxu0 %v94
    %132 = vmatprep.subr.mxu0 0.0
    %133 = vmatpush1.msra.mxu0 %v106
    %134 = vmatprep.subr.mxu0 0.0
    %135 = vmatpush1.msra.mxu0 0.0
    %136 = vmatprep.subr.mxu0 0.0
    %137 = vmatpush1.msra.mxu0 0.0
    %138 = vmatprep.subr.mxu0 0.0
    %139 = vmatpush1.msra.mxu0 0.0
    %140 = vmatprep.subr.mxu0 0.0
    %141 = vmatpush1.msra.mxu0 0.0
    %142 = vmatprep.subr.mxu0 0.0
    %143 = vmatpush1.msra.mxu0 0.0
    %144 = vmatprep.subr.mxu0 0.0
    %145 = vmatpush1.msra.mxu0 0.0
    %146 = vmatprep.subr.mxu0 0.0
    %147 = vmatpush1.msra.mxu0 0.0
    %148 = vmatprep.subr.mxu0 0.0
    %149 = vmatpush1.msra.mxu0 0.0
    %150 = vmatprep.subr.mxu0 0.0
    %151 = vmatpush1.msra.mxu0 0.0
    %152 = vmatprep.subr.mxu0 0.0
    %153 = vmatpush1.msra.mxu0 0.0
    %154 = vmatprep.subr.mxu0 0.0
    %155 = vmatpush1.msra.mxu0 0.0
    %156 = vmatprep.subr.mxu0 0.0
    %157 = vmatpush1.msra.mxu0 0.0
    %158 = vmatprep.subr.mxu0 0.0
    %159 = vmatpush1.msra.mxu0 0.0
    %160 = vmatprep.subr.mxu0 0.0
    %161 = vmatpush1.msra.mxu0 0.0
    %162 = vmatprep.subr.mxu0 0.0
    %163 = vmatpush1.msra.mxu0 0.0
    %164 = vmatprep.subr.mxu0 0.0
    %165 = vmatpush1.msra.mxu0 0.0
    %166 = vmatprep.subr.mxu0 0.0
    %167 = vmatpush1.msra.mxu0 0.0
    %168 = vmatprep.subr.mxu0 0.0
    %169 = vmatpush1.msra.mxu0 0.0
    %170 = vmatprep.subr.mxu0 0.0
    %171 = vmatpush1.msra.mxu0 0.0
    %172 = vmatprep.mubr.f32.mxu0 0.0
    %173 = vmatmul.mubr.f32.gmra.mrb[0].mxu0 %v99
    %v174 = vpop.f32.mrb[0].mxu0
    %v175 = vadd.f32 %v96, %v174
    %v176 = vpop.f32.mrb[0].mxu0
    %177 = vmatprep.mubr.f32.mxu0 0.0
    %178 = vmatmul.mubr.f32.gmra.mrb[0].mxu0 %v102
    %v179 = vpop.f32.mrb[0].mxu0
    %v180 = vadd.f32 %v96, %v179
    %v181 = vpop.f32.mrb[0].mxu0
    %182 = vdwg.mxu0
    %v183 = vld [vmem:[%s1] sm:$0xff]
    %v184 = vld [vmem:[%s1 + $0x8] sm:$0xff]
    %v185 = vld [vmem:[%s4] sm:$0x1]
    %v186 = vld [vmem:[%s5] sm:$0x1]
    %vm187 = vcmask 261120
    %v188 = vsel %vm187, %v175, 0.0
    %189 = vadd.xlane.f32.xlu0 %v188
    %v190 = vpop.xlane.xlu0 %189
    %v191 = vsel %vm187, %v180, 0.0
    %192 = vadd.xlane.f32.xlu0 %v191
    %v193 = vpop.xlane.xlu0 %192
    %v194 = vrcp.pop 32.0
    %v195 = vmul.f32 %v190, %v194
    %v196 = vmul.f32 %v193, %v194
    %v197 = vsub.f32 %v175, %v195
    %v198 = vsub.f32 %v180, %v196
    %v199 = vmul.f32 %v197, %v197
    %v200 = vmul.f32 %v198, %v198
    %v201 = vsel %vm187, %v199, 0.0
    %202 = vadd.xlane.f32.xlu0 %v201
    %v203 = vpop.xlane.xlu0 %202
    %v204 = vsel %vm187, %v200, 0.0
    %205 = vadd.xlane.f32.xlu0 %v204
    %v206 = vpop.xlane.xlu0 %205
    %v207 = vmul.f32 %v203, %v194
    %v208 = vmul.f32 %v206, %v194
    %v209 = vadd.f32 %v207, 1e-05
    %v210 = vadd.f32 %v208, 1e-05
    %v211 = vrsqrt.pop %v209
    %v212 = vrsqrt.pop %v210
    %v213 = vmul.f32 %v197, %v211
    %v214 = vmul.f32 %v198, %v212
    %v216 = vlaneseq
    %v217 = vshrl.u32 %v216, 7
    %v218 = vsub.s32 0, %v217
    %v219 = vrot.slane %v185, %v218
    %v221 = vmul.f32 %v213, %v219
    %v222 = vmul.f32 %v214, %v219
    %v224 = vlaneseq
    %v225 = vshrl.u32 %v224, 7
    %v226 = vsub.s32 0, %v225
    %v227 = vrot.slane %v186, %v226
    %v229 = vadd.f32 %v221, %v227
    %v230 = vadd.f32 %v222, %v227
    %v231 = vpack.c.bf16 %v230, %v229
    %v232 = vld [vmem:[%s6] sm:$0xf]
    %v233 = vld [vmem:[%s6 + $0x4] sm:$0xf]
    %v234 = vld [vmem:[%s6 + $0x8] sm:$0xf]
    %v235 = vld [vmem:[%s6 + $0xc] sm:$0xf]
    %v236 = vld [vmem:[%s7] sm:$0x1]
    %v238 = vlaneseq
    %v239 = vshrl.u32 %v238, 7
    %v240 = vsub.s32 0, %v239
    %v241 = vrot.slane %v236, %v240
    %v247 = vunpack.c.l.b16 %v232
    %v248 = vunpack.c.l.b16 %v233
    %v249 = vunpack.c.l.b16 %v234
    %v250 = vunpack.c.l.b16 %v235
    %v251 = vpack.c.b16 %v248, %v247
    %v252 = vpack.c.b16 %v250, %v249
    %v256 = vsel %vm187, %v231, 0
    %258 = vmatprep.subr.bf16.mxu0 0
    %259 = vmatpush1.bf16.msra.mxu0 %v251
    %260 = vmatprep.subr.bf16.mxu0 0
    %261 = vmatpush1.bf16.msra.mxu0 %v252
    %262 = vmatprep.subr.bf16.mxu0 0
    %263 = vmatpush1.bf16.msra.mxu0 0
    %264 = vmatprep.subr.bf16.mxu0 0
    %265 = vmatpush1.bf16.msra.mxu0 0
    %266 = vmatprep.subr.bf16.mxu0 0
    %267 = vmatpush1.bf16.msra.mxu0 0
    %268 = vmatprep.subr.bf16.mxu0 0
    %269 = vmatpush1.bf16.msra.mxu0 0
    %270 = vmatprep.subr.bf16.mxu0 0
    %271 = vmatpush1.bf16.msra.mxu0 0
    %272 = vmatprep.subr.bf16.mxu0 0
    %273 = vmatpush1.bf16.msra.mxu0 0
    %274 = vmatprep.subr.bf16.mxu0 0
    %275 = vmatpush1.bf16.msra.mxu0 0
    %276 = vmatprep.subr.bf16.mxu0 0
    %277 = vmatpush1.bf16.msra.mxu0 0
    %278 = vmatprep.subr.bf16.mxu0 0
    %279 = vmatpush1.bf16.msra.mxu0 0
    %280 = vmatprep.subr.bf16.mxu0 0
    %281 = vmatpush1.bf16.msra.mxu0 0
    %282 = vmatprep.subr.bf16.mxu0 0
    %283 = vmatpush1.bf16.msra.mxu0 0
    %284 = vmatprep.subr.bf16.mxu0 0
    %285 = vmatpush1.bf16.msra.mxu0 0
    %286 = vmatprep.subr.bf16.mxu0 0
    %287 = vmatpush1.bf16.msra.mxu0 0
    %288 = vmatprep.subr.bf16.mxu0 0
    %289 = vmatpush1.bf16.msra.mxu0 0
    %290 = vmatprep.mubr.bf16.mxu0 0
    %291 = vmatmul.mubr.bf16.gmra.mrb[0].mxu0 %v256
    %v292 = vpop.f32.mrb[0].mxu0
    %v293 = vadd.f32 %v241, %v292
    %v294 = vpop.f32.mrb[0].mxu0
    %v295 = vpop.f32.mrb[0].mxu0
    %v296 = vadd.f32 %v241, %v295
    %v297 = vpop.f32.mrb[0].mxu0
    %298 = vdwg.mxu0
    %v299 = vld [vmem:[%s8] sm:$0xf]
    %v300 = vld [vmem:[%s8 + $0x4] sm:$0xf]
    %v301 = vld [vmem:[%s8 + $0x8] sm:$0xf]
    %v302 = vld [vmem:[%s8 + $0xc] sm:$0xf]
    %v303 = vld [vmem:[%s8 + $0x10] sm:$0xf]
    %v304 = vld [vmem:[%s8 + $0x14] sm:$0xf]
    %v305 = vld [vmem:[%s8 + $0x18] sm:$0xf]
    %v306 = vld [vmem:[%s8 + $0x1c] sm:$0xf]
    %v307 = vld [vmem:[%s9] sm:$0xff]
    %v308 = vld [vmem:[%s9 + $0x8] sm:$0xff]
    %v309 = vld [vmem:[%s9 + $0x10] sm:$0xff]
    %v310 = vld [vmem:[%s9 + $0x18] sm:$0xff]
    %v311 = vld [vmem:[%s9 + $0x20] sm:$0xff]
    %v312 = vld [vmem:[%s9 + $0x28] sm:$0xff]
    %v313 = vld [vmem:[%s9 + $0x30] sm:$0xff]
    %v314 = vld [vmem:[%s9 + $0x38] sm:$0xff]
    %316 = vset.pattern.permute.xlu0 0
    %317 = vperm.xlu0 %316, %v307
    %v318 = vpop.permute.xlu0 %317
    %321 = vset.pattern.permute.xlu0 0
    %322 = vperm.xlu0 %321, %v308
    %v323 = vpop.permute.xlu0 %322
    %326 = vset.pattern.permute.xlu0 0
    %327 = vperm.xlu0 %326, %v309
    %v328 = vpop.permute.xlu0 %327
    %331 = vset.pattern.permute.xlu0 0
    %332 = vperm.xlu0 %331, %v310
    %v333 = vpop.permute.xlu0 %332
    %336 = vset.pattern.permute.xlu0 0
    %337 = vperm.xlu0 %336, %v311
    %v338 = vpop.permute.xlu0 %337
    %341 = vset.pattern.permute.xlu0 0
    %342 = vperm.xlu0 %341, %v312
    %v343 = vpop.permute.xlu0 %342
    %346 = vset.pattern.permute.xlu0 0
    %347 = vperm.xlu0 %346, %v313
    %v348 = vpop.permute.xlu0 %347
    %351 = vset.pattern.permute.xlu0 0
    %352 = vperm.xlu0 %351, %v314
    %v353 = vpop.permute.xlu0 %352
    %v363 = vunpack.c.l.b16 %v299
    %v364 = vunpack.c.l.b16 %v300
    %v365 = vunpack.c.l.b16 %v301
    %v366 = vunpack.c.l.b16 %v302
    %v367 = vunpack.c.l.b16 %v303
    %v368 = vunpack.c.l.b16 %v304
    %v369 = vunpack.c.l.b16 %v305
    %v370 = vunpack.c.l.b16 %v306
    %v371 = vpack.c.b16 %v364, %v363
    %v372 = vpack.c.b16 %v366, %v365
    %v373 = vpack.c.b16 %v368, %v367
    %v374 = vpack.c.b16 %v370, %v369
    %v376 = vsel %vm187, %v371, 0
    %v379 = vsel %vm187, %v372, 0
    %v382 = vsel %vm187, %v373, 0
    %v385 = vsel %vm187, %v374, 0
    %387 = vmatprep.subr.bf16.mxu0 0
    %388 = vmatpush1.bf16.xpose.msra.mxu0 %v256
    %389 = vmatprep.subr.bf16.mxu0 0
    %390 = vmatpush1.bf16.xpose.msra.mxu0 0
    %391 = vmatprep.subr.bf16.mxu0 0
    %392 = vmatpush1.bf16.xpose.msra.mxu0 0
    %393 = vmatprep.subr.bf16.mxu0 0
    %394 = vmatpush1.bf16.xpose.msra.mxu0 0
    %395 = vmatprep.subr.bf16.mxu0 0
    %396 = vmatpush1.bf16.xpose.msra.mxu0 0
    %397 = vmatprep.subr.bf16.mxu0 0
    %398 = vmatpush1.bf16.xpose.msra.mxu0 0
    %399 = vmatprep.subr.bf16.mxu0 0
    %400 = vmatpush1.bf16.xpose.msra.mxu0 0
    %401 = vmatprep.subr.bf16.mxu0 0
    %402 = vmatpush1.bf16.xpose.msra.mxu0 0
    %403 = vmatprep.subr.bf16.mxu0 0
    %404 = vmatpush1.bf16.xpose.msra.mxu0 0
    %405 = vmatprep.subr.bf16.mxu0 0
    %406 = vmatpush1.bf16.xpose.msra.mxu0 0
    %407 = vmatprep.subr.bf16.mxu0 0
    %408 = vmatpush1.bf16.xpose.msra.mxu0 0
    %409 = vmatprep.subr.bf16.mxu0 0
    %410 = vmatpush1.bf16.xpose.msra.mxu0 0
    %411 = vmatprep.subr.bf16.mxu0 0
    %412 = vmatpush1.bf16.xpose.msra.mxu0 0
    %413 = vmatprep.subr.bf16.mxu0 0
    %414 = vmatpush1.bf16.xpose.msra.mxu0 0
    %415 = vmatprep.subr.bf16.mxu0 0
    %416 = vmatpush1.bf16.xpose.msra.mxu0 0
    %417 = vmatprep.subr.bf16.mxu0 0
    %418 = vmatpush1.bf16.xpose.msra.mxu0 0
    %419 = vmatprep.mubr.bf16.mxu0 0
    %420 = vmatmul.mubr.bf16.gmra.mrb[0].mxu0 %v376
    %v421 = vpop.f32.mrb[0].mxu0
    %v422 = vadd.f32 %v318, %v421
    %v423 = vpop.f32.mrb[0].mxu0
    %v424 = vpop.f32.mrb[0].mxu0
    %v425 = vadd.f32 %v323, %v424
    %v426 = vpop.f32.mrb[0].mxu0
    %427 = vmatprep.mubr.bf16.mxu0 0
    %428 = vmatmul.mubr.bf16.gmra.mrb[0].mxu0 %v379
    %v429 = vpop.f32.mrb[0].mxu0
    %v430 = vadd.f32 %v328, %v429
    %v431 = vpop.f32.mrb[0].mxu0
    %v432 = vpop.f32.mrb[0].mxu0
    %v433 = vadd.f32 %v333, %v432
    %v434 = vpop.f32.mrb[0].mxu0
    %435 = vmatprep.mubr.bf16.mxu0 0
    %436 = vmatmul.mubr.bf16.gmra.mrb[0].mxu0 %v382
    %v437 = vpop.f32.mrb[0].mxu0
    %v438 = vadd.f32 %v338, %v437
    %v439 = vpop.f32.mrb[0].mxu0
    %v440 = vpop.f32.mrb[0].mxu0
    %v441 = vadd.f32 %v343, %v440
    %v442 = vpop.f32.mrb[0].mxu0
    %443 = vmatprep.mubr.bf16.mxu0 0
    %444 = vmatmul.mubr.bf16.gmra.mrb[0].mxu0 %v385
    %v445 = vpop.f32.mrb[0].mxu0
    %v446 = vadd.f32 %v348, %v445
    %v447 = vpop.f32.mrb[0].mxu0
    %v448 = vpop.f32.mrb[0].mxu0
    %v449 = vadd.f32 %v353, %v448
    %v450 = vpop.f32.mrb[0].mxu0
    %451 = vdwg.mxu0
    %v452 = vpack.c.bf16 %v296, %v293
    %v453 = vpack.c.bf16 %v422, %v422
    %v454 = vpack.c.bf16 %v438, %v438
    %vm455 = vcmask 64512
    %v457 = vsel %vm455, %v452, 0
    %v460 = vsel %vm104, %v453, 0
    %462 = vmatprep.subr.bf16.mxu0 0
    %463 = vmatpush1.bf16.msra.mxu0 %v460
    %464 = vmatprep.subr.bf16.mxu0 0
    %465 = vmatpush1.bf16.msra.mxu0 0
    %466 = vmatprep.subr.bf16.mxu0 0
    %467 = vmatpush1.bf16.msra.mxu0 0
    %468 = vmatprep.subr.bf16.mxu0 0
    %469 = vmatpush1.bf16.msra.mxu0 0
    %470 = vmatprep.subr.bf16.mxu0 0
    %471 = vmatpush1.bf16.msra.mxu0 0
    %472 = vmatprep.subr.bf16.mxu0 0
    %473 = vmatpush1.bf16.msra.mxu0 0
    %474 = vmatprep.subr.bf16.mxu0 0
    %475 = vmatpush1.bf16.msra.mxu0 0
    %476 = vmatprep.subr.bf16.mxu0 0
    %477 = vmatpush1.bf16.msra.mxu0 0
    %478 = vmatprep.subr.bf16.mxu0 0
    %479 = vmatpush1.bf16.msra.mxu0 0
    %480 = vmatprep.subr.bf16.mxu0 0
    %481 = vmatpush1.bf16.msra.mxu0 0
    %482 = vmatprep.subr.bf16.mxu0 0
    %483 = vmatpush1.bf16.msra.mxu0 0
    %484 = vmatprep.subr.bf16.mxu0 0
    %485 = vmatpush1.bf16.msra.mxu0 0
    %486 = vmatprep.subr.bf16.mxu0 0
    %487 = vmatpush1.bf16.msra.mxu0 0
    %488 = vmatprep.subr.bf16.mxu0 0
    %489 = vmatpush1.bf16.msra.mxu0 0
    %490 = vmatprep.subr.bf16.mxu0 0
    %491 = vmatpush1.bf16.msra.mxu0 0
    %492 = vmatprep.subr.bf16.mxu0 0
    %493 = vmatpush1.bf16.msra.mxu0 0
    %494 = vmatprep.mubr.bf16.mxu0 0
    %495 = vmatmul.mubr.bf16.gmra.mrb[0].mxu0 %v457
    %v496 = vpop.f32.mrb[0].mxu0
    %v497 = vadd.f32 %v183, %v496
    %v498 = vpop.f32.mrb[0].mxu0
    %v499 = vpop.f32.mrb[0].mxu0
    %v500 = vadd.f32 %v184, %v499
    %v501 = vpop.f32.mrb[0].mxu0
    %502 = vdwg.mxu0
    %vm503 = vcmask 130048
    %v504 = vsel %vm503, %v497, -inf
    %505 = vmax.xlane.f32.xlu0 %v504
    %v506 = vpop.xlane.xlu0 %505
    %v507 = vsel %vm503, %v500, -inf
    %508 = vmax.xlane.f32.xlu0 %v507
    %v509 = vpop.xlane.xlu0 %508
    %v510 = vsub.f32 %v497, %v506
    %v511 = vsub.f32 %v500, %v509
    %v512 = vmul.f32 %v510, 1.442695
    %v513 = vpow.pop %v512
    %v514 = vmul.f32 %v511, 1.442695
    %v515 = vpow.pop %v514
    %v516 = vsel %vm503, %v513, 0.0
    %517 = vadd.xlane.f32.xlu0 %v516
    %v518 = vpop.xlane.xlu0 %517
    %v519 = vsel %vm503, %v515, 0.0
    %520 = vadd.xlane.f32.xlu0 %v519
    %v521 = vpop.xlane.xlu0 %520
    %v522 = vrcp.pop %v518
    %v523 = vrcp.pop %v521
    %v524 = vmul.f32 %v513, %v522
    %v525 = vmul.f32 %v515, %v523
    %v526 = vpack.c.bf16 %v525, %v524
    %v528 = vsel %vm503, %v526, 0
    %v531 = vsel %vm503, %v454, 0
    %533 = vmatprep.subr.bf16.mxu0 0
    %534 = vmatpush1.bf16.xpose.msra.mxu0 %v531
    %535 = vmatprep.subr.bf16.mxu0 0
    %536 = vmatpush1.bf16.xpose.msra.mxu0 0
    %537 = vmatprep.subr.bf16.mxu0 0
    %538 = vmatpush1.bf16.xpose.msra.mxu0 0
    %539 = vmatprep.subr.bf16.mxu0 0
    %540 = vmatpush1.bf16.xpose.msra.mxu0 0
    %541 = vmatprep.subr.bf16.mxu0 0
    %542 = vmatpush1.bf16.xpose.msra.mxu0 0
    %543 = vmatprep.subr.bf16.mxu0 0
    %544 = vmatpush1.bf16.xpose.msra.mxu0 0
    %545 = vmatprep.subr.bf16.mxu0 0
    %546 = vmatpush1.bf16.xpose.msra.mxu0 0
    %547 = vmatprep.subr.bf16.mxu0 0
    %548 = vmatpush1.bf16.xpose.msra.mxu0 0
    %549 = vmatprep.subr.bf16.mxu0 0
    %550 = vmatpush1.bf16.xpose.msra.mxu0 0
    %551 = vmatprep.subr.bf16.mxu0 0
    %552 = vmatpush1.bf16.xpose.msra.mxu0 0
    %553 = vmatprep.subr.bf16.mxu0 0
    %554 = vmatpush1.bf16.xpose.msra.mxu0 0
    %555 = vmatprep.subr.bf16.mxu0 0
    %556 = vmatpush1.bf16.xpose.msra.mxu0 0
    %557 = vmatprep.subr.bf16.mxu0 0
    %558 = vmatpush1.bf16.xpose.msra.mxu0 0
    %559 = vmatprep.subr.bf16.mxu0 0
    %560 = vmatpush1.bf16.xpose.msra.mxu0 0
    %561 = vmatprep.subr.bf16.mxu0 0
    %562 = vmatpush1.bf16.xpose.msra.mxu0 0
    %563 = vmatprep.subr.bf16.mxu0 0
    %564 = vmatpush1.bf16.xpose.msra.mxu0 0
    %565 = vmatprep.mubr.bf16.mxu0 0
    %566 = vmatmul.mubr.bf16.gmra.mrb[0].mxu0 %v528
    %v567 = vpop.f32.mrb[0].mxu0
    %v568 = vadd.f32 0.0, %v567
    %v569 = vpop.f32.mrb[0].mxu0
    %v570 = vpop.f32.mrb[0].mxu0
    %v571 = vadd.f32 0.0, %v570
    %v572 = vpop.f32.mrb[0].mxu0
    %573 = vdwg.mxu0
    %v574 = vpack.c.bf16 %v425, %v425
    %v575 = vpack.c.bf16 %v441, %v441
    %577 = vrot.lane.b32.xlu0 %v452, 120
    %v578 = vpop.permute.xlu0 %577
    %v580 = vsel %vm455, %v578, 0
    %v583 = vsel %vm104, %v574, 0
    %585 = vmatprep.subr.bf16.mxu0 0
    %586 = vmatpush1.bf16.msra.mxu0 %v583
    %587 = vmatprep.subr.bf16.mxu0 0
    %588 = vmatpush1.bf16.msra.mxu0 0
    %589 = vmatprep.subr.bf16.mxu0 0
    %590 = vmatpush1.bf16.msra.mxu0 0
    %591 = vmatprep.subr.bf16.mxu0 0
    %592 = vmatpush1.bf16.msra.mxu0 0
    %593 = vmatprep.subr.bf16.mxu0 0
    %594 = vmatpush1.bf16.msra.mxu0 0
    %595 = vmatprep.subr.bf16.mxu0 0
    %596 = vmatpush1.bf16.msra.mxu0 0
    %597 = vmatprep.subr.bf16.mxu0 0
    %598 = vmatpush1.bf16.msra.mxu0 0
    %599 = vmatprep.subr.bf16.mxu0 0
    %600 = vmatpush1.bf16.msra.mxu0 0
    %601 = vmatprep.subr.bf16.mxu0 0
    %602 = vmatpush1.bf16.msra.mxu0 0
    %603 = vmatprep.subr.bf16.mxu0 0
    %604 = vmatpush1.bf16.msra.mxu0 0
    %605 = vmatprep.subr.bf16.mxu0 0
    %606 = vmatpush1.bf16.msra.mxu0 0
    %607 = vmatprep.subr.bf16.mxu0 0
    %608 = vmatpush1.bf16.msra.mxu0 0
    %609 = vmatprep.subr.bf16.mxu0 0
    %610 = vmatpush1.bf16.msra.mxu0 0
    %611 = vmatprep.subr.bf16.mxu0 0
    %612 = vmatpush1.bf16.msra.mxu0 0
    %613 = vmatprep.subr.bf16.mxu0 0
    %614 = vmatpush1.bf16.msra.mxu0 0
    %615 = vmatprep.subr.bf16.mxu0 0
    %616 = vmatpush1.bf16.msra.mxu0 0
    %617 = vmatprep.mubr.bf16.mxu0 0
    %618 = vmatmul.mubr.bf16.gmra.mrb[0].mxu0 %v580
    %v619 = vpop.f32.mrb[0].mxu0
    %v620 = vadd.f32 %v183, %v619
    %v621 = vpop.f32.mrb[0].mxu0
    %v622 = vpop.f32.mrb[0].mxu0
    %v623 = vadd.f32 %v184, %v622
    %v624 = vpop.f32.mrb[0].mxu0
    %625 = vdwg.mxu0
    %v626 = vsel %vm503, %v620, -inf
    %627 = vmax.xlane.f32.xlu0 %v626
    %v628 = vpop.xlane.xlu0 %627
    %v629 = vsel %vm503, %v623, -inf
    %630 = vmax.xlane.f32.xlu0 %v629
    %v631 = vpop.xlane.xlu0 %630
    %v632 = vsub.f32 %v620, %v628
    %v633 = vsub.f32 %v623, %v631
    %v634 = vmul.f32 %v632, 1.442695
    %v635 = vpow.pop %v634
    %v636 = vmul.f32 %v633, 1.442695
    %v637 = vpow.pop %v636
    %v638 = vsel %vm503, %v635, 0.0
    %639 = vadd.xlane.f32.xlu0 %v638
    %v640 = vpop.xlane.xlu0 %639
    %v641 = vsel %vm503, %v637, 0.0
    %642 = vadd.xlane.f32.xlu0 %v641
    %v643 = vpop.xlane.xlu0 %642
    %v644 = vrcp.pop %v640
    %v645 = vrcp.pop %v643
    %v646 = vmul.f32 %v635, %v644
    %v647 = vmul.f32 %v637, %v645
    %v648 = vpack.c.bf16 %v647, %v646
    %v650 = vsel %vm503, %v648, 0
    %v653 = vsel %vm503, %v575, 0
    %655 = vmatprep.subr.bf16.mxu0 0
    %656 = vmatpush1.bf16.xpose.msra.mxu0 %v653
    %657 = vmatprep.subr.bf16.mxu0 0
    %658 = vmatpush1.bf16.xpose.msra.mxu0 0
    %659 = vmatprep.subr.bf16.mxu0 0
    %660 = vmatpush1.bf16.xpose.msra.mxu0 0
    %661 = vmatprep.subr.bf16.mxu0 0
    %662 = vmatpush1.bf16.xpose.msra.mxu0 0
    %663 = vmatprep.subr.bf16.mxu0 0
    %664 = vmatpush1.bf16.xpose.msra.mxu0 0
    %665 = vmatprep.subr.bf16.mxu0 0
    %666 = vmatpush1.bf16.xpose.msra.mxu0 0
    %667 = vmatprep.subr.bf16.mxu0 0
    %668 = vmatpush1.bf16.xpose.msra.mxu0 0
    %669 = vmatprep.subr.bf16.mxu0 0
    %670 = vmatpush1.bf16.xpose.msra.mxu0 0
    %671 = vmatprep.subr.bf16.mxu0 0
    %672 = vmatpush1.bf16.xpose.msra.mxu0 0
    %673 = vmatprep.subr.bf16.mxu0 0
    %674 = vmatpush1.bf16.xpose.msra.mxu0 0
    %675 = vmatprep.subr.bf16.mxu0 0
    %676 = vmatpush1.bf16.xpose.msra.mxu0 0
    %677 = vmatprep.subr.bf16.mxu0 0
    %678 = vmatpush1.bf16.xpose.msra.mxu0 0
    %679 = vmatprep.subr.bf16.mxu0 0
    %680 = vmatpush1.bf16.xpose.msra.mxu0 0
    %681 = vmatprep.subr.bf16.mxu0 0
    %682 = vmatpush1.bf16.xpose.msra.mxu0 0
    %683 = vmatprep.subr.bf16.mxu0 0
    %684 = vmatpush1.bf16.xpose.msra.mxu0 0
    %685 = vmatprep.subr.bf16.mxu0 0
    %686 = vmatpush1.bf16.xpose.msra.mxu0 0
    %687 = vmatprep.mubr.bf16.mxu0 0
    %688 = vmatmul.mubr.bf16.gmra.mrb[0].mxu0 %v650
    %v689 = vpop.f32.mrb[0].mxu0
    %v690 = vadd.f32 0.0, %v689
    %v691 = vpop.f32.mrb[0].mxu0
    %v692 = vpop.f32.mrb[0].mxu0
    %v693 = vadd.f32 0.0, %v692
    %v694 = vpop.f32.mrb[0].mxu0
    %695 = vdwg.mxu0
    %v696 = vpack.c.bf16 %v430, %v430
    %v697 = vpack.c.bf16 %v446, %v446
    %698 = vrot.lane.b32.xlu0 %v452, 112
    %v699 = vpop.permute.xlu0 %698
    %v701 = vsel %vm455, %v699, 0
    %v704 = vsel %vm104, %v696, 0
    %706 = vmatprep.subr.bf16.mxu0 0
    %707 = vmatpush1.bf16.msra.mxu0 %v704
    %708 = vmatprep.subr.bf16.mxu0 0
    %709 = vmatpush1.bf16.msra.mxu0 0
    %710 = vmatprep.subr.bf16.mxu0 0
    %711 = vmatpush1.bf16.msra.mxu0 0
    %712 = vmatprep.subr.bf16.mxu0 0
    %713 = vmatpush1.bf16.msra.mxu0 0
    %714 = vmatprep.subr.bf16.mxu0 0
    %715 = vmatpush1.bf16.msra.mxu0 0
    %716 = vmatprep.subr.bf16.mxu0 0
    %717 = vmatpush1.bf16.msra.mxu0 0
    %718 = vmatprep.subr.bf16.mxu0 0
    %719 = vmatpush1.bf16.msra.mxu0 0
    %720 = vmatprep.subr.bf16.mxu0 0
    %721 = vmatpush1.bf16.msra.mxu0 0
    %722 = vmatprep.subr.bf16.mxu0 0
    %723 = vmatpush1.bf16.msra.mxu0 0
    %724 = vmatprep.subr.bf16.mxu0 0
    %725 = vmatpush1.bf16.msra.mxu0 0
    %726 = vmatprep.subr.bf16.mxu0 0
    %727 = vmatpush1.bf16.msra.mxu0 0
    %728 = vmatprep.subr.bf16.mxu0 0
    %729 = vmatpush1.bf16.msra.mxu0 0
    %730 = vmatprep.subr.bf16.mxu0 0
    %731 = vmatpush1.bf16.msra.mxu0 0
    %732 = vmatprep.subr.bf16.mxu0 0
    %733 = vmatpush1.bf16.msra.mxu0 0
    %734 = vmatprep.subr.bf16.mxu0 0
    %735 = vmatpush1.bf16.msra.mxu0 0
    %736 = vmatprep.subr.bf16.mxu0 0
    %737 = vmatpush1.bf16.msra.mxu0 0
    %738 = vmatprep.mubr.bf16.mxu0 0
    %739 = vmatmul.mubr.bf16.gmra.mrb[0].mxu0 %v701
    %v740 = vpop.f32.mrb[0].mxu0
    %v741 = vadd.f32 %v183, %v740
    %v742 = vpop.f32.mrb[0].mxu0
    %v743 = vpop.f32.mrb[0].mxu0
    %v744 = vadd.f32 %v184, %v743
    %v745 = vpop.f32.mrb[0].mxu0
    %746 = vdwg.mxu0
    %v747 = vsel %vm503, %v741, -inf
    %748 = vmax.xlane.f32.xlu0 %v747
    %v749 = vpop.xlane.xlu0 %748
    %v750 = vsel %vm503, %v744, -inf
    %751 = vmax.xlane.f32.xlu0 %v750
    %v752 = vpop.xlane.xlu0 %751
    %v753 = vsub.f32 %v741, %v749
    %v754 = vsub.f32 %v744, %v752
    %v755 = vmul.f32 %v753, 1.442695
    %v756 = vpow.pop %v755
    %v757 = vmul.f32 %v754, 1.442695
    %v758 = vpow.pop %v757
    %v759 = vsel %vm503, %v756, 0.0
    %760 = vadd.xlane.f32.xlu0 %v759
    %v761 = vpop.xlane.xlu0 %760
    %v762 = vsel %vm503, %v758, 0.0
    %763 = vadd.xlane.f32.xlu0 %v762
    %v764 = vpop.xlane.xlu0 %763
    %v765 = vrcp.pop %v761
    %v766 = vrcp.pop %v764
    %v767 = vmul.f32 %v756, %v765
    %v768 = vmul.f32 %v758, %v766
    %v769 = vpack.c.bf16 %v768, %v767
    %v771 = vsel %vm503, %v769, 0
    %v774 = vsel %vm503, %v697, 0
    %776 = vmatprep.subr.bf16.mxu0 0
    %777 = vmatpush1.bf16.xpose.msra.mxu0 %v774
    %778 = vmatprep.subr.bf16.mxu0 0
    %779 = vmatpush1.bf16.xpose.msra.mxu0 0
    %780 = vmatprep.subr.bf16.mxu0 0
    %781 = vmatpush1.bf16.xpose.msra.mxu0 0
    %782 = vmatprep.subr.bf16.mxu0 0
    %783 = vmatpush1.bf16.xpose.msra.mxu0 0
    %784 = vmatprep.subr.bf16.mxu0 0
    %785 = vmatpush1.bf16.xpose.msra.mxu0 0
    %786 = vmatprep.subr.bf16.mxu0 0
    %787 = vmatpush1.bf16.xpose.msra.mxu0 0
    %788 = vmatprep.subr.bf16.mxu0 0
    %789 = vmatpush1.bf16.xpose.msra.mxu0 0
    %790 = vmatprep.subr.bf16.mxu0 0
    %791 = vmatpush1.bf16.xpose.msra.mxu0 0
    %792 = vmatprep.subr.bf16.mxu0 0
    %793 = vmatpush1.bf16.xpose.msra.mxu0 0
    %794 = vmatprep.subr.bf16.mxu0 0
    %795 = vmatpush1.bf16.xpose.msra.mxu0 0
    %796 = vmatprep.subr.bf16.mxu0 0
    %797 = vmatpush1.bf16.xpose.msra.mxu0 0
    %798 = vmatprep.subr.bf16.mxu0 0
    %799 = vmatpush1.bf16.xpose.msra.mxu0 0
    %800 = vmatprep.subr.bf16.mxu0 0
    %801 = vmatpush1.bf16.xpose.msra.mxu0 0
    %802 = vmatprep.subr.bf16.mxu0 0
    %803 = vmatpush1.bf16.xpose.msra.mxu0 0
    %804 = vmatprep.subr.bf16.mxu0 0
    %805 = vmatpush1.bf16.xpose.msra.mxu0 0
    %806 = vmatprep.subr.bf16.mxu0 0
    %807 = vmatpush1.bf16.xpose.msra.mxu0 0
    %808 = vmatprep.mubr.bf16.mxu0 0
    %809 = vmatmul.mubr.bf16.gmra.mrb[0].mxu0 %v771
    %v810 = vpop.f32.mrb[0].mxu0
    %v811 = vadd.f32 0.0, %v810
    %v812 = vpop.f32.mrb[0].mxu0
    %v813 = vpop.f32.mrb[0].mxu0
    %v814 = vadd.f32 0.0, %v813
    %v815 = vpop.f32.mrb[0].mxu0
    %816 = vdwg.mxu0
    %v817 = vpack.c.bf16 %v433, %v433
    %v818 = vpack.c.bf16 %v449, %v449
    %819 = vrot.lane.b32.xlu0 %v452, 104
    %v820 = vpop.permute.xlu0 %819
    %v822 = vsel %vm455, %v820, 0
    %v825 = vsel %vm104, %v817, 0
    %827 = vmatprep.subr.bf16.mxu0 0
    %828 = vmatpush1.bf16.msra.mxu0 %v825
    %829 = vmatprep.subr.bf16.mxu0 0
    %830 = vmatpush1.bf16.msra.mxu0 0
    %831 = vmatprep.subr.bf16.mxu0 0
    %832 = vmatpush1.bf16.msra.mxu0 0
    %833 = vmatprep.subr.bf16.mxu0 0
    %834 = vmatpush1.bf16.msra.mxu0 0
    %835 = vmatprep.subr.bf16.mxu0 0
    %836 = vmatpush1.bf16.msra.mxu0 0
    %837 = vmatprep.subr.bf16.mxu0 0
    %838 = vmatpush1.bf16.msra.mxu0 0
    %839 = vmatprep.subr.bf16.mxu0 0
    %840 = vmatpush1.bf16.msra.mxu0 0
    %841 = vmatprep.subr.bf16.mxu0 0
    %842 = vmatpush1.bf16.msra.mxu0 0
    %843 = vmatprep.subr.bf16.mxu0 0
    %844 = vmatpush1.bf16.msra.mxu0 0
    %845 = vmatprep.subr.bf16.mxu0 0
    %846 = vmatpush1.bf16.msra.mxu0 0
    %847 = vmatprep.subr.bf16.mxu0 0
    %848 = vmatpush1.bf16.msra.mxu0 0
    %849 = vmatprep.subr.bf16.mxu0 0
    %850 = vmatpush1.bf16.msra.mxu0 0
    %851 = vmatprep.subr.bf16.mxu0 0
    %852 = vmatpush1.bf16.msra.mxu0 0
    %853 = vmatprep.subr.bf16.mxu0 0
    %854 = vmatpush1.bf16.msra.mxu0 0
    %855 = vmatprep.subr.bf16.mxu0 0
    %856 = vmatpush1.bf16.msra.mxu0 0
    %857 = vmatprep.subr.bf16.mxu0 0
    %858 = vmatpush1.bf16.msra.mxu0 0
    %859 = vmatprep.mubr.bf16.mxu0 0
    %860 = vmatmul.mubr.bf16.gmra.mrb[0].mxu0 %v822
    %v861 = vpop.f32.mrb[0].mxu0
    %v862 = vadd.f32 %v183, %v861
    %v863 = vpop.f32.mrb[0].mxu0
    %v864 = vpop.f32.mrb[0].mxu0
    %v865 = vadd.f32 %v184, %v864
    %v866 = vpop.f32.mrb[0].mxu0
    %867 = vdwg.mxu0
    %v868 = vsel %vm503, %v862, -inf
    %869 = vmax.xlane.f32.xlu0 %v868
    %v870 = vpop.xlane.xlu0 %869
    %v871 = vsel %vm503, %v865, -inf
    %872 = vmax.xlane.f32.xlu0 %v871
    %v873 = vpop.xlane.xlu0 %872
    %v874 = vsub.f32 %v862, %v870
    %v875 = vsub.f32 %v865, %v873
    %v876 = vmul.f32 %v874, 1.442695
    %v877 = vpow.pop %v876
    %v878 = vmul.f32 %v875, 1.442695
    %v879 = vpow.pop %v878
    %v880 = vsel %vm503, %v877, 0.0
    %881 = vadd.xlane.f32.xlu0 %v880
    %v882 = vpop.xlane.xlu0 %881
    %v883 = vsel %vm503, %v879, 0.0
    %884 = vadd.xlane.f32.xlu0 %v883
    %v885 = vpop.xlane.xlu0 %884
    %v886 = vrcp.pop %v882
    %v887 = vrcp.pop %v885
    %v888 = vmul.f32 %v877, %v886
    %v889 = vmul.f32 %v879, %v887
    %v890 = vpack.c.bf16 %v889, %v888
    %v892 = vsel %vm503, %v890, 0
    %v895 = vsel %vm503, %v818, 0
    %897 = vmatprep.subr.bf16.mxu0 0
    %898 = vmatpush1.bf16.xpose.msra.mxu0 %v895
    %899 = vmatprep.subr.bf16.mxu0 0
    %900 = vmatpush1.bf16.xpose.msra.mxu0 0
    %901 = vmatprep.subr.bf16.mxu0 0
    %902 = vmatpush1.bf16.xpose.msra.mxu0 0
    %903 = vmatprep.subr.bf16.mxu0 0
    %904 = vmatpush1.bf16.xpose.msra.mxu0 0
    %905 = vmatprep.subr.bf16.mxu0 0
    %906 = vmatpush1.bf16.xpose.msra.mxu0 0
    %907 = vmatprep.subr.bf16.mxu0 0
    %908 = vmatpush1.bf16.xpose.msra.mxu0 0
    %909 = vmatprep.subr.bf16.mxu0 0
    %910 = vmatpush1.bf16.xpose.msra.mxu0 0
    %911 = vmatprep.subr.bf16.mxu0 0
    %912 = vmatpush1.bf16.xpose.msra.mxu0 0
    %913 = vmatprep.subr.bf16.mxu0 0
    %914 = vmatpush1.bf16.xpose.msra.mxu0 0
    %915 = vmatprep.subr.bf16.mxu0 0
    %916 = vmatpush1.bf16.xpose.msra.mxu0 0
    %917 = vmatprep.subr.bf16.mxu0 0
    %918 = vmatpush1.bf16.xpose.msra.mxu0 0
    %919 = vmatprep.subr.bf16.mxu0 0
    %920 = vmatpush1.bf16.xpose.msra.mxu0 0
    %921 = vmatprep.subr.bf16.mxu0 0
    %922 = vmatpush1.bf16.xpose.msra.mxu0 0
    %923 = vmatprep.subr.bf16.mxu0 0
    %924 = vmatpush1.bf16.xpose.msra.mxu0 0
    %925 = vmatprep.subr.bf16.mxu0 0
    %926 = vmatpush1.bf16.xpose.msra.mxu0 0
    %927 = vmatprep.subr.bf16.mxu0 0
    %928 = vmatpush1.bf16.xpose.msra.mxu0 0
    %929 = vmatprep.mubr.bf16.mxu0 0
    %930 = vmatmul.mubr.bf16.gmra.mrb[0].mxu0 %v892
    %v931 = vpop.f32.mrb[0].mxu0
    %v932 = vadd.f32 0.0, %v931
    %v933 = vpop.f32.mrb[0].mxu0
    %v934 = vpop.f32.mrb[0].mxu0
    %v935 = vadd.f32 0.0, %v934
    %v936 = vpop.f32.mrb[0].mxu0
    %937 = vdwg.mxu0
    %940 = vrot.lane.b32.xlu0 %v690, 8
    %v941 = vpop.permute.xlu0 %940
    %942 = vrot.lane.b32.xlu0 %v693, 8
    %v943 = vpop.permute.xlu0 %942
    %948 = vrot.lane.b32.xlu0 %v811, 16
    %v949 = vpop.permute.xlu0 %948
    %950 = vrot.lane.b32.xlu0 %v814, 16
    %v951 = vpop.permute.xlu0 %950
    %956 = vrot.lane.b32.xlu0 %v932, 24
    %v957 = vpop.permute.xlu0 %956
    %958 = vrot.lane.b32.xlu0 %v935, 24
    %v959 = vpop.permute.xlu0 %958
    %v962 = vsel %vm455, %v568, %v941
    %v963 = vsel %vm455, %v571, %v943
    %v964 = vsel %vm503, %v962, %v949
    %v965 = vsel %vm503, %v963, %v951
    %vm966 = vcmask 195584
    %v967 = vsel %vm966, %v964, %v957
    %v968 = vsel %vm966, %v965, %v959
    %v969 = vpack.c.bf16 %v968, %v967
    %v970 = vld [vmem:[%s10] sm:$0xf]
    %v971 = vld [vmem:[%s10 + $0x4] sm:$0xf]
    %v972 = vld [vmem:[%s10 + $0x8] sm:$0xf]
    %v973 = vld [vmem:[%s10 + $0xc] sm:$0xf]
    %v978 = vunpack.c.l.b16 %v970
    %v979 = vunpack.c.l.b16 %v971
    %v980 = vunpack.c.l.b16 %v972
    %v981 = vunpack.c.l.b16 %v973
    %v982 = vpack.c.b16 %v979, %v978
    %v983 = vpack.c.b16 %v981, %v980
    %v987 = vsel %vm187, %v969, 0
    %989 = vmatprep.subr.bf16.mxu0 0
    %990 = vmatpush1.bf16.msra.mxu0 %v982
    %991 = vmatprep.subr.bf16.mxu0 0
    %992 = vmatpush1.bf16.msra.mxu0 %v983
    %993 = vmatprep.subr.bf16.mxu0 0
    %994 = vmatpush1.bf16.msra.mxu0 0
    %995 = vmatprep.subr.bf16.mxu0 0
    %996 = vmatpush1.bf16.msra.mxu0 0
    %997 = vmatprep.subr.bf16.mxu0 0
    %998 = vmatpush1.bf16.msra.mxu0 0
    %999 = vmatprep.subr.bf16.mxu0 0
    %1000 = vmatpush1.bf16.msra.mxu0 0
    %1001 = vmatprep.subr.bf16.mxu0 0
    %1002 = vmatpush1.bf16.msra.mxu0 0
    %1003 = vmatprep.subr.bf16.mxu0 0
    %1004 = vmatpush1.bf16.msra.mxu0 0
    %1005 = vmatprep.subr.bf16.mxu0 0
    %1006 = vmatpush1.bf16.msra.mxu0 0
    %1007 = vmatprep.subr.bf16.mxu0 0
    %1008 = vmatpush1.bf16.msra.mxu0 0
    %1009 = vmatprep.subr.bf16.mxu0 0
    %1010 = vmatpush1.bf16.msra.mxu0 0
    %1011 = vmatprep.subr.bf16.mxu0 0
    %1012 = vmatpush1.bf16.msra.mxu0 0
    %1013 = vmatprep.subr.bf16.mxu0 0
    %1014 = vmatpush1.bf16.msra.mxu0 0
    %1015 = vmatprep.subr.bf16.mxu0 0
    %1016 = vmatpush1.bf16.msra.mxu0 0
    %1017 = vmatprep.subr.bf16.mxu0 0
    %1018 = vmatpush1.bf16.msra.mxu0 0
    %1019 = vmatprep.subr.bf16.mxu0 0
    %1020 = vmatpush1.bf16.msra.mxu0 0
    %1021 = vmatprep.mubr.bf16.mxu0 0
    %1022 = vmatmul.mubr.bf16.gmra.mrb[0].mxu0 %v987
    %v1023 = vpop.f32.mrb[0].mxu0
    %v1024 = vadd.f32 0.0, %v1023
    %v1025 = vpop.f32.mrb[0].mxu0
    %v1026 = vpop.f32.mrb[0].mxu0
    %v1027 = vadd.f32 0.0, %v1026
    %v1028 = vpop.f32.mrb[0].mxu0
    %1029 = vdwg.mxu0
    %v1030 = vadd.f32 %v175, %v1024
    %v1031 = vadd.f32 %v180, %v1027
    %v1032 = vld [vmem:[%s11] sm:$0x1]
    %v1034 = vlaneseq
    %v1035 = vshrl.u32 %v1034, 7
    %v1036 = vsub.s32 0, %v1035
    %v1037 = vrot.slane %v1032, %v1036
    %v1039 = vadd.f32 %v1030, %v1037
    %v1040 = vadd.f32 %v1031, %v1037
    %v1041 = vld [vmem:[%s12] sm:$0x1]
    %v1042 = vld [vmem:[%s13] sm:$0x1]
    %v1043 = vsel %vm187, %v1039, 0.0
    %1044 = vadd.xlane.f32.xlu0 %v1043
    %v1045 = vpop.xlane.xlu0 %1044
    %v1046 = vsel %vm187, %v1040, 0.0
    %1047 = vadd.xlane.f32.xlu0 %v1046
    %v1048 = vpop.xlane.xlu0 %1047
    %v1049 = vmul.f32 %v1045, %v194
    %v1050 = vmul.f32 %v1048, %v194
    %v1051 = vsub.f32 %v1039, %v1049
    %v1052 = vsub.f32 %v1040, %v1050
    %v1053 = vmul.f32 %v1051, %v1051
    %v1054 = vmul.f32 %v1052, %v1052
    %v1055 = vsel %vm187, %v1053, 0.0
    %1056 = vadd.xlane.f32.xlu0 %v1055
    %v1057 = vpop.xlane.xlu0 %1056
    %v1058 = vsel %vm187, %v1054, 0.0
    %1059 = vadd.xlane.f32.xlu0 %v1058
    %v1060 = vpop.xlane.xlu0 %1059
    %v1061 = vmul.f32 %v1057, %v194
    %v1062 = vmul.f32 %v1060, %v194
    %v1063 = vadd.f32 %v1061, 1e-05
    %v1064 = vadd.f32 %v1062, 1e-05
    %v1065 = vrsqrt.pop %v1063
    %v1066 = vrsqrt.pop %v1064
    %v1067 = vmul.f32 %v1051, %v1065
    %v1068 = vmul.f32 %v1052, %v1066
    %v1070 = vlaneseq
    %v1071 = vshrl.u32 %v1070, 7
    %v1072 = vsub.s32 0, %v1071
    %v1073 = vrot.slane %v1041, %v1072
    %v1075 = vmul.f32 %v1067, %v1073
    %v1076 = vmul.f32 %v1068, %v1073
    %v1078 = vlaneseq
    %v1079 = vshrl.u32 %v1078, 7
    %v1080 = vsub.s32 0, %v1079
    %v1081 = vrot.slane %v1042, %v1080
    %v1083 = vadd.f32 %v1075, %v1081
    %v1084 = vadd.f32 %v1076, %v1081
    %v1085 = vpack.c.bf16 %v1084, %v1083
    %v1086 = vld [vmem:[%s14] sm:$0xf]
    %v1087 = vld [vmem:[%s14 + $0x4] sm:$0xf]
    %v1088 = vld [vmem:[%s14 + $0x8] sm:$0xf]
    %v1089 = vld [vmem:[%s14 + $0xc] sm:$0xf]
    %v1090 = vld [vmem:[%s15] sm:$0x1]
    %v1092 = vlaneseq
    %v1093 = vshrl.u32 %v1092, 7
    %v1094 = vsub.s32 0, %v1093
    %v1095 = vrot.slane %v1090, %v1094
    %v1101 = vunpack.c.l.b16 %v1086
    %v1102 = vunpack.c.l.b16 %v1087
    %v1103 = vunpack.c.l.b16 %v1088
    %v1104 = vunpack.c.l.b16 %v1089
    %v1105 = vpack.c.b16 %v1102, %v1101
    %v1106 = vpack.c.b16 %v1104, %v1103
    %v1110 = vsel %vm187, %v1085, 0
    %1112 = vmatprep.subr.bf16.mxu0 0
    %1113 = vmatpush1.bf16.msra.mxu0 %v1105
    %1114 = vmatprep.subr.bf16.mxu0 0
    %1115 = vmatpush1.bf16.msra.mxu0 %v1106
    %1116 = vmatprep.subr.bf16.mxu0 0
    %1117 = vmatpush1.bf16.msra.mxu0 0
    %1118 = vmatprep.subr.bf16.mxu0 0
    %1119 = vmatpush1.bf16.msra.mxu0 0
    %1120 = vmatprep.subr.bf16.mxu0 0
    %1121 = vmatpush1.bf16.msra.mxu0 0
    %1122 = vmatprep.subr.bf16.mxu0 0
    %1123 = vmatpush1.bf16.msra.mxu0 0
    %1124 = vmatprep.subr.bf16.mxu0 0
    %1125 = vmatpush1.bf16.msra.mxu0 0
    %1126 = vmatprep.subr.bf16.mxu0 0
    %1127 = vmatpush1.bf16.msra.mxu0 0
    %1128 = vmatprep.subr.bf16.mxu0 0
    %1129 = vmatpush1.bf16.msra.mxu0 0
    %1130 = vmatprep.subr.bf16.mxu0 0
    %1131 = vmatpush1.bf16.msra.mxu0 0
    %1132 = vmatprep.subr.bf16.mxu0 0
    %1133 = vmatpush1.bf16.msra.mxu0 0
    %1134 = vmatprep.subr.bf16.mxu0 0
    %1135 = vmatpush1.bf16.msra.mxu0 0
    %1136 = vmatprep.subr.bf16.mxu0 0
    %1137 = vmatpush1.bf16.msra.mxu0 0
    %1138 = vmatprep.subr.bf16.mxu0 0
    %1139 = vmatpush1.bf16.msra.mxu0 0
    %1140 = vmatprep.subr.bf16.mxu0 0
    %1141 = vmatpush1.bf16.msra.mxu0 0
    %1142 = vmatprep.subr.bf16.mxu0 0
    %1143 = vmatpush1.bf16.msra.mxu0 0
    %1144 = vmatprep.mubr.bf16.mxu0 0
    %1145 = vmatmul.mubr.bf16.gmra.mrb[0].mxu0 %v1110
    %v1146 = vpop.f32.mrb[0].mxu0
    %v1147 = vadd.f32 %v1095, %v1146
    %v1148 = vpop.f32.mrb[0].mxu0
    %v1149 = vpop.f32.mrb[0].mxu0
    %v1150 = vadd.f32 %v1095, %v1149
    %v1151 = vpop.f32.mrb[0].mxu0
    %1152 = vdwg.mxu0
    %v1153 = vmul.f32 %v1147, %v1147
    %v1154 = vmul.f32 %v1150, %v1150
    %v1155 = vmul.f32 %v1147, %v1153
    %v1156 = vmul.f32 %v1150, %v1154
    %v1157 = vmul.f32 %v1155, 0.044715
    %v1158 = vmul.f32 %v1156, 0.044715
    %v1159 = vadd.f32 %v1147, %v1157
    %v1160 = vadd.f32 %v1150, %v1158
    %v1161 = vmul.f32 %v1159, 0.7978846
    %v1162 = vmul.f32 %v1160, 0.7978846
    %v1163 = vtanh.pop %v1161
    %v1164 = vtanh.pop %v1162
    %v1165 = vadd.f32 %v1163, 1.0
    %v1166 = vadd.f32 %v1164, 1.0
    %v1167 = vmul.f32 %v1165, 0.5
    %v1168 = vmul.f32 %v1166, 0.5
    %v1169 = vmul.f32 %v1147, %v1167
    %v1170 = vmul.f32 %v1150, %v1168
    %v1171 = vpack.c.bf16 %v1170, %v1169
    %v1172 = vld [vmem:[%s16] sm:$0xf]
    %v1173 = vld [vmem:[%s16 + $0x4] sm:$0xf]
    %v1174 = vld [vmem:[%s16 + $0x8] sm:$0xf]
    %v1175 = vld [vmem:[%s16 + $0xc] sm:$0xf]
    %v1176 = vld [vmem:[%s16 + $0x10] sm:$0xf]
    %v1177 = vld [vmem:[%s16 + $0x14] sm:$0xf]
    %v1178 = vld [vmem:[%s16 + $0x18] sm:$0xf]
    %v1179 = vld [vmem:[%s16 + $0x1c] sm:$0xf]
    %v1180 = vld [vmem:[%s16 + $0x20] sm:$0xf]
    %v1181 = vld [vmem:[%s16 + $0x24] sm:$0xf]
    %v1182 = vld [vmem:[%s16 + $0x28] sm:$0xf]
    %v1183 = vld [vmem:[%s16 + $0x2c] sm:$0xf]
    %v1184 = vld [vmem:[%s16 + $0x30] sm:$0xf]
    %v1185 = vld [vmem:[%s16 + $0x34] sm:$0xf]
    %v1186 = vld [vmem:[%s16 + $0x38] sm:$0xf]
    %v1187 = vld [vmem:[%s16 + $0x3c] sm:$0xf]
    %v1188 = vld [vmem:[%s17] sm:$0x1]
    %v1190 = vlaneseq
    %v1191 = vshrl.u32 %v1190, 7
    %v1192 = vsub.s32 0, %v1191
    %v1193 = vrot.slane %v1188, %v1192
    %v1211 = vunpack.c.l.b16 %v1172
    %v1212 = vunpack.c.l.b16 %v1173
    %v1213 = vunpack.c.l.b16 %v1174
    %v1214 = vunpack.c.l.b16 %v1175
    %v1215 = vunpack.c.l.b16 %v1176
    %v1216 = vunpack.c.l.b16 %v1177
    %v1217 = vunpack.c.l.b16 %v1178
    %v1218 = vunpack.c.l.b16 %v1179
    %v1219 = vunpack.c.l.b16 %v1180
    %v1220 = vunpack.c.l.b16 %v1181
    %v1221 = vunpack.c.l.b16 %v1182
    %v1222 = vunpack.c.l.b16 %v1183
    %v1223 = vunpack.c.l.b16 %v1184
    %v1224 = vunpack.c.l.b16 %v1185
    %v1225 = vunpack.c.l.b16 %v1186
    %v1226 = vunpack.c.l.b16 %v1187
    %v1227 = vpack.c.b16 %v1212, %v1211
    %v1228 = vpack.c.b16 %v1214, %v1213
    %v1229 = vpack.c.b16 %v1216, %v1215
    %v1230 = vpack.c.b16 %v1218, %v1217
    %v1231 = vpack.c.b16 %v1220, %v1219
    %v1232 = vpack.c.b16 %v1222, %v1221
    %v1233 = vpack.c.b16 %v1224, %v1223
    %v1234 = vpack.c.b16 %v1226, %v1225
    %1243 = vmatprep.subr.bf16.mxu0 0
    %1244 = vmatpush1.bf16.msra.mxu0 %v1227
    %1245 = vmatprep.subr.bf16.mxu0 0
    %1246 = vmatpush1.bf16.msra.mxu0 %v1228
    %1247 = vmatprep.subr.bf16.mxu0 0
    %1248 = vmatpush1.bf16.msra.mxu0 %v1229
    %1249 = vmatprep.subr.bf16.mxu0 0
    %1250 = vmatpush1.bf16.msra.mxu0 %v1230
    %1251 = vmatprep.subr.bf16.mxu0 0
    %1252 = vmatpush1.bf16.msra.mxu0 %v1231
    %1253 = vmatprep.subr.bf16.mxu0 0
    %1254 = vmatpush1.bf16.msra.mxu0 %v1232
    %1255 = vmatprep.subr.bf16.mxu0 0
    %1256 = vmatpush1.bf16.msra.mxu0 %v1233
    %1257 = vmatprep.subr.bf16.mxu0 0
    %1258 = vmatpush1.bf16.msra.mxu0 %v1234
    %1259 = vmatprep.subr.bf16.mxu0 0
    %1260 = vmatpush1.bf16.msra.mxu0 0
    %1261 = vmatprep.subr.bf16.mxu0 0
    %1262 = vmatpush1.bf16.msra.mxu0 0
    %1263 = vmatprep.subr.bf16.mxu0 0
    %1264 = vmatpush1.bf16.msra.mxu0 0
    %1265 = vmatprep.subr.bf16.mxu0 0
    %1266 = vmatpush1.bf16.msra.mxu0 0
    %1267 = vmatprep.subr.bf16.mxu0 0
    %1268 = vmatpush1.bf16.msra.mxu0 0
    %1269 = vmatprep.subr.bf16.mxu0 0
    %1270 = vmatpush1.bf16.msra.mxu0 0
    %1271 = vmatprep.subr.bf16.mxu0 0
    %1272 = vmatpush1.bf16.msra.mxu0 0
    %1273 = vmatprep.subr.bf16.mxu0 0
    %1274 = vmatpush1.bf16.msra.mxu0 0
    %1275 = vmatprep.mubr.bf16.mxu0 0
    %1276 = vmatmul.mubr.bf16.gmra.mrb[0].mxu0 %v1171
    %v1277 = vpop.f32.mrb[0].mxu0
    %v1278 = vadd.f32 %v1193, %v1277
    %v1279 = vpop.f32.mrb[0].mxu0
    %v1280 = vpop.f32.mrb[0].mxu0
    %v1281 = vadd.f32 %v1193, %v1280
    %v1282 = vpop.f32.mrb[0].mxu0
    %1283 = vdwg.mxu0
    %v1284 = vadd.f32 %v1039, %v1278
    %v1285 = vadd.f32 %v1040, %v1281
    %s1286 = scalar_lea.vmem %s4, 1
    %v1287 = vld [vmem:[%s1286] sm:$0x1]
    %s1288 = scalar_lea.vmem %s5, 1
    %v1289 = vld [vmem:[%s1288] sm:$0x1]
    %v1290 = vsel %vm187, %v1284, 0.0
    %1291 = vadd.xlane.f32.xlu0 %v1290
    %v1292 = vpop.xlane.xlu0 %1291
    %v1293 = vsel %vm187, %v1285, 0.0
    %1294 = vadd.xlane.f32.xlu0 %v1293
    %v1295 = vpop.xlane.xlu0 %1294
    %v1296 = vmul.f32 %v1292, %v194
    %v1297 = vmul.f32 %v1295, %v194
    %v1298 = vsub.f32 %v1284, %v1296
    %v1299 = vsub.f32 %v1285, %v1297
    %v1300 = vmul.f32 %v1298, %v1298
    %v1301 = vmul.f32 %v1299, %v1299
    %v1302 = vsel %vm187, %v1300, 0.0
    %1303 = vadd.xlane.f32.xlu0 %v1302
    %v1304 = vpop.xlane.xlu0 %1303
    %v1305 = vsel %vm187, %v1301, 0.0
    %1306 = vadd.xlane.f32.xlu0 %v1305
    %v1307 = vpop.xlane.xlu0 %1306
    %v1308 = vmul.f32 %v1304, %v194
    %v1309 = vmul.f32 %v1307, %v194
    %v1310 = vadd.f32 %v1308, 1e-05
    %v1311 = vadd.f32 %v1309, 1e-05
    %v1312 = vrsqrt.pop %v1310
    %v1313 = vrsqrt.pop %v1311
    %v1314 = vmul.f32 %v1298, %v1312
    %v1315 = vmul.f32 %v1299, %v1313
    %v1317 = vlaneseq
    %v1318 = vshrl.u32 %v1317, 7
    %v1319 = vsub.s32 0, %v1318
    %v1320 = vrot.slane %v1287, %v1319
    %v1322 = vmul.f32 %v1314, %v1320
    %v1323 = vmul.f32 %v1315, %v1320
    %v1325 = vlaneseq
    %v1326 = vshrl.u32 %v1325, 7
    %v1327 = vsub.s32 0, %v1326
    %v1328 = vrot.slane %v1289, %v1327
    %v1330 = vadd.f32 %v1322, %v1328
    %v1331 = vadd.f32 %v1323, %v1328
    %v1332 = vpack.c.bf16 %v1331, %v1330
    %s1333 = scalar_lea.vmem %s6, 16
    %v1334 = vld [vmem:[%s1333] sm:$0xf]
    %v1335 = vld [vmem:[%s1333 + $0x4] sm:$0xf]
    %v1336 = vld [vmem:[%s1333 + $0x8] sm:$0xf]
    %v1337 = vld [vmem:[%s1333 + $0xc] sm:$0xf]
    %s1338 = scalar_lea.vmem %s7, 1
    %v1339 = vld [vmem:[%s1338] sm:$0x1]
    %v1341 = vlaneseq
    %v1342 = vshrl.u32 %v1341, 7
    %v1343 = vsub.s32 0, %v1342
    %v1344 = vrot.slane %v1339, %v1343
    %v1350 = vunpack.c.l.b16 %v1334
    %v1351 = vunpack.c.l.b16 %v1335
    %v1352 = vunpack.c.l.b16 %v1336
    %v1353 = vunpack.c.l.b16 %v1337
    %v1354 = vpack.c.b16 %v1351, %v1350
    %v1355 = vpack.c.b16 %v1353, %v1352
    %v1359 = vsel %vm187, %v1332, 0
    %1361 = vmatprep.subr.bf16.mxu0 0
    %1362 = vmatpush1.bf16.msra.mxu0 %v1354
    %1363 = vmatprep.subr.bf16.mxu0 0
    %1364 = vmatpush1.bf16.msra.mxu0 %v1355
    %1365 = vmatprep.subr.bf16.mxu0 0
    %1366 = vmatpush1.bf16.msra.mxu0 0
    %1367 = vmatprep.subr.bf16.mxu0 0
    %1368 = vmatpush1.bf16.msra.mxu0 0
    %1369 = vmatprep.subr.bf16.mxu0 0
    %1370 = vmatpush1.bf16.msra.mxu0 0
    %1371 = vmatprep.subr.bf16.mxu0 0
    %1372 = vmatpush1.bf16.msra.mxu0 0
    %1373 = vmatprep.subr.bf16.mxu0 0
    %1374 = vmatpush1.bf16.msra.mxu0 0
    %1375 = vmatprep.subr.bf16.mxu0 0
    %1376 = vmatpush1.bf16.msra.mxu0 0
    %1377 = vmatprep.subr.bf16.mxu0 0
    %1378 = vmatpush1.bf16.msra.mxu0 0
    %1379 = vmatprep.subr.bf16.mxu0 0
    %1380 = vmatpush1.bf16.msra.mxu0 0
    %1381 = vmatprep.subr.bf16.mxu0 0
    %1382 = vmatpush1.bf16.msra.mxu0 0
    %1383 = vmatprep.subr.bf16.mxu0 0
    %1384 = vmatpush1.bf16.msra.mxu0 0
    %1385 = vmatprep.subr.bf16.mxu0 0
    %1386 = vmatpush1.bf16.msra.mxu0 0
    %1387 = vmatprep.subr.bf16.mxu0 0
    %1388 = vmatpush1.bf16.msra.mxu0 0
    %1389 = vmatprep.subr.bf16.mxu0 0
    %1390 = vmatpush1.bf16.msra.mxu0 0
    %1391 = vmatprep.subr.bf16.mxu0 0
    %1392 = vmatpush1.bf16.msra.mxu0 0
    %1393 = vmatprep.mubr.bf16.mxu0 0
    %1394 = vmatmul.mubr.bf16.gmra.mrb[0].mxu0 %v1359
    %v1395 = vpop.f32.mrb[0].mxu0
    %v1396 = vadd.f32 %v1344, %v1395
    %v1397 = vpop.f32.mrb[0].mxu0
    %v1398 = vpop.f32.mrb[0].mxu0
    %v1399 = vadd.f32 %v1344, %v1398
    %v1400 = vpop.f32.mrb[0].mxu0
    %1401 = vdwg.mxu0
    %s1402 = scalar_lea.vmem %s8, 32
    %v1403 = vld [vmem:[%s1402] sm:$0xf]
    %v1404 = vld [vmem:[%s1402 + $0x4] sm:$0xf]
    %v1405 = vld [vmem:[%s1402 + $0x8] sm:$0xf]
    %v1406 = vld [vmem:[%s1402 + $0xc] sm:$0xf]
    %v1407 = vld [vmem:[%s1402 + $0x10] sm:$0xf]
    %v1408 = vld [vmem:[%s1402 + $0x14] sm:$0xf]
    %v1409 = vld [vmem:[%s1402 + $0x18] sm:$0xf]
    %v1410 = vld [vmem:[%s1402 + $0x1c] sm:$0xf]
    %s1411 = scalar_lea.vmem %s9, 64
    %v1412 = vld [vmem:[%s1411] sm:$0xff]
    %v1413 = vld [vmem:[%s1411 + $0x8] sm:$0xff]
    %v1414 = vld [vmem:[%s1411 + $0x10] sm:$0xff]
    %v1415 = vld [vmem:[%s1411 + $0x18] sm:$0xff]
    %v1416 = vld [vmem:[%s1411 + $0x20] sm:$0xff]
    %v1417 = vld [vmem:[%s1411 + $0x28] sm:$0xff]
    %v1418 = vld [vmem:[%s1411 + $0x30] sm:$0xff]
    %v1419 = vld [vmem:[%s1411 + $0x38] sm:$0xff]
    %1421 = vset.pattern.permute.xlu0 0
    %1422 = vperm.xlu0 %1421, %v1412
    %v1423 = vpop.permute.xlu0 %1422
    %1426 = vset.pattern.permute.xlu0 0
    %1427 = vperm.xlu0 %1426, %v1413
    %v1428 = vpop.permute.xlu0 %1427
    %1431 = vset.pattern.permute.xlu0 0
    %1432 = vperm.xlu0 %1431, %v1414
    %v1433 = vpop.permute.xlu0 %1432
    %1436 = vset.pattern.permute.xlu0 0
    %1437 = vperm.xlu0 %1436, %v1415
    %v1438 = vpop.permute.xlu0 %1437
    %1441 = vset.pattern.permute.xlu0 0
    %1442 = vperm.xlu0 %1441, %v1416
    %v1443 = vpop.permute.xlu0 %1442
    %1446 = vset.pattern.permute.xlu0 0
    %1447 = vperm.xlu0 %1446, %v1417
    %v1448 = vpop.permute.xlu0 %1447
    %1451 = vset.pattern.permute.xlu0 0
    %1452 = vperm.xlu0 %1451, %v1418
    %v1453 = vpop.permute.xlu0 %1452
    %1456 = vset.pattern.permute.xlu0 0
    %1457 = vperm.xlu0 %1456, %v1419
    %v1458 = vpop.permute.xlu0 %1457
    %v1468 = vunpack.c.l.b16 %v1403
    %v1469 = vunpack.c.l.b16 %v1404
    %v1470 = vunpack.c.l.b16 %v1405
    %v1471 = vunpack.c.l.b16 %v1406
    %v1472 = vunpack.c.l.b16 %v1407
    %v1473 = vunpack.c.l.b16 %v1408
    %v1474 = vunpack.c.l.b16 %v1409
    %v1475 = vunpack.c.l.b16 %v1410
    %v1476 = vpack.c.b16 %v1469, %v1468
    %v1477 = vpack.c.b16 %v1471, %v1470
    %v1478 = vpack.c.b16 %v1473, %v1472
    %v1479 = vpack.c.b16 %v1475, %v1474
    %v1481 = vsel %vm187, %v1476, 0
    %v1484 = vsel %vm187, %v1477, 0
    %v1487 = vsel %vm187, %v1478, 0
    %v1490 = vsel %vm187, %v1479, 0
    %1492 = vmatprep.subr.bf16.mxu0 0
    %1493 = vmatpush1.bf16.xpose.msra.mxu0 %v1359
    %1494 = vmatprep.subr.bf16.mxu0 0
    %1495 = vmatpush1.bf16.xpose.msra.mxu0 0
    %1496 = vmatprep.subr.bf16.mxu0 0
    %1497 = vmatpush1.bf16.xpose.msra.mxu0 0
    %1498 = vmatprep.subr.bf16.mxu0 0
    %1499 = vmatpush1.bf16.xpose.msra.mxu0 0
    %1500 = vmatprep.subr.bf16.mxu0 0
    %1501 = vmatpush1.bf16.xpose.msra.mxu0 0
    %1502 = vmatprep.subr.bf16.mxu0 0
    %1503 = vmatpush1.bf16.xpose.msra.mxu0 0
    %1504 = vmatprep.subr.bf16.mxu0 0
    %1505 = vmatpush1.bf16.xpose.msra.mxu0 0
    %1506 = vmatprep.subr.bf16.mxu0 0
    %1507 = vmatpush1.bf16.xpose.msra.mxu0 0
    %1508 = vmatprep.subr.bf16.mxu0 0
    %1509 = vmatpush1.bf16.xpose.msra.mxu0 0
    %1510 = vmatprep.subr.bf16.mxu0 0
    %1511 = vmatpush1.bf16.xpose.msra.mxu0 0
    %1512 = vmatprep.subr.bf16.mxu0 0
    %1513 = vmatpush1.bf16.xpose.msra.mxu0 0
    %1514 = vmatprep.subr.bf16.mxu0 0
    %1515 = vmatpush1.bf16.xpose.msra.mxu0 0
    %1516 = vmatprep.subr.bf16.mxu0 0
    %1517 = vmatpush1.bf16.xpose.msra.mxu0 0
    %1518 = vmatprep.subr.bf16.mxu0 0
    %1519 = vmatpush1.bf16.xpose.msra.mxu0 0
    %1520 = vmatprep.subr.bf16.mxu0 0
    %1521 = vmatpush1.bf16.xpose.msra.mxu0 0
    %1522 = vmatprep.subr.bf16.mxu0 0
    %1523 = vmatpush1.bf16.xpose.msra.mxu0 0
    %1524 = vmatprep.mubr.bf16.mxu0 0
    %1525 = vmatmul.mubr.bf16.gmra.mrb[0].mxu0 %v1481
    %v1526 = vpop.f32.mrb[0].mxu0
    %v1527 = vadd.f32 %v1423, %v1526
    %v1528 = vpop.f32.mrb[0].mxu0
    %v1529 = vpop.f32.mrb[0].mxu0
    %v1530 = vadd.f32 %v1428, %v1529
    %v1531 = vpop.f32.mrb[0].mxu0
    %1532 = vmatprep.mubr.bf16.mxu0 0
    %1533 = vmatmul.mubr.bf16.gmra.mrb[0].mxu0 %v1484
    %v1534 = vpop.f32.mrb[0].mxu0
    %v1535 = vadd.f32 %v1433, %v1534
    %v1536 = vpop.f32.mrb[0].mxu0
    %v1537 = vpop.f32.mrb[0].mxu0
    %v1538 = vadd.f32 %v1438, %v1537
    %v1539 = vpop.f32.mrb[0].mxu0
    %1540 = vmatprep.mubr.bf16.mxu0 0
    %1541 = vmatmul.mubr.bf16.gmra.mrb[0].mxu0 %v1487
    %v1542 = vpop.f32.mrb[0].mxu0
    %v1543 = vadd.f32 %v1443, %v1542
    %v1544 = vpop.f32.mrb[0].mxu0
    %v1545 = vpop.f32.mrb[0].mxu0
    %v1546 = vadd.f32 %v1448, %v1545
    %v1547 = vpop.f32.mrb[0].mxu0
    %1548 = vmatprep.mubr.bf16.mxu0 0
    %1549 = vmatmul.mubr.bf16.gmra.mrb[0].mxu0 %v1490
    %v1550 = vpop.f32.mrb[0].mxu0
    %v1551 = vadd.f32 %v1453, %v1550
    %v1552 = vpop.f32.mrb[0].mxu0
    %v1553 = vpop.f32.mrb[0].mxu0
    %v1554 = vadd.f32 %v1458, %v1553
    %v1555 = vpop.f32.mrb[0].mxu0
    %1556 = vdwg.mxu0
    %v1557 = vpack.c.bf16 %v1399, %v1396
    %v1558 = vpack.c.bf16 %v1527, %v1527
    %v1559 = vpack.c.bf16 %v1543, %v1543
    %v1561 = vsel %vm455, %v1557, 0
    %v1564 = vsel %vm104, %v1558, 0
    %1566 = vmatprep.subr.bf16.mxu0 0
    %1567 = vmatpush1.bf16.msra.mxu0 %v1564
    %1568 = vmatprep.subr.bf16.mxu0 0
    %1569 = vmatpush1.bf16.msra.mxu0 0
    %1570 = vmatprep.subr.bf16.mxu0 0
    %1571 = vmatpush1.bf16.msra.mxu0 0
    %1572 = vmatprep.subr.bf16.mxu0 0
    %1573 = vmatpush1.bf16.msra.mxu0 0
    %1574 = vmatprep.subr.bf16.mxu0 0
    %1575 = vmatpush1.bf16.msra.mxu0 0
    %1576 = vmatprep.subr.bf16.mxu0 0
    %1577 = vmatpush1.bf16.msra.mxu0 0
    %1578 = vmatprep.subr.bf16.mxu0 0
    %1579 = vmatpush1.bf16.msra.mxu0 0
    %1580 = vmatprep.subr.bf16.mxu0 0
    %1581 = vmatpush1.bf16.msra.mxu0 0
    %1582 = vmatprep.subr.bf16.mxu0 0
    %1583 = vmatpush1.bf16.msra.mxu0 0
    %1584 = vmatprep.subr.bf16.mxu0 0
    %1585 = vmatpush1.bf16.msra.mxu0 0
    %1586 = vmatprep.subr.bf16.mxu0 0
    %1587 = vmatpush1.bf16.msra.mxu0 0
    %1588 = vmatprep.subr.bf16.mxu0 0
    %1589 = vmatpush1.bf16.msra.mxu0 0
    %1590 = vmatprep.subr.bf16.mxu0 0
    %1591 = vmatpush1.bf16.msra.mxu0 0
    %1592 = vmatprep.subr.bf16.mxu0 0
    %1593 = vmatpush1.bf16.msra.mxu0 0
    %1594 = vmatprep.subr.bf16.mxu0 0
    %1595 = vmatpush1.bf16.msra.mxu0 0
    %1596 = vmatprep.subr.bf16.mxu0 0
    %1597 = vmatpush1.bf16.msra.mxu0 0
    %1598 = vmatprep.mubr.bf16.mxu0 0
    %1599 = vmatmul.mubr.bf16.gmra.mrb[0].mxu0 %v1561
    %v1600 = vpop.f32.mrb[0].mxu0
    %v1601 = vadd.f32 %v183, %v1600
    %v1602 = vpop.f32.mrb[0].mxu0
    %v1603 = vpop.f32.mrb[0].mxu0
    %v1604 = vadd.f32 %v184, %v1603
    %v1605 = vpop.f32.mrb[0].mxu0
    %1606 = vdwg.mxu0
    %v1607 = vsel %vm503, %v1601, -inf
    %1608 = vmax.xlane.f32.xlu0 %v1607
    %v1609 = vpop.xlane.xlu0 %1608
    %v1610 = vsel %vm503, %v1604, -inf
    %1611 = vmax.xlane.f32.xlu0 %v1610
    %v1612 = vpop.xlane.xlu0 %1611
    %v1613 = vsub.f32 %v1601, %v1609
    %v1614 = vsub.f32 %v1604, %v1612
    %v1615 = vmul.f32 %v1613, 1.442695
    %v1616 = vpow.pop %v1615
    %v1617 = vmul.f32 %v1614, 1.442695
    %v1618 = vpow.pop %v1617
    %v1619 = vsel %vm503, %v1616, 0.0
    %1620 = vadd.xlane.f32.xlu0 %v1619
    %v1621 = vpop.xlane.xlu0 %1620
    %v1622 = vsel %vm503, %v1618, 0.0
    %1623 = vadd.xlane.f32.xlu0 %v1622
    %v1624 = vpop.xlane.xlu0 %1623
    %v1625 = vrcp.pop %v1621
    %v1626 = vrcp.pop %v1624
    %v1627 = vmul.f32 %v1616, %v1625
    %v1628 = vmul.f32 %v1618, %v1626
    %v1629 = vpack.c.bf16 %v1628, %v1627
    %v1631 = vsel %vm503, %v1629, 0
    %v1634 = vsel %vm503, %v1559, 0
    %1636 = vmatprep.subr.bf16.mxu0 0
    %1637 = vmatpush1.bf16.xpose.msra.mxu0 %v1634
    %1638 = vmatprep.subr.bf16.mxu0 0
    %1639 = vmatpush1.bf16.xpose.msra.mxu0 0
    %1640 = vmatprep.subr.bf16.mxu0 0
    %1641 = vmatpush1.bf16.xpose.msra.mxu0 0
    %1642 = vmatprep.subr.bf16.mxu0 0
    %1643 = vmatpush1.bf16.xpose.msra.mxu0 0
    %1644 = vmatprep.subr.bf16.mxu0 0
    %1645 = vmatpush1.bf16.xpose.msra.mxu0 0
    %1646 = vmatprep.subr.bf16.mxu0 0
    %1647 = vmatpush1.bf16.xpose.msra.mxu0 0
    %1648 = vmatprep.subr.bf16.mxu0 0
    %1649 = vmatpush1.bf16.xpose.msra.mxu0 0
    %1650 = vmatprep.subr.bf16.mxu0 0
    %1651 = vmatpush1.bf16.xpose.msra.mxu0 0
    %1652 = vmatprep.subr.bf16.mxu0 0
    %1653 = vmatpush1.bf16.xpose.msra.mxu0 0
    %1654 = vmatprep.subr.bf16.mxu0 0
    %1655 = vmatpush1.bf16.xpose.msra.mxu0 0
    %1656 = vmatprep.subr.bf16.mxu0 0
    %1657 = vmatpush1.bf16.xpose.msra.mxu0 0
    %1658 = vmatprep.subr.bf16.mxu0 0
    %1659 = vmatpush1.bf16.xpose.msra.mxu0 0
    %1660 = vmatprep.subr.bf16.mxu0 0
    %1661 = vmatpush1.bf16.xpose.msra.mxu0 0
    %1662 = vmatprep.subr.bf16.mxu0 0
    %1663 = vmatpush1.bf16.xpose.msra.mxu0 0
    %1664 = vmatprep.subr.bf16.mxu0 0
    %1665 = vmatpush1.bf16.xpose.msra.mxu0 0
    %1666 = vmatprep.subr.bf16.mxu0 0
    %1667 = vmatpush1.bf16.xpose.msra.mxu0 0
    %1668 = vmatprep.mubr.bf16.mxu0 0
    %1669 = vmatmul.mubr.bf16.gmra.mrb[0].mxu0 %v1631
    %v1670 = vpop.f32.mrb[0].mxu0
    %v1671 = vadd.f32 0.0, %v1670
    %v1672 = vpop.f32.mrb[0].mxu0
    %v1673 = vpop.f32.mrb[0].mxu0
    %v1674 = vadd.f32 0.0, %v1673
    %v1675 = vpop.f32.mrb[0].mxu0
    %1676 = vdwg.mxu0
    %v1677 = vpack.c.bf16 %v1530, %v1530
    %v1678 = vpack.c.bf16 %v1546, %v1546
    %1680 = vrot.lane.b32.xlu0 %v1557, 120
    %v1681 = vpop.permute.xlu0 %1680
    %v1683 = vsel %vm455, %v1681, 0
    %v1686 = vsel %vm104, %v1677, 0
    %1688 = vmatprep.subr.bf16.mxu0 0
    %1689 = vmatpush1.bf16.msra.mxu0 %v1686
    %1690 = vmatprep.subr.bf16.mxu0 0
    %1691 = vmatpush1.bf16.msra.mxu0 0
    %1692 = vmatprep.subr.bf16.mxu0 0
    %1693 = vmatpush1.bf16.msra.mxu0 0
    %1694 = vmatprep.subr.bf16.mxu0 0
    %1695 = vmatpush1.bf16.msra.mxu0 0
    %1696 = vmatprep.subr.bf16.mxu0 0
    %1697 = vmatpush1.bf16.msra.mxu0 0
    %1698 = vmatprep.subr.bf16.mxu0 0
    %1699 = vmatpush1.bf16.msra.mxu0 0
    %1700 = vmatprep.subr.bf16.mxu0 0
    %1701 = vmatpush1.bf16.msra.mxu0 0
    %1702 = vmatprep.subr.bf16.mxu0 0
    %1703 = vmatpush1.bf16.msra.mxu0 0
    %1704 = vmatprep.subr.bf16.mxu0 0
    %1705 = vmatpush1.bf16.msra.mxu0 0
    %1706 = vmatprep.subr.bf16.mxu0 0
    %1707 = vmatpush1.bf16.msra.mxu0 0
    %1708 = vmatprep.subr.bf16.mxu0 0
    %1709 = vmatpush1.bf16.msra.mxu0 0
    %1710 = vmatprep.subr.bf16.mxu0 0
    %1711 = vmatpush1.bf16.msra.mxu0 0
    %1712 = vmatprep.subr.bf16.mxu0 0
    %1713 = vmatpush1.bf16.msra.mxu0 0
    %1714 = vmatprep.subr.bf16.mxu0 0
    %1715 = vmatpush1.bf16.msra.mxu0 0
    %1716 = vmatprep.subr.bf16.mxu0 0
    %1717 = vmatpush1.bf16.msra.mxu0 0
    %1718 = vmatprep.subr.bf16.mxu0 0
    %1719 = vmatpush1.bf16.msra.mxu0 0
    %1720 = vmatprep.mubr.bf16.mxu0 0
    %1721 = vmatmul.mubr.bf16.gmra.mrb[0].mxu0 %v1683
    %v1722 = vpop.f32.mrb[0].mxu0
    %v1723 = vadd.f32 %v183, %v1722
    %v1724 = vpop.f32.mrb[0].mxu0
    %v1725 = vpop.f32.mrb[0].mxu0
    %v1726 = vadd.f32 %v184, %v1725
    %v1727 = vpop.f32.mrb[0].mxu0
    %1728 = vdwg.mxu0
    %v1729 = vsel %vm503, %v1723, -inf
    %1730 = vmax.xlane.f32.xlu0 %v1729
    %v1731 = vpop.xlane.xlu0 %1730
    %v1732 = vsel %vm503, %v1726, -inf
    %1733 = vmax.xlane.f32.xlu0 %v1732
    %v1734 = vpop.xlane.xlu0 %1733
    %v1735 = vsub.f32 %v1723, %v1731
    %v1736 = vsub.f32 %v1726, %v1734
    %v1737 = vmul.f32 %v1735, 1.442695
    %v1738 = vpow.pop %v1737
    %v1739 = vmul.f32 %v1736, 1.442695
    %v1740 = vpow.pop %v1739
    %v1741 = vsel %vm503, %v1738, 0.0
    %1742 = vadd.xlane.f32.xlu0 %v1741
    %v1743 = vpop.xlane.xlu0 %1742
    %v1744 = vsel %vm503, %v1740, 0.0
    %1745 = vadd.xlane.f32.xlu0 %v1744
    %v1746 = vpop.xlane.xlu0 %1745
    %v1747 = vrcp.pop %v1743
    %v1748 = vrcp.pop %v1746
    %v1749 = vmul.f32 %v1738, %v1747
    %v1750 = vmul.f32 %v1740, %v1748
    %v1751 = vpack.c.bf16 %v1750, %v1749
    %v1753 = vsel %vm503, %v1751, 0
    %v1756 = vsel %vm503, %v1678, 0
    %1758 = vmatprep.subr.bf16.mxu0 0
    %1759 = vmatpush1.bf16.xpose.msra.mxu0 %v1756
    %1760 = vmatprep.subr.bf16.mxu0 0
    %1761 = vmatpush1.bf16.xpose.msra.mxu0 0
    %1762 = vmatprep.subr.bf16.mxu0 0
    %1763 = vmatpush1.bf16.xpose.msra.mxu0 0
    %1764 = vmatprep.subr.bf16.mxu0 0
    %1765 = vmatpush1.bf16.xpose.msra.mxu0 0
    %1766 = vmatprep.subr.bf16.mxu0 0
    %1767 = vmatpush1.bf16.xpose.msra.mxu0 0
    %1768 = vmatprep.subr.bf16.mxu0 0
    %1769 = vmatpush1.bf16.xpose.msra.mxu0 0
    %1770 = vmatprep.subr.bf16.mxu0 0
    %1771 = vmatpush1.bf16.xpose.msra.mxu0 0
    %1772 = vmatprep.subr.bf16.mxu0 0
    %1773 = vmatpush1.bf16.xpose.msra.mxu0 0
    %1774 = vmatprep.subr.bf16.mxu0 0
    %1775 = vmatpush1.bf16.xpose.msra.mxu0 0
    %1776 = vmatprep.subr.bf16.mxu0 0
    %1777 = vmatpush1.bf16.xpose.msra.mxu0 0
    %1778 = vmatprep.subr.bf16.mxu0 0
    %1779 = vmatpush1.bf16.xpose.msra.mxu0 0
    %1780 = vmatprep.subr.bf16.mxu0 0
    %1781 = vmatpush1.bf16.xpose.msra.mxu0 0
    %1782 = vmatprep.subr.bf16.mxu0 0
    %1783 = vmatpush1.bf16.xpose.msra.mxu0 0
    %1784 = vmatprep.subr.bf16.mxu0 0
    %1785 = vmatpush1.bf16.xpose.msra.mxu0 0
    %1786 = vmatprep.subr.bf16.mxu0 0
    %1787 = vmatpush1.bf16.xpose.msra.mxu0 0
    %1788 = vmatprep.subr.bf16.mxu0 0
    %1789 = vmatpush1.bf16.xpose.msra.mxu0 0
    %1790 = vmatprep.mubr.bf16.mxu0 0
    %1791 = vmatmul.mubr.bf16.gmra.mrb[0].mxu0 %v1753
    %v1792 = vpop.f32.mrb[0].mxu0
    %v1793 = vadd.f32 0.0, %v1792
    %v1794 = vpop.f32.mrb[0].mxu0
    %v1795 = vpop.f32.mrb[0].mxu0
    %v1796 = vadd.f32 0.0, %v1795
    %v1797 = vpop.f32.mrb[0].mxu0
    %1798 = vdwg.mxu0
    %v1799 = vpack.c.bf16 %v1535, %v1535
    %v1800 = vpack.c.bf16 %v1551, %v1551
    %1801 = vrot.lane.b32.xlu0 %v1557, 112
    %v1802 = vpop.permute.xlu0 %1801
    %v1804 = vsel %vm455, %v1802, 0
    %v1807 = vsel %vm104, %v1799, 0
    %1809 = vmatprep.subr.bf16.mxu0 0
    %1810 = vmatpush1.bf16.msra.mxu0 %v1807
    %1811 = vmatprep.subr.bf16.mxu0 0
    %1812 = vmatpush1.bf16.msra.mxu0 0
    %1813 = vmatprep.subr.bf16.mxu0 0
    %1814 = vmatpush1.bf16.msra.mxu0 0
    %1815 = vmatprep.subr.bf16.mxu0 0
    %1816 = vmatpush1.bf16.msra.mxu0 0
    %1817 = vmatprep.subr.bf16.mxu0 0
    %1818 = vmatpush1.bf16.msra.mxu0 0
    %1819 = vmatprep.subr.bf16.mxu0 0
    %1820 = vmatpush1.bf16.msra.mxu0 0
    %1821 = vmatprep.subr.bf16.mxu0 0
    %1822 = vmatpush1.bf16.msra.mxu0 0
    %1823 = vmatprep.subr.bf16.mxu0 0
    %1824 = vmatpush1.bf16.msra.mxu0 0
    %1825 = vmatprep.subr.bf16.mxu0 0
    %1826 = vmatpush1.bf16.msra.mxu0 0
    %1827 = vmatprep.subr.bf16.mxu0 0
    %1828 = vmatpush1.bf16.msra.mxu0 0
    %1829 = vmatprep.subr.bf16.mxu0 0
    %1830 = vmatpush1.bf16.msra.mxu0 0
    %1831 = vmatprep.subr.bf16.mxu0 0
    %1832 = vmatpush1.bf16.msra.mxu0 0
    %1833 = vmatprep.subr.bf16.mxu0 0
    %1834 = vmatpush1.bf16.msra.mxu0 0
    %1835 = vmatprep.subr.bf16.mxu0 0
    %1836 = vmatpush1.bf16.msra.mxu0 0
    %1837 = vmatprep.subr.bf16.mxu0 0
    %1838 = vmatpush1.bf16.msra.mxu0 0
    %1839 = vmatprep.subr.bf16.mxu0 0
    %1840 = vmatpush1.bf16.msra.mxu0 0
    %1841 = vmatprep.mubr.bf16.mxu0 0
    %1842 = vmatmul.mubr.bf16.gmra.mrb[0].mxu0 %v1804
    %v1843 = vpop.f32.mrb[0].mxu0
    %v1844 = vadd.f32 %v183, %v1843
    %v1845 = vpop.f32.mrb[0].mxu0
    %v1846 = vpop.f32.mrb[0].mxu0
    %v1847 = vadd.f32 %v184, %v1846
    %v1848 = vpop.f32.mrb[0].mxu0
    %1849 = vdwg.mxu0
    %v1850 = vsel %vm503, %v1844, -inf
    %1851 = vmax.xlane.f32.xlu0 %v1850
    %v1852 = vpop.xlane.xlu0 %1851
    %v1853 = vsel %vm503, %v1847, -inf
    %1854 = vmax.xlane.f32.xlu0 %v1853
    %v1855 = vpop.xlane.xlu0 %1854
    %v1856 = vsub.f32 %v1844, %v1852
    %v1857 = vsub.f32 %v1847, %v1855
    %v1858 = vmul.f32 %v1856, 1.442695
    %v1859 = vpow.pop %v1858
    %v1860 = vmul.f32 %v1857, 1.442695
    %v1861 = vpow.pop %v1860
    %v1862 = vsel %vm503, %v1859, 0.0
    %1863 = vadd.xlane.f32.xlu0 %v1862
    %v1864 = vpop.xlane.xlu0 %1863
    %v1865 = vsel %vm503, %v1861, 0.0
    %1866 = vadd.xlane.f32.xlu0 %v1865
    %v1867 = vpop.xlane.xlu0 %1866
    %v1868 = vrcp.pop %v1864
    %v1869 = vrcp.pop %v1867
    %v1870 = vmul.f32 %v1859, %v1868
    %v1871 = vmul.f32 %v1861, %v1869
    %v1872 = vpack.c.bf16 %v1871, %v1870
    %v1874 = vsel %vm503, %v1872, 0
    %v1877 = vsel %vm503, %v1800, 0
    %1879 = vmatprep.subr.bf16.mxu0 0
    %1880 = vmatpush1.bf16.xpose.msra.mxu0 %v1877
    %1881 = vmatprep.subr.bf16.mxu0 0
    %1882 = vmatpush1.bf16.xpose.msra.mxu0 0
    %1883 = vmatprep.subr.bf16.mxu0 0
    %1884 = vmatpush1.bf16.xpose.msra.mxu0 0
    %1885 = vmatprep.subr.bf16.mxu0 0
    %1886 = vmatpush1.bf16.xpose.msra.mxu0 0
    %1887 = vmatprep.subr.bf16.mxu0 0
    %1888 = vmatpush1.bf16.xpose.msra.mxu0 0
    %1889 = vmatprep.subr.bf16.mxu0 0
    %1890 = vmatpush1.bf16.xpose.msra.mxu0 0
    %1891 = vmatprep.subr.bf16.mxu0 0
    %1892 = vmatpush1.bf16.xpose.msra.mxu0 0
    %1893 = vmatprep.subr.bf16.mxu0 0
    %1894 = vmatpush1.bf16.xpose.msra.mxu0 0
    %1895 = vmatprep.subr.bf16.mxu0 0
    %1896 = vmatpush1.bf16.xpose.msra.mxu0 0
    %1897 = vmatprep.subr.bf16.mxu0 0
    %1898 = vmatpush1.bf16.xpose.msra.mxu0 0
    %1899 = vmatprep.subr.bf16.mxu0 0
    %1900 = vmatpush1.bf16.xpose.msra.mxu0 0
    %1901 = vmatprep.subr.bf16.mxu0 0
    %1902 = vmatpush1.bf16.xpose.msra.mxu0 0
    %1903 = vmatprep.subr.bf16.mxu0 0
    %1904 = vmatpush1.bf16.xpose.msra.mxu0 0
    %1905 = vmatprep.subr.bf16.mxu0 0
    %1906 = vmatpush1.bf16.xpose.msra.mxu0 0
    %1907 = vmatprep.subr.bf16.mxu0 0
    %1908 = vmatpush1.bf16.xpose.msra.mxu0 0
    %1909 = vmatprep.subr.bf16.mxu0 0
    %1910 = vmatpush1.bf16.xpose.msra.mxu0 0
    %1911 = vmatprep.mubr.bf16.mxu0 0
    %1912 = vmatmul.mubr.bf16.gmra.mrb[0].mxu0 %v1874
    %v1913 = vpop.f32.mrb[0].mxu0
    %v1914 = vadd.f32 0.0, %v1913
    %v1915 = vpop.f32.mrb[0].mxu0
    %v1916 = vpop.f32.mrb[0].mxu0
    %v1917 = vadd.f32 0.0, %v1916
    %v1918 = vpop.f32.mrb[0].mxu0
    %1919 = vdwg.mxu0
    %v1920 = vpack.c.bf16 %v1538, %v1538
    %v1921 = vpack.c.bf16 %v1554, %v1554
    %1922 = vrot.lane.b32.xlu0 %v1557, 104
    %v1923 = vpop.permute.xlu0 %1922
    %v1925 = vsel %vm455, %v1923, 0
    %v1928 = vsel %vm104, %v1920, 0
    %1930 = vmatprep.subr.bf16.mxu0 0
    %1931 = vmatpush1.bf16.msra.mxu0 %v1928
    %1932 = vmatprep.subr.bf16.mxu0 0
    %1933 = vmatpush1.bf16.msra.mxu0 0
    %1934 = vmatprep.subr.bf16.mxu0 0
    %1935 = vmatpush1.bf16.msra.mxu0 0
    %1936 = vmatprep.subr.bf16.mxu0 0
    %1937 = vmatpush1.bf16.msra.mxu0 0
    %1938 = vmatprep.subr.bf16.mxu0 0
    %1939 = vmatpush1.bf16.msra.mxu0 0
    %1940 = vmatprep.subr.bf16.mxu0 0
    %1941 = vmatpush1.bf16.msra.mxu0 0
    %1942 = vmatprep.subr.bf16.mxu0 0
    %1943 = vmatpush1.bf16.msra.mxu0 0
    %1944 = vmatprep.subr.bf16.mxu0 0
    %1945 = vmatpush1.bf16.msra.mxu0 0
    %1946 = vmatprep.subr.bf16.mxu0 0
    %1947 = vmatpush1.bf16.msra.mxu0 0
    %1948 = vmatprep.subr.bf16.mxu0 0
    %1949 = vmatpush1.bf16.msra.mxu0 0
    %1950 = vmatprep.subr.bf16.mxu0 0
    %1951 = vmatpush1.bf16.msra.mxu0 0
    %1952 = vmatprep.subr.bf16.mxu0 0
    %1953 = vmatpush1.bf16.msra.mxu0 0
    %1954 = vmatprep.subr.bf16.mxu0 0
    %1955 = vmatpush1.bf16.msra.mxu0 0
    %1956 = vmatprep.subr.bf16.mxu0 0
    %1957 = vmatpush1.bf16.msra.mxu0 0
    %1958 = vmatprep.subr.bf16.mxu0 0
    %1959 = vmatpush1.bf16.msra.mxu0 0
    %1960 = vmatprep.subr.bf16.mxu0 0
    %1961 = vmatpush1.bf16.msra.mxu0 0
    %1962 = vmatprep.mubr.bf16.mxu0 0
    %1963 = vmatmul.mubr.bf16.gmra.mrb[0].mxu0 %v1925
    %v1964 = vpop.f32.mrb[0].mxu0
    %v1965 = vadd.f32 %v183, %v1964
    %v1966 = vpop.f32.mrb[0].mxu0
    %v1967 = vpop.f32.mrb[0].mxu0
    %v1968 = vadd.f32 %v184, %v1967
    %v1969 = vpop.f32.mrb[0].mxu0
    %1970 = vdwg.mxu0
    %v1971 = vsel %vm503, %v1965, -inf
    %1972 = vmax.xlane.f32.xlu0 %v1971
    %v1973 = vpop.xlane.xlu0 %1972
    %v1974 = vsel %vm503, %v1968, -inf
    %1975 = vmax.xlane.f32.xlu0 %v1974
    %v1976 = vpop.xlane.xlu0 %1975
    %v1977 = vsub.f32 %v1965, %v1973
    %v1978 = vsub.f32 %v1968, %v1976
    %v1979 = vmul.f32 %v1977, 1.442695
    %v1980 = vpow.pop %v1979
    %v1981 = vmul.f32 %v1978, 1.442695
    %v1982 = vpow.pop %v1981
    %v1983 = vsel %vm503, %v1980, 0.0
    %1984 = vadd.xlane.f32.xlu0 %v1983
    %v1985 = vpop.xlane.xlu0 %1984
    %v1986 = vsel %vm503, %v1982, 0.0
    %1987 = vadd.xlane.f32.xlu0 %v1986
    %v1988 = vpop.xlane.xlu0 %1987
    %v1989 = vrcp.pop %v1985
    %v1990 = vrcp.pop %v1988
    %v1991 = vmul.f32 %v1980, %v1989
    %v1992 = vmul.f32 %v1982, %v1990
    %v1993 = vpack.c.bf16 %v1992, %v1991
    %v1995 = vsel %vm503, %v1993, 0
    %v1998 = vsel %vm503, %v1921, 0
    %2000 = vmatprep.subr.bf16.mxu0 0
    %2001 = vmatpush1.bf16.xpose.msra.mxu0 %v1998
    %2002 = vmatprep.subr.bf16.mxu0 0
    %2003 = vmatpush1.bf16.xpose.msra.mxu0 0
    %2004 = vmatprep.subr.bf16.mxu0 0
    %2005 = vmatpush1.bf16.xpose.msra.mxu0 0
    %2006 = vmatprep.subr.bf16.mxu0 0
    %2007 = vmatpush1.bf16.xpose.msra.mxu0 0
    %2008 = vmatprep.subr.bf16.mxu0 0
    %2009 = vmatpush1.bf16.xpose.msra.mxu0 0
    %2010 = vmatprep.subr.bf16.mxu0 0
    %2011 = vmatpush1.bf16.xpose.msra.mxu0 0
    %2012 = vmatprep.subr.bf16.mxu0 0
    %2013 = vmatpush1.bf16.xpose.msra.mxu0 0
    %2014 = vmatprep.subr.bf16.mxu0 0
    %2015 = vmatpush1.bf16.xpose.msra.mxu0 0
    %2016 = vmatprep.subr.bf16.mxu0 0
    %2017 = vmatpush1.bf16.xpose.msra.mxu0 0
    %2018 = vmatprep.subr.bf16.mxu0 0
    %2019 = vmatpush1.bf16.xpose.msra.mxu0 0
    %2020 = vmatprep.subr.bf16.mxu0 0
    %2021 = vmatpush1.bf16.xpose.msra.mxu0 0
    %2022 = vmatprep.subr.bf16.mxu0 0
    %2023 = vmatpush1.bf16.xpose.msra.mxu0 0
    %2024 = vmatprep.subr.bf16.mxu0 0
    %2025 = vmatpush1.bf16.xpose.msra.mxu0 0
    %2026 = vmatprep.subr.bf16.mxu0 0
    %2027 = vmatpush1.bf16.xpose.msra.mxu0 0
    %2028 = vmatprep.subr.bf16.mxu0 0
    %2029 = vmatpush1.bf16.xpose.msra.mxu0 0
    %2030 = vmatprep.subr.bf16.mxu0 0
    %2031 = vmatpush1.bf16.xpose.msra.mxu0 0
    %2032 = vmatprep.mubr.bf16.mxu0 0
    %2033 = vmatmul.mubr.bf16.gmra.mrb[0].mxu0 %v1995
    %v2034 = vpop.f32.mrb[0].mxu0
    %v2035 = vadd.f32 0.0, %v2034
    %v2036 = vpop.f32.mrb[0].mxu0
    %v2037 = vpop.f32.mrb[0].mxu0
    %v2038 = vadd.f32 0.0, %v2037
    %v2039 = vpop.f32.mrb[0].mxu0
    %2040 = vdwg.mxu0
    %2043 = vrot.lane.b32.xlu0 %v1793, 8
    %v2044 = vpop.permute.xlu0 %2043
    %2045 = vrot.lane.b32.xlu0 %v1796, 8
    %v2046 = vpop.permute.xlu0 %2045
    %2051 = vrot.lane.b32.xlu0 %v1914, 16
    %v2052 = vpop.permute.xlu0 %2051
    %2053 = vrot.lane.b32.xlu0 %v1917, 16
    %v2054 = vpop.permute.xlu0 %2053
    %2059 = vrot.lane.b32.xlu0 %v2035, 24
    %v2060 = vpop.permute.xlu0 %2059
    %2061 = vrot.lane.b32.xlu0 %v2038, 24
    %v2062 = vpop.permute.xlu0 %2061
    %v2065 = vsel %vm455, %v1671, %v2044
    %v2066 = vsel %vm455, %v1674, %v2046
    %v2067 = vsel %vm503, %v2065, %v2052
    %v2068 = vsel %vm503, %v2066, %v2054
    %v2069 = vsel %vm966, %v2067, %v2060
    %v2070 = vsel %vm966, %v2068, %v2062
    %v2071 = vpack.c.bf16 %v2070, %v2069
    %s2072 = scalar_lea.vmem %s10, 16
    %v2073 = vld [vmem:[%s2072] sm:$0xf]
    %v2074 = vld [vmem:[%s2072 + $0x4] sm:$0xf]
    %v2075 = vld [vmem:[%s2072 + $0x8] sm:$0xf]
    %v2076 = vld [vmem:[%s2072 + $0xc] sm:$0xf]
    %v2081 = vunpack.c.l.b16 %v2073
    %v2082 = vunpack.c.l.b16 %v2074
    %v2083 = vunpack.c.l.b16 %v2075
    %v2084 = vunpack.c.l.b16 %v2076
    %v2085 = vpack.c.b16 %v2082, %v2081
    %v2086 = vpack.c.b16 %v2084, %v2083
    %v2090 = vsel %vm187, %v2071, 0
    %2092 = vmatprep.subr.bf16.mxu0 0
    %2093 = vmatpush1.bf16.msra.mxu0 %v2085
    %2094 = vmatprep.subr.bf16.mxu0 0
    %2095 = vmatpush1.bf16.msra.mxu0 %v2086
    %2096 = vmatprep.subr.bf16.mxu0 0
    %2097 = vmatpush1.bf16.msra.mxu0 0
    %2098 = vmatprep.subr.bf16.mxu0 0
    %2099 = vmatpush1.bf16.msra.mxu0 0
    %2100 = vmatprep.subr.bf16.mxu0 0
    %2101 = vmatpush1.bf16.msra.mxu0 0
    %2102 = vmatprep.subr.bf16.mxu0 0
    %2103 = vmatpush1.bf16.msra.mxu0 0
    %2104 = vmatprep.subr.bf16.mxu0 0
    %2105 = vmatpush1.bf16.msra.mxu0 0
    %2106 = vmatprep.subr.bf16.mxu0 0
    %2107 = vmatpush1.bf16.msra.mxu0 0
    %2108 = vmatprep.subr.bf16.mxu0 0
    %2109 = vmatpush1.bf16.msra.mxu0 0
    %2110 = vmatprep.subr.bf16.mxu0 0
    %2111 = vmatpush1.bf16.msra.mxu0 0
    %2112 = vmatprep.subr.bf16.mxu0 0
    %2113 = vmatpush1.bf16.msra.mxu0 0
    %2114 = vmatprep.subr.bf16.mxu0 0
    %2115 = vmatpush1.bf16.msra.mxu0 0
    %2116 = vmatprep.subr.bf16.mxu0 0
    %2117 = vmatpush1.bf16.msra.mxu0 0
    %2118 = vmatprep.subr.bf16.mxu0 0
    %2119 = vmatpush1.bf16.msra.mxu0 0
    %2120 = vmatprep.subr.bf16.mxu0 0
    %2121 = vmatpush1.bf16.msra.mxu0 0
    %2122 = vmatprep.subr.bf16.mxu0 0
    %2123 = vmatpush1.bf16.msra.mxu0 0
    %2124 = vmatprep.mubr.bf16.mxu0 0
    %2125 = vmatmul.mubr.bf16.gmra.mrb[0].mxu0 %v2090
    %v2126 = vpop.f32.mrb[0].mxu0
    %v2127 = vadd.f32 0.0, %v2126
    %v2128 = vpop.f32.mrb[0].mxu0
    %v2129 = vpop.f32.mrb[0].mxu0
    %v2130 = vadd.f32 0.0, %v2129
    %v2131 = vpop.f32.mrb[0].mxu0
    %2132 = vdwg.mxu0
    %v2133 = vadd.f32 %v1284, %v2127
    %v2134 = vadd.f32 %v1285, %v2130
    %s2135 = scalar_lea.vmem %s11, 1
    %v2136 = vld [vmem:[%s2135] sm:$0x1]
    %v2138 = vlaneseq
    %v2139 = vshrl.u32 %v2138, 7
    %v2140 = vsub.s32 0, %v2139
    %v2141 = vrot.slane %v2136, %v2140
    %v2143 = vadd.f32 %v2133, %v2141
    %v2144 = vadd.f32 %v2134, %v2141
    %s2145 = scalar_lea.vmem %s12, 1
    %v2146 = vld [vmem:[%s2145] sm:$0x1]
    %s2147 = scalar_lea.vmem %s13, 1
    %v2148 = vld [vmem:[%s2147] sm:$0x1]
    %v2149 = vsel %vm187, %v2143, 0.0
    %2150 = vadd.xlane.f32.xlu0 %v2149
    %v2151 = vpop.xlane.xlu0 %2150
    %v2152 = vsel %vm187, %v2144, 0.0
    %2153 = vadd.xlane.f32.xlu0 %v2152
    %v2154 = vpop.xlane.xlu0 %2153
    %v2155 = vmul.f32 %v2151, %v194
    %v2156 = vmul.f32 %v2154, %v194
    %v2157 = vsub.f32 %v2143, %v2155
    %v2158 = vsub.f32 %v2144, %v2156
    %v2159 = vmul.f32 %v2157, %v2157
    %v2160 = vmul.f32 %v2158, %v2158
    %v2161 = vsel %vm187, %v2159, 0.0
    %2162 = vadd.xlane.f32.xlu0 %v2161
    %v2163 = vpop.xlane.xlu0 %2162
    %v2164 = vsel %vm187, %v2160, 0.0
    %2165 = vadd.xlane.f32.xlu0 %v2164
    %v2166 = vpop.xlane.xlu0 %2165
    %v2167 = vmul.f32 %v2163, %v194
    %v2168 = vmul.f32 %v2166, %v194
    %v2169 = vadd.f32 %v2167, 1e-05
    %v2170 = vadd.f32 %v2168, 1e-05
    %v2171 = vrsqrt.pop %v2169
    %v2172 = vrsqrt.pop %v2170
    %v2173 = vmul.f32 %v2157, %v2171
    %v2174 = vmul.f32 %v2158, %v2172
    %v2176 = vlaneseq
    %v2177 = vshrl.u32 %v2176, 7
    %v2178 = vsub.s32 0, %v2177
    %v2179 = vrot.slane %v2146, %v2178
    %v2181 = vmul.f32 %v2173, %v2179
    %v2182 = vmul.f32 %v2174, %v2179
    %v2184 = vlaneseq
    %v2185 = vshrl.u32 %v2184, 7
    %v2186 = vsub.s32 0, %v2185
    %v2187 = vrot.slane %v2148, %v2186
    %v2189 = vadd.f32 %v2181, %v2187
    %v2190 = vadd.f32 %v2182, %v2187
    %v2191 = vpack.c.bf16 %v2190, %v2189
    %s2192 = scalar_lea.vmem %s14, 16
    %v2193 = vld [vmem:[%s2192] sm:$0xf]
    %v2194 = vld [vmem:[%s2192 + $0x4] sm:$0xf]
    %v2195 = vld [vmem:[%s2192 + $0x8] sm:$0xf]
    %v2196 = vld [vmem:[%s2192 + $0xc] sm:$0xf]
    %s2197 = scalar_lea.vmem %s15, 1
    %v2198 = vld [vmem:[%s2197] sm:$0x1]
    %v2200 = vlaneseq
    %v2201 = vshrl.u32 %v2200, 7
    %v2202 = vsub.s32 0, %v2201
    %v2203 = vrot.slane %v2198, %v2202
    %v2209 = vunpack.c.l.b16 %v2193
    %v2210 = vunpack.c.l.b16 %v2194
    %v2211 = vunpack.c.l.b16 %v2195
    %v2212 = vunpack.c.l.b16 %v2196
    %v2213 = vpack.c.b16 %v2210, %v2209
    %v2214 = vpack.c.b16 %v2212, %v2211
    %v2218 = vsel %vm187, %v2191, 0
    %2220 = vmatprep.subr.bf16.mxu0 0
    %2221 = vmatpush1.bf16.msra.mxu0 %v2213
    %2222 = vmatprep.subr.bf16.mxu0 0
    %2223 = vmatpush1.bf16.msra.mxu0 %v2214
    %2224 = vmatprep.subr.bf16.mxu0 0
    %2225 = vmatpush1.bf16.msra.mxu0 0
    %2226 = vmatprep.subr.bf16.mxu0 0
    %2227 = vmatpush1.bf16.msra.mxu0 0
    %2228 = vmatprep.subr.bf16.mxu0 0
    %2229 = vmatpush1.bf16.msra.mxu0 0
    %2230 = vmatprep.subr.bf16.mxu0 0
    %2231 = vmatpush1.bf16.msra.mxu0 0
    %2232 = vmatprep.subr.bf16.mxu0 0
    %2233 = vmatpush1.bf16.msra.mxu0 0
    %2234 = vmatprep.subr.bf16.mxu0 0
    %2235 = vmatpush1.bf16.msra.mxu0 0
    %2236 = vmatprep.subr.bf16.mxu0 0
    %2237 = vmatpush1.bf16.msra.mxu0 0
    %2238 = vmatprep.subr.bf16.mxu0 0
    %2239 = vmatpush1.bf16.msra.mxu0 0
    %2240 = vmatprep.subr.bf16.mxu0 0
    %2241 = vmatpush1.bf16.msra.mxu0 0
    %2242 = vmatprep.subr.bf16.mxu0 0
    %2243 = vmatpush1.bf16.msra.mxu0 0
    %2244 = vmatprep.subr.bf16.mxu0 0
    %2245 = vmatpush1.bf16.msra.mxu0 0
    %2246 = vmatprep.subr.bf16.mxu0 0
    %2247 = vmatpush1.bf16.msra.mxu0 0
    %2248 = vmatprep.subr.bf16.mxu0 0
    %2249 = vmatpush1.bf16.msra.mxu0 0
    %2250 = vmatprep.subr.bf16.mxu0 0
    %2251 = vmatpush1.bf16.msra.mxu0 0
    %2252 = vmatprep.mubr.bf16.mxu0 0
    %2253 = vmatmul.mubr.bf16.gmra.mrb[0].mxu0 %v2218
    %v2254 = vpop.f32.mrb[0].mxu0
    %v2255 = vadd.f32 %v2203, %v2254
    %v2256 = vpop.f32.mrb[0].mxu0
    %v2257 = vpop.f32.mrb[0].mxu0
    %v2258 = vadd.f32 %v2203, %v2257
    %v2259 = vpop.f32.mrb[0].mxu0
    %2260 = vdwg.mxu0
    %v2261 = vmul.f32 %v2255, %v2255
    %v2262 = vmul.f32 %v2258, %v2258
    %v2263 = vmul.f32 %v2255, %v2261
    %v2264 = vmul.f32 %v2258, %v2262
    %v2265 = vmul.f32 %v2263, 0.044715
    %v2266 = vmul.f32 %v2264, 0.044715
    %v2267 = vadd.f32 %v2255, %v2265
    %v2268 = vadd.f32 %v2258, %v2266
    %v2269 = vmul.f32 %v2267, 0.7978846
    %v2270 = vmul.f32 %v2268, 0.7978846
    %v2271 = vtanh.pop %v2269
    %v2272 = vtanh.pop %v2270
    %v2273 = vadd.f32 %v2271, 1.0
    %v2274 = vadd.f32 %v2272, 1.0
    %v2275 = vmul.f32 %v2273, 0.5
    %v2276 = vmul.f32 %v2274, 0.5
    %v2277 = vmul.f32 %v2255, %v2275
    %v2278 = vmul.f32 %v2258, %v2276
    %v2279 = vpack.c.bf16 %v2278, %v2277
    %s2280 = scalar_lea.vmem %s16, 64
    %v2281 = vld [vmem:[%s2280] sm:$0xf]
    %v2282 = vld [vmem:[%s2280 + $0x4] sm:$0xf]
    %v2283 = vld [vmem:[%s2280 + $0x8] sm:$0xf]
    %v2284 = vld [vmem:[%s2280 + $0xc] sm:$0xf]
    %v2285 = vld [vmem:[%s2280 + $0x10] sm:$0xf]
    %v2286 = vld [vmem:[%s2280 + $0x14] sm:$0xf]
    %v2287 = vld [vmem:[%s2280 + $0x18] sm:$0xf]
    %v2288 = vld [vmem:[%s2280 + $0x1c] sm:$0xf]
    %v2289 = vld [vmem:[%s2280 + $0x20] sm:$0xf]
    %v2290 = vld [vmem:[%s2280 + $0x24] sm:$0xf]
    %v2291 = vld [vmem:[%s2280 + $0x28] sm:$0xf]
    %v2292 = vld [vmem:[%s2280 + $0x2c] sm:$0xf]
    %v2293 = vld [vmem:[%s2280 + $0x30] sm:$0xf]
    %v2294 = vld [vmem:[%s2280 + $0x34] sm:$0xf]
    %v2295 = vld [vmem:[%s2280 + $0x38] sm:$0xf]
    %v2296 = vld [vmem:[%s2280 + $0x3c] sm:$0xf]
    %s2297 = scalar_lea.vmem %s17, 1
    %v2298 = vld [vmem:[%s2297] sm:$0x1]
    %v2300 = vlaneseq
    %v2301 = vshrl.u32 %v2300, 7
    %v2302 = vsub.s32 0, %v2301
    %v2303 = vrot.slane %v2298, %v2302
    %v2321 = vunpack.c.l.b16 %v2281
    %v2322 = vunpack.c.l.b16 %v2282
    %v2323 = vunpack.c.l.b16 %v2283
    %v2324 = vunpack.c.l.b16 %v2284
    %v2325 = vunpack.c.l.b16 %v2285
    %v2326 = vunpack.c.l.b16 %v2286
    %v2327 = vunpack.c.l.b16 %v2287
    %v2328 = vunpack.c.l.b16 %v2288
    %v2329 = vunpack.c.l.b16 %v2289
    %v2330 = vunpack.c.l.b16 %v2290
    %v2331 = vunpack.c.l.b16 %v2291
    %v2332 = vunpack.c.l.b16 %v2292
    %v2333 = vunpack.c.l.b16 %v2293
    %v2334 = vunpack.c.l.b16 %v2294
    %v2335 = vunpack.c.l.b16 %v2295
    %v2336 = vunpack.c.l.b16 %v2296
    %v2337 = vpack.c.b16 %v2322, %v2321
    %v2338 = vpack.c.b16 %v2324, %v2323
    %v2339 = vpack.c.b16 %v2326, %v2325
    %v2340 = vpack.c.b16 %v2328, %v2327
    %v2341 = vpack.c.b16 %v2330, %v2329
    %v2342 = vpack.c.b16 %v2332, %v2331
    %v2343 = vpack.c.b16 %v2334, %v2333
    %v2344 = vpack.c.b16 %v2336, %v2335
    %2353 = vmatprep.subr.bf16.mxu0 0
    %2354 = vmatpush1.bf16.msra.mxu0 %v2337
    %2355 = vmatprep.subr.bf16.mxu0 0
    %2356 = vmatpush1.bf16.msra.mxu0 %v2338
    %2357 = vmatprep.subr.bf16.mxu0 0
    %2358 = vmatpush1.bf16.msra.mxu0 %v2339
    %2359 = vmatprep.subr.bf16.mxu0 0
    %2360 = vmatpush1.bf16.msra.mxu0 %v2340
    %2361 = vmatprep.subr.bf16.mxu0 0
    %2362 = vmatpush1.bf16.msra.mxu0 %v2341
    %2363 = vmatprep.subr.bf16.mxu0 0
    %2364 = vmatpush1.bf16.msra.mxu0 %v2342
    %2365 = vmatprep.subr.bf16.mxu0 0
    %2366 = vmatpush1.bf16.msra.mxu0 %v2343
    %2367 = vmatprep.subr.bf16.mxu0 0
    %2368 = vmatpush1.bf16.msra.mxu0 %v2344
    %2369 = vmatprep.subr.bf16.mxu0 0
    %2370 = vmatpush1.bf16.msra.mxu0 0
    %2371 = vmatprep.subr.bf16.mxu0 0
    %2372 = vmatpush1.bf16.msra.mxu0 0
    %2373 = vmatprep.subr.bf16.mxu0 0
    %2374 = vmatpush1.bf16.msra.mxu0 0
    %2375 = vmatprep.subr.bf16.mxu0 0
    %2376 = vmatpush1.bf16.msra.mxu0 0
    %2377 = vmatprep.subr.bf16.mxu0 0
    %2378 = vmatpush1.bf16.msra.mxu0 0
    %2379 = vmatprep.subr.bf16.mxu0 0
    %2380 = vmatpush1.bf16.msra.mxu0 0
    %2381 = vmatprep.subr.bf16.mxu0 0
    %2382 = vmatpush1.bf16.msra.mxu0 0
    %2383 = vmatprep.subr.bf16.mxu0 0
    %2384 = vmatpush1.bf16.msra.mxu0 0
    %2385 = vmatprep.mubr.bf16.mxu0 0
    %2386 = vmatmul.mubr.bf16.gmra.mrb[0].mxu0 %v2279
    %v2387 = vpop.f32.mrb[0].mxu0
    %v2388 = vadd.f32 %v2303, %v2387
    %v2389 = vpop.f32.mrb[0].mxu0
    %v2390 = vpop.f32.mrb[0].mxu0
    %v2391 = vadd.f32 %v2303, %v2390
    %v2392 = vpop.f32.mrb[0].mxu0
    %2393 = vdwg.mxu0
    %v2394 = vadd.f32 %v2143, %v2388
    %v2395 = vadd.f32 %v2144, %v2391
    %v2396 = vld [vmem:[%s18] sm:$0x1]
    %v2397 = vld [vmem:[%s19] sm:$0x1]
    %v2398 = vsel %vm187, %v2394, 0.0
    %2399 = vadd.xlane.f32.xlu0 %v2398
    %v2400 = vpop.xlane.xlu0 %2399
    %v2401 = vsel %vm187, %v2395, 0.0
    %2402 = vadd.xlane.f32.xlu0 %v2401
    %v2403 = vpop.xlane.xlu0 %2402
    %v2404 = vmul.f32 %v2400, %v194
    %v2405 = vmul.f32 %v2403, %v194
    %v2406 = vsub.f32 %v2394, %v2404
    %v2407 = vsub.f32 %v2395, %v2405
    %v2408 = vmul.f32 %v2406, %v2406
    %v2409 = vmul.f32 %v2407, %v2407
    %v2410 = vsel %vm187, %v2408, 0.0
    %2411 = vadd.xlane.f32.xlu0 %v2410
    %v2412 = vpop.xlane.xlu0 %2411
    %v2413 = vsel %vm187, %v2409, 0.0
    %2414 = vadd.xlane.f32.xlu0 %v2413
    %v2415 = vpop.xlane.xlu0 %2414
    %v2416 = vmul.f32 %v2412, %v194
    %v2417 = vmul.f32 %v2415, %v194
    %v2418 = vadd.f32 %v2416, 1e-05
    %v2419 = vadd.f32 %v2417, 1e-05
    %v2420 = vrsqrt.pop %v2418
    %v2421 = vrsqrt.pop %v2419
    %v2422 = vmul.f32 %v2406, %v2420
    %v2423 = vmul.f32 %v2407, %v2421
    %v2425 = vlaneseq
    %v2426 = vshrl.u32 %v2425, 7
    %v2427 = vsub.s32 0, %v2426
    %v2428 = vrot.slane %v2396, %v2427
    %v2430 = vmul.f32 %v2422, %v2428
    %v2431 = vmul.f32 %v2423, %v2428
    %v2433 = vlaneseq
    %v2434 = vshrl.u32 %v2433, 7
    %v2435 = vsub.s32 0, %v2434
    %v2436 = vrot.slane %v2397, %v2435
    %v2438 = vadd.f32 %v2430, %v2436
    %v2439 = vadd.f32 %v2431, %v2436
    %2440 = vst.msk [vmem:[#allocation2] sm:$0xff] %vm187, %v2438
    %2441 = vst.msk [vmem:[#allocation2 + $0x8] sm:$0xff] %vm187, %v2439
    // Predicated region
    $region82: #{neuron_text_encoder_forward.1} parent=1 // pred_check
      _
    $region83: #{neuron_text_encoder_forward.1} parent=1 // pred_check_branch
      %2443 = sbr.rel (0) target = $region85
    $region84: #{neuron_text_encoder_forward.1} parent=1 // pred_region
      %s2445 = ssub.s32 256, 256
      %2446 = vsyncadd [#allocation3], %s2445
      %s2447 = sshll.u32 [#allocation2], 4
      %s2448 = int_to_ptr.vmem [resolvable:$true] %s2447
      %2453 = dma.vmem_to_hbm [thread:$0]  %s2448, 256, %s20, [#allocation3], 128, 128, 8
    $region85: #{neuron_text_encoder_forward.1} parent=1 // pred_fallthru
      _
    // Predicated region
    $region86: #{neuron_text_encoder_forward.1} parent=1 // pred_check
      _
    $region87: #{neuron_text_encoder_forward.1} parent=1 // pred_check_branch
      %2455 = sbr.rel (0) target = $region89
    $region88: #{neuron_text_encoder_forward.1} parent=1 // pred_region
      %2456 = dma.done [#allocation3], 256
    $region89: #{neuron_text_encoder_forward.1} parent=1 // pred_fallthru
      _
    %2457 = vsyncpa [#allocation3], 1

</llo_original>
